<compile_context>
chip_gen: v6e
topology: v6e:2x2x1
jax: 0.10.0
libtpu: 0.0.40
codegen_flags: <defaults>
</compile_context>

<pallas_src>
import functools
import numpy as np

import jax
import jax.numpy as jnp
from jax import lax
from jax.experimental import pallas as pl
from jax.experimental.pallas import tpu as pltpu

# ----- cfg constants (py-faster-rcnn defaults) -------------------------------
RPN_NEGATIVE_OVERLAP = 0.3
RPN_POSITIVE_OVERLAP = 0.7
RPN_FG_FRACTION = 0.5
RPN_BATCHSIZE = 256
RPN_CLOBBER_POSITIVES = False
RPN_BBOX_INSIDE_WEIGHT = 1.0
RPN_POSITIVE_WEIGHT = -1.0

_TILE_LANES = 256            # anchors per grid tile = 8 * 256 = 2048
_NUM_OUT = 6                 # labels, inside weight, dx, dy, dw, dh
_PAD_COORD = -1.0e8          # sentinel coords for padded anchors (always "outside")


# ----- generate_anchors (deterministic, numpy) --------------------------------
def _whctrs(anchor):
    w = anchor[2] - anchor[0] + 1
    h = anchor[3] - anchor[1] + 1
    x_ctr = anchor[0] + 0.5 * (w - 1)
    y_ctr = anchor[1] + 0.5 * (h - 1)
    return w, h, x_ctr, y_ctr


def _mkanchors(ws, hs, x_ctr, y_ctr):
    ws = ws[:, np.newaxis]
    hs = hs[:, np.newaxis]
    return np.hstack((x_ctr - 0.5 * (ws - 1), y_ctr - 0.5 * (hs - 1),
                      x_ctr + 0.5 * (ws - 1), y_ctr + 0.5 * (hs - 1)))


def _ratio_enum(anchor, ratios):
    w, h, x_ctr, y_ctr = _whctrs(anchor)
    size = w * h
    size_ratios = size / ratios
    ws = np.round(np.sqrt(size_ratios))
    hs = np.round(ws * ratios)
    return _mkanchors(ws, hs, x_ctr, y_ctr)


def _scale_enum(anchor, scales):
    w, h, x_ctr, y_ctr = _whctrs(anchor)
    ws = w * scales
    hs = h * scales
    return _mkanchors(ws, hs, x_ctr, y_ctr)


def generate_anchors(base_size=16, ratios=np.array([0.5, 1, 2]),
                     scales=2 ** np.arange(3, 6)):
    base_anchor = np.array([1, 1, base_size, base_size], dtype=np.float64) - 1
    ratio_anchors = _ratio_enum(base_anchor, ratios)
    anchors = np.vstack([_scale_enum(ratio_anchors[i, :], scales)
                         for i in range(ratio_anchors.shape[0])])
    return anchors


# ----- shared per-gt IoU (identical float path in both passes) ----------------
def _iou_row(gt_ref, b, g, x1, y1, x2, y2, a_area):
    base = 5 * g
    gx1 = gt_ref[b, base + 0]
    gy1 = gt_ref[b, base + 1]
    gx2 = gt_ref[b, base + 2]
    gy2 = gt_ref[b, base + 3]
    gw = gx2 - gx1 + 1.0
    gh = gy2 - gy1 + 1.0
    g_area = gw * gh
    # bbox_overlaps_batch zeroes overlaps of zero-area (all-zero padded) gt rows
    gt_scale = jnp.where(jnp.logical_and(gw == 1.0, gh == 1.0), 0.0, 1.0)
    iw = jnp.maximum(jnp.minimum(x2, gx2) - jnp.maximum(x1, gx1) + 1.0, 0.0)
    ih = jnp.maximum(jnp.minimum(y2, gy2) - jnp.maximum(y1, gy1) + 1.0, 0.0)
    inter = iw * ih
    ua = a_area + g_area - inter
    ov = inter * pl.reciprocal(ua, approx=True) * gt_scale
    return ov, gw, gh, gx1, gy1


# ----- pass 1: per-(batch, gt) max IoU over inside anchors, per tile ----------
def _gt_max_kernel(gt_ref, nbox_ref, iou_ref, ins_ref, out_ref):
    # gt_ref (B, G*5) SMEM | nbox_ref (B,) SMEM | iou_ref (5, 8, TL) VMEM
    # ins_ref (8, TL) VMEM | out_ref (1, 1, 8, 128) VMEM (per-gt tile max in lane g)
    b = pl.program_id(0)
    x1 = iou_ref[0]
    y1 = iou_ref[1]
    x2 = iou_ref[2]
    y2 = iou_ref[3]
    a_area = iou_ref[4]
    inside = ins_ref[...] > 0.5
    lane = lax.broadcasted_iota(jnp.int32, (8, 128), 1)

    def body(g, row):
        ov, _, _, _, _ = _iou_row(gt_ref, b, g, x1, y1, x2, y2, a_area)
        tmax = jnp.max(jnp.where(inside, ov, 0.0), axis=1, keepdims=True)
        tmax = jnp.max(tmax, axis=0, keepdims=True)            # (1, 1), IoU >= 0
        return jnp.where(lane == g, tmax, row)

    out_ref[0, 0] = lax.fori_loop(0, nbox_ref[b], body,
                                  jnp.zeros((8, 128), jnp.float32))


# ----- pass 2: labels / inside weights / bbox targets per anchor tile ---------
def _anchor_target_kernel(gt_ref, nbox_ref, gmax_ref, iou_ref, tgt_ref, ins_ref,
                          out_ref):
    # gmax_ref (B, G) SMEM: per-gt max IoU (already 0 -> 1e-5 adjusted).
    b = pl.program_id(0)
    x1 = iou_ref[0]
    y1 = iou_ref[1]
    x2 = iou_ref[2]
    y2 = iou_ref[3]
    a_area = iou_ref[4]
    ins_f = ins_ref[...]
    inside = ins_f > 0.5

    shape = a_area.shape
    init = (jnp.full(shape, -1e30, jnp.float32),   # running max overlap
            jnp.zeros(shape, jnp.float32),         # keep count (gt-argmax hits)
            jnp.full(shape, 0.5, jnp.float32),     # selected gt center x
            jnp.full(shape, 0.5, jnp.float32),     # selected gt center y
            jnp.ones(shape, jnp.float32),          # selected gt width
            jnp.ones(shape, jnp.float32))          # selected gt height

    def body(g, carry):
        max_ov, keep_cnt, sel_gcx, sel_gcy, sel_gw, sel_gh = carry
        ov, gw, gh, gx1, gy1 = _iou_row(gt_ref, b, g, x1, y1, x2, y2, a_area)
        # gt-argmax ("keep") anchors: exact equality vs the pass-1 max (same
        # float path -> bit identical).
        keep_cnt = keep_cnt + (ov == gmax_ref[b, g]).astype(jnp.float32)
        # running argmax over gt boxes; strict '>' keeps first occurrence on ties
        upd = ov > max_ov
        max_ov = jnp.where(upd, ov, max_ov)
        sel_gcx = jnp.where(upd, gx1 + 0.5 * gw, sel_gcx)
        sel_gcy = jnp.where(upd, gy1 + 0.5 * gh, sel_gcy)
        sel_gw = jnp.where(upd, gw, sel_gw)
        sel_gh = jnp.where(upd, gh, sel_gh)
        return (max_ov, keep_cnt, sel_gcx, sel_gcy, sel_gw, sel_gh)

    (max_ov, keep_cnt, sel_gcx, sel_gcy, sel_gw, sel_gh) = lax.fori_loop(
        0, nbox_ref[b], body, init)

    labels = jnp.full(shape, -1.0, jnp.float32)
    labels = jnp.where(max_ov < RPN_NEGATIVE_OVERLAP, 0.0, labels)   # background
    labels = jnp.where(keep_cnt > 0.0, 1.0, labels)                  # gt-argmax anchors
    labels = jnp.where(max_ov >= RPN_POSITIVE_OVERLAP, 1.0, labels)  # foreground
    labels = jnp.where(inside, labels, -1.0)                         # _unmap fill=-1

    # Epilogue-only slab channels loaded after the gt loop (keeps the loop's
    # live set small; Mosaic does not reliably sink these past the loop).
    ex_cx = tgt_ref[0]
    ex_cy = tgt_ref[1]
    inv_aw = tgt_ref[2]
    inv_ah = tgt_ref[3]
    dx = (sel_gcx - ex_cx) * inv_aw * ins_f          # _unmap fill=0 outside image
    dy = (sel_gcy - ex_cy) * inv_ah * ins_f
    dw = jnp.log(sel_gw * inv_aw) * ins_f
    dh = jnp.log(sel_gh * inv_ah) * ins_f

    out_ref[0, 0] = labels
    out_ref[0, 1] = jnp.where(labels == 1.0, RPN_BBOX_INSIDE_WEIGHT, 0.0)
    out_ref[0, 2] = dx
    out_ref[0, 3] = dy
    out_ref[0, 4] = dw
    out_ref[0, 5] = dh


# ----- fused device path ------------------------------------------------------
@functools.partial(
    jax.jit,
    static_argnames=("H", "W", "A", "N", "G", "allowed_border", "tile_lanes"))
def _anchor_target_forward(slab_iou, slab_tgt, gt_flat, num_boxes, im_info, *,
                           H, W, A, N, G, allowed_border, tile_lanes):
    B = gt_flat.shape[0]
    _, S, Wl = slab_iou.shape
    Np = S * Wl
    n_tiles = Wl // tile_lanes

    # Reference uses long(im_info[0][k]) (first image only) for the inside mask
    # -> it is batch-invariant, so precompute it once here (not in-kernel).
    im_h = jnp.floor(im_info[0, 0])
    im_w = jnp.floor(im_info[0, 1])
    ab = jnp.float32(allowed_border)
    x1, y1, x2, y2 = slab_iou[0], slab_iou[1], slab_iou[2], slab_iou[3]
    inside_f = ((x1 >= -ab) & (y1 >= -ab)
                & (x2 < im_w + ab) & (y2 < im_h + ab)).astype(jnp.float32)

    nbox = jnp.clip(num_boxes.astype(jnp.int32), 0, G)

    smem = pl.BlockSpec(memory_space=pltpu.MemorySpace.SMEM)
    iou_spec = pl.BlockSpec((5, 8, tile_lanes), lambda b, t: (0, 0, t))
    ins_spec = pl.BlockSpec((8, tile_lanes), lambda b, t: (0, t))

    # Pass 1: per-gt max IoU over inside anchors, reduced per anchor tile.
    gmax_tiles = pl.pallas_call(
        _gt_max_kernel,
        out_shape=jax.ShapeDtypeStruct((B, n_tiles, 8, 128), jnp.float32),
        grid_spec=pltpu.PrefetchScalarGridSpec(
            num_scalar_prefetch=0,
            grid=(B, n_tiles),
            in_specs=[smem, smem, iou_spec, ins_spec],
            out_specs=pl.BlockSpec((1, 1, 8, 128), lambda b, t: (b, t, 0, 0)),
        ),
        compiler_params=pltpu.CompilerParams(
            dimension_semantics=("parallel", "parallel")),
    )(gt_flat, nbox, slab_iou, inside_f)

    gmax = jnp.max(gmax_tiles, axis=1)[:, 0, :G]          # (B, G)
    gmax = jnp.where(gmax == 0.0, 1e-5, gmax)             # reference quirk

    # Pass 2: labels / inside weights / bbox regression targets.
    packed = pl.pallas_call(
        _anchor_target_kernel,
        out_shape=jax.ShapeDtypeStruct((B, _NUM_OUT, 8, Wl), jnp.float32),
        grid_spec=pltpu.PrefetchScalarGridSpec(
            num_scalar_prefetch=0,
            grid=(B, n_tiles),
            in_specs=[smem, smem, smem, iou_spec,
                      pl.BlockSpec((4, 8, tile_lanes), lambda b, t: (0, 0, t)),
                      ins_spec],
            out_specs=pl.BlockSpec((1, _NUM_OUT, 8, tile_lanes),
                                   lambda b, t: (b, 0, 0, t)),
        ),
        compiler_params=pltpu.CompilerParams(
            dimension_semantics=("parallel", "parallel")),
    )(gt_flat, nbox, gmax, slab_iou, slab_tgt, inside_f)

    packed = packed.reshape(B, _NUM_OUT, Np)[:, :, :N]
    labels = packed[:, 0]                      # (B, N)
    inw = packed[:, 1]                         # (B, N)
    tgt = packed[:, 2:6]                       # (B, 4, N) dx, dy, dw, dh

    # RPN_POSITIVE_WEIGHT < 0 branch: the reference uses the stale loop index i
    # (= batch_size - 1) for num_examples -> one shared normalizer. Reproduced.
    num_examples = jnp.sum((labels[B - 1] >= 0.0).astype(jnp.float32))
    w = 1.0 / num_examples
    outw = (jnp.where(labels == 1.0, w, 0.0)
            + jnp.where(labels == 0.0, w, 0.0))

    labels_out = labels.reshape(B, H, W, A).transpose(0, 3, 1, 2).reshape(
        B, 1, A * H, W)
    tgt_out = tgt.reshape(B, 4, H, W, A).transpose(0, 4, 1, 2, 3).reshape(
        B, 4 * A, H, W)
    # Transpose per-anchor weights at 1x bytes first, broadcast to 4 channels after.
    inw_t = inw.reshape(B, H, W, A).transpose(0, 3, 1, 2)     # (B, A, H, W)
    outw_t = outw.reshape(B, H, W, A).transpose(0, 3, 1, 2)
    inw4 = jnp.broadcast_to(inw_t[:, :, None], (B, A, 4, H, W)).reshape(
        B, 4 * A, H, W)
    outw4 = jnp.broadcast_to(outw_t[:, :, None], (B, A, 4, H, W)).reshape(
        B, 4 * A, H, W)
    return labels_out, tgt_out, inw4, outw4


# ----- module wrapper (cached host-side anchor slabs, glue) --------------------
class AnchorTargetLayerPallas:
    def __init__(self, feat_stride, scales, ratios):
        self._feat_stride = feat_stride
        self._anchors = generate_anchors(
            scales=np.array(scales), ratios=np.array(ratios)).astype(np.float32)
        self._num_anchors = self._anchors.shape[0]
        self._allowed_border = 0
        self._slab_cache = {}

    def _anchor_slabs(self, H, W):
        key = (H, W, self._feat_stride)
        hit = self._slab_cache.get(key)
        if hit is not None:
            return hit
        shift_x = np.arange(W) * self._feat_stride
        shift_y = np.arange(H) * self._feat_stride
        sx, sy = np.meshgrid(shift_x, shift_y)
        shifts = np.stack([sx.ravel(), sy.ravel(), sx.ravel(), sy.ravel()],
                          axis=1).astype(np.float32)                  # (K, 4)
        all_anchors = (self._anchors[None] + shifts[:, None]).reshape(-1, 4)
        N = all_anchors.shape[0]                  # flat index = (y*W + x)*A + a

        # pad anchor count to a multiple of the grid tile (8 * _TILE_LANES);
        # padded anchors use a far-out-of-bounds sentinel so they are never
        # "inside" and their IoU with any gt box is exactly 0.
        block = 8 * _TILE_LANES
        Np = max(block, int(np.ceil(N / float(block))) * block)
        pad = np.full((Np, 4), _PAD_COORD, np.float32)
        pad[:N] = all_anchors
        x1, y1, x2, y2 = pad[:, 0], pad[:, 1], pad[:, 2], pad[:, 3]
        aw = x2 - x1 + 1.0
        ah = y2 - y1 + 1.0
        Wl = Np // 8
        slab_iou = np.stack([x1, y1, x2, y2, aw * ah], axis=0).reshape(5, 8, Wl)
        slab_tgt = np.stack([x1 + 0.5 * aw, y1 + 0.5 * ah, 1.0 / aw, 1.0 / ah],
                            axis=0).reshape(4, 8, Wl)
        hit = (jnp.asarray(slab_iou, jnp.float32),
               jnp.asarray(slab_tgt, jnp.float32), N)
        self._slab_cache[key] = hit
        return hit

    def forward(self, inputs):
        rpn_cls_score, gt_boxes, im_info, num_boxes = inputs
        B, G = gt_boxes.shape[0], gt_boxes.shape[1]
        H, W = rpn_cls_score.shape[2], rpn_cls_score.shape[3]
        A = self._num_anchors
        assert G <= 128, "pass 1 packs one per-gt max per lane (requires G <= 128)"

        slab_iou, slab_tgt, N = self._anchor_slabs(H, W)
        gt_flat = jnp.asarray(gt_boxes, jnp.float32).reshape(B, G * 5)
        im_info_f = jnp.asarray(im_info, jnp.float32)
        nbox = jnp.asarray(num_boxes, jnp.int32).reshape(B)

        # TODO(synk): fg/bg random subsampling (np.random.permutation over
        # torch.nonzero indices) has no clean Pallas equivalent; outputs match
        # the reference only while fg <= 128 and labeled anchors <= RPN_BATCHSIZE.
        outs = _anchor_target_forward(
            slab_iou, slab_tgt, gt_flat, nbox, im_info_f,
            H=H, W=W, A=A, N=N, G=G,
            allowed_border=float(self._allowed_border),
            tile_lanes=_TILE_LANES)
        return list(outs)


if __name__ == "__main__":
    key = jax.random.PRNGKey(0)
    B, H, W = 2, 16, 24            # 16*24*6 = 2304 anchors -> 2 anchor tiles
    feat_stride = 16
    scales = [2, 4]
    ratios = [0.5, 1, 2]
    A = len(scales) * len(ratios)

    k1, k2, k3, k4 = jax.random.split(key, 4)
    rpn_cls_score = jax.random.normal(k1, (B, 2 * A, H, W), jnp.float32)  # NCHW
    G = 5
    im_h, im_w = float(H * feat_stride), float(W * feat_stride)
    x1 = jax.random.uniform(k2, (B, G), minval=0.0, maxval=0.6 * im_w)
    y1 = jax.random.uniform(k3, (B, G), minval=0.0, maxval=0.6 * im_h)
    wh = jax.random.uniform(k4, (B, G, 2), minval=15.0, maxval=90.0)
    x2 = jnp.minimum(x1 + wh[..., 0], im_w - 1.0)
    y2 = jnp.minimum(y1 + wh[..., 1], im_h - 1.0)
    cls = jnp.ones((B, G), jnp.float32)
    gt_boxes = jnp.stack([x1, y1, x2, y2, cls], axis=-1)
    gt_boxes = gt_boxes.at[0, G - 1, :].set(0.0)          # zero-padded gt row
    im_info = jnp.array([[im_h, im_w, 1.0]] * B, jnp.float32)
    num_boxes = jnp.array([G - 1, G], jnp.int32)

    layer = AnchorTargetLayerPallas(feat_stride, scales, ratios)
    outs = layer.forward((rpn_cls_score, gt_boxes, im_info, num_boxes))
    outs = [jax.block_until_ready(o) for o in outs]

    labels_o, tgt_o, inw_o, outw_o = outs
    assert labels_o.shape == (B, 1, A * H, W)
    assert tgt_o.shape == (B, 4 * A, H, W)
    assert inw_o.shape == (B, 4 * A, H, W)
    assert outw_o.shape == (B, 4 * A, H, W)
    assert all(bool(jnp.all(jnp.isfinite(o))) for o in outs)
    assert bool(jnp.all((labels_o == -1.0) | (labels_o == 0.0) | (labels_o == 1.0)))
    assert bool(jnp.any(labels_o == 1.0))          # gt-argmax anchors became fg
    print("KERNEL_OK")
</pallas_src>

<mosaic_0001>
module attributes {stable_mosaic.version = 11 : i64} {
  func.func @_gt_max_kernel(%arg0: i32, %arg1: i32, %arg2: memref<2x25xf32, #tpu.memory_space<smem>>, %arg3: memref<2xi32, #tpu.memory_space<smem>>, %arg4: memref<5x8x256xf32, #tpu.memory_space<vmem>>, %arg5: memref<8x256xf32, #tpu.memory_space<vmem>>, %arg6: memref<1x1x8x128xf32, #tpu.memory_space<vmem>>) attributes {dimension_semantics = [#tpu.dimension_semantics<parallel>, #tpu.dimension_semantics<parallel>], iteration_bounds = array<i64: 2, 2>, scalar_prefetch = 0 : i64, scratch_operands = 0 : i64, tpu.core_type = #tpu.core_type<tc>, window_params = [{transform_indices = @transform_0, window_bounds = array<i64: 2, 25>}, {transform_indices = @transform_1, window_bounds = array<i64: 2>}, {transform_indices = @transform_2, window_bounds = array<i64: 5, 8, 256>}, {transform_indices = @transform_3, window_bounds = array<i64: 8, 256>}, {transform_indices = @transform_4, window_bounds = array<i64: 1, 1, 8, 128>}]} {
    %c0 = arith.constant 0 : index
    %c0_0 = arith.constant 0 : index
    %c0_1 = arith.constant 0 : index
    %0 = vector.load %arg4[%c0, %c0_0, %c0_1] : memref<5x8x256xf32, #tpu.memory_space<vmem>>, vector<1x8x256xf32>
    %1 = vector.shape_cast %0 : vector<1x8x256xf32> to vector<8x256xf32>
    %c1 = arith.constant 1 : index
    %c0_2 = arith.constant 0 : index
    %c0_3 = arith.constant 0 : index
    %2 = vector.load %arg4[%c1, %c0_2, %c0_3] : memref<5x8x256xf32, #tpu.memory_space<vmem>>, vector<1x8x256xf32>
    %3 = vector.shape_cast %2 : vector<1x8x256xf32> to vector<8x256xf32>
    %c2 = arith.constant 2 : index
    %c0_4 = arith.constant 0 : index
    %c0_5 = arith.constant 0 : index
    %4 = vector.load %arg4[%c2, %c0_4, %c0_5] : memref<5x8x256xf32, #tpu.memory_space<vmem>>, vector<1x8x256xf32>
    %5 = vector.shape_cast %4 : vector<1x8x256xf32> to vector<8x256xf32>
    %c3 = arith.constant 3 : index
    %c0_6 = arith.constant 0 : index
    %c0_7 = arith.constant 0 : index
    %6 = vector.load %arg4[%c3, %c0_6, %c0_7] : memref<5x8x256xf32, #tpu.memory_space<vmem>>, vector<1x8x256xf32>
    %7 = vector.shape_cast %6 : vector<1x8x256xf32> to vector<8x256xf32>
    %c4 = arith.constant 4 : index
    %c0_8 = arith.constant 0 : index
    %c0_9 = arith.constant 0 : index
    %8 = vector.load %arg4[%c4, %c0_8, %c0_9] : memref<5x8x256xf32, #tpu.memory_space<vmem>>, vector<1x8x256xf32>
    %9 = vector.shape_cast %8 : vector<1x8x256xf32> to vector<8x256xf32>
    %c0_10 = arith.constant 0 : index
    %c0_11 = arith.constant 0 : index
    %10 = vector.load %arg5[%c0_10, %c0_11] : memref<8x256xf32, #tpu.memory_space<vmem>>, vector<8x256xf32>
    %cst = arith.constant 5.000000e-01 : f32
    %11 = vector.broadcast %cst : f32 to vector<8x256xf32>
    %12 = arith.cmpf ogt, %10, %11 : vector<8x256xf32>
    %13 = tpu.iota {dimensions = array<i32: 1>} : vector<8x128xi32>
    %14 = arith.index_cast %arg0 : i32 to index
    %15 = memref.load %arg3[%14] : memref<2xi32, #tpu.memory_space<smem>>
    %cst_12 = arith.constant 0.000000e+00 : f32
    %16 = vector.broadcast %cst_12 : f32 to vector<8x128xf32>
    %c0_i32 = arith.constant 0 : i32
    %17 = arith.subi %15, %c0_i32 : i32
    %18 = arith.addi %c0_i32, %17 : i32
    %c1_i32 = arith.constant 1 : i32
    %19 = scf.for %arg7 = %c0_i32 to %18 step %c1_i32 iter_args(%arg8 = %16) -> (vector<8x128xf32>)  : i32 {
      %c5_i32 = arith.constant 5 : i32
      %23 = arith.muli %c5_i32, %arg7 : i32
      %c0_i32_17 = arith.constant 0 : i32
      %24 = arith.addi %23, %c0_i32_17 : i32
      %25 = arith.index_cast %arg0 : i32 to index
      %26 = arith.index_cast %24 : i32 to index
      %27 = memref.load %arg2[%25, %26] : memref<2x25xf32, #tpu.memory_space<smem>>
      %c1_i32_18 = arith.constant 1 : i32
      %28 = arith.addi %23, %c1_i32_18 : i32
      %29 = arith.index_cast %arg0 : i32 to index
      %30 = arith.index_cast %28 : i32 to index
      %31 = memref.load %arg2[%29, %30] : memref<2x25xf32, #tpu.memory_space<smem>>
      %c2_i32 = arith.constant 2 : i32
      %32 = arith.addi %23, %c2_i32 : i32
      %33 = arith.index_cast %arg0 : i32 to index
      %34 = arith.index_cast %32 : i32 to index
      %35 = memref.load %arg2[%33, %34] : memref<2x25xf32, #tpu.memory_space<smem>>
      %c3_i32 = arith.constant 3 : i32
      %36 = arith.addi %23, %c3_i32 : i32
      %37 = arith.index_cast %arg0 : i32 to index
      %38 = arith.index_cast %36 : i32 to index
      %39 = memref.load %arg2[%37, %38] : memref<2x25xf32, #tpu.memory_space<smem>>
      %40 = arith.subf %35, %27 : f32
      %cst_19 = arith.constant 1.000000e+00 : f32
      %41 = arith.addf %40, %cst_19 : f32
      %42 = arith.subf %39, %31 : f32
      %cst_20 = arith.constant 1.000000e+00 : f32
      %43 = arith.addf %42, %cst_20 : f32
      %44 = arith.mulf %41, %43 : f32
      %cst_21 = arith.constant 1.000000e+00 : f32
      %45 = arith.cmpf oeq, %41, %cst_21 : f32
      %cst_22 = arith.constant 1.000000e+00 : f32
      %46 = arith.cmpf oeq, %43, %cst_22 : f32
      %47 = arith.andi %45, %46 : i1
      %cst_23 = arith.constant 0.000000e+00 : f32
      %cst_24 = arith.constant 1.000000e+00 : f32
      %48 = arith.select %47, %cst_23, %cst_24 : f32
      %49 = vector.broadcast %35 : f32 to vector<8x256xf32>
      %50 = arith.minimumf %5, %49 : vector<8x256xf32>
      %51 = vector.broadcast %27 : f32 to vector<8x256xf32>
      %52 = arith.maximumf %1, %51 : vector<8x256xf32>
      %53 = arith.subf %50, %52 : vector<8x256xf32>
      %cst_25 = arith.constant 1.000000e+00 : f32
      %54 = vector.broadcast %cst_25 : f32 to vector<8x256xf32>
      %55 = arith.addf %53, %54 : vector<8x256xf32>
      %cst_26 = arith.constant 0.000000e+00 : f32
      %56 = vector.broadcast %cst_26 : f32 to vector<8x256xf32>
      %57 = arith.maximumf %55, %56 : vector<8x256xf32>
      %58 = vector.broadcast %39 : f32 to vector<8x256xf32>
      %59 = arith.minimumf %7, %58 : vector<8x256xf32>
      %60 = vector.broadcast %31 : f32 to vector<8x256xf32>
      %61 = arith.maximumf %3, %60 : vector<8x256xf32>
      %62 = arith.subf %59, %61 : vector<8x256xf32>
      %cst_27 = arith.constant 1.000000e+00 : f32
      %63 = vector.broadcast %cst_27 : f32 to vector<8x256xf32>
      %64 = arith.addf %62, %63 : vector<8x256xf32>
      %cst_28 = arith.constant 0.000000e+00 : f32
      %65 = vector.broadcast %cst_28 : f32 to vector<8x256xf32>
      %66 = arith.maximumf %64, %65 : vector<8x256xf32>
      %67 = arith.mulf %57, %66 : vector<8x256xf32>
      %68 = vector.broadcast %44 : f32 to vector<8x256xf32>
      %69 = arith.addf %9, %68 : vector<8x256xf32>
      %70 = arith.subf %69, %67 : vector<8x256xf32>
      %71 = tpu.reciprocal %70 {approx = true} : vector<8x256xf32> -> vector<8x256xf32>
      %72 = arith.mulf %67, %71 : vector<8x256xf32>
      %73 = vector.broadcast %48 : f32 to vector<8x256xf32>
      %74 = arith.mulf %72, %73 : vector<8x256xf32>
      %cst_29 = arith.constant 0.000000e+00 : f32
      %75 = vector.broadcast %cst_29 : f32 to vector<8x256xf32>
      %76 = arith.select %12, %74, %75 : vector<8x256xi1>, vector<8x256xf32>
      %cst_30 = arith.constant dense<0xFF800000> : vector<8xf32>
      %77 = vector.multi_reduction <maximumf>, %76, %cst_30 [1] : vector<8x256xf32> to vector<8xf32>
      %78 = vector.shape_cast %77 : vector<8xf32> to vector<8x1xf32>
      %cst_31 = arith.constant dense<0xFF800000> : vector<1xf32>
      %79 = vector.multi_reduction <maximumf>, %78, %cst_31 [0] : vector<8x1xf32> to vector<1xf32>
      %80 = vector.shape_cast %79 : vector<1xf32> to vector<1x1xf32>
      %81 = vector.broadcast %arg7 : i32 to vector<8x128xi32>
      %82 = arith.cmpi eq, %13, %81 : vector<8x128xi32>
      %83 = vector.shape_cast %80 : vector<1x1xf32> to vector<1x1xf32>
      %84 = vector.broadcast %83 : vector<1x1xf32> to vector<8x128xf32>
      %85 = arith.select %82, %84, %arg8 : vector<8x128xi1>, vector<8x128xf32>
      scf.yield %85 : vector<8x128xf32>
    }
    %c0_13 = arith.constant 0 : index
    %c0_14 = arith.constant 0 : index
    %c0_15 = arith.constant 0 : index
    %c0_16 = arith.constant 0 : index
    %20 = vector.load %arg6[%c0_13, %c0_14, %c0_15, %c0_16] : memref<1x1x8x128xf32, #tpu.memory_space<vmem>>, vector<1x1x8x128xf32>
    %21 = vector.shape_cast %20 : vector<1x1x8x128xf32> to vector<8x128xf32>
    %22 = vector.shape_cast %19 : vector<8x128xf32> to vector<1x1x8x128xf32>
    tpu.vector_store %arg6[%c0_13, %c0_14, %c0_15, %c0_16], %22 {strides = array<i32>} : memref<1x1x8x128xf32, #tpu.memory_space<vmem>>, vector<1x1x8x128xf32>,
    return
  }
  func.func @transform_0(%arg0: i32, %arg1: i32) -> (i32, i32) {
    %c0_i32 = arith.constant 0 : i32
    %c0_i32_0 = arith.constant 0 : i32
    %c0_i32_1 = arith.constant 0 : i32
    return %c0_i32, %c0_i32_0 : i32, i32
  }
  func.func @transform_1(%arg0: i32, %arg1: i32) -> i32 {
    %c0_i32 = arith.constant 0 : i32
    %c0_i32_0 = arith.constant 0 : i32
    return %c0_i32 : i32
  }
  func.func @transform_2(%arg0: i32, %arg1: i32) -> (i32, i32, i32) {
    %c0_i32 = arith.constant 0 : i32
    %c0_i32_0 = arith.constant 0 : i32
    %c0_i32_1 = arith.constant 0 : i32
    return %c0_i32, %c0_i32_0, %arg1 : i32, i32, i32
  }
  func.func @transform_3(%arg0: i32, %arg1: i32) -> (i32, i32) {
    %c0_i32 = arith.constant 0 : i32
    %c0_i32_0 = arith.constant 0 : i32
    return %c0_i32, %arg1 : i32, i32
  }
  func.func @transform_4(%arg0: i32, %arg1: i32) -> (i32, i32, i32, i32) {
    %c0_i32 = arith.constant 0 : i32
    %c0_i32_0 = arith.constant 0 : i32
    %c0_i32_1 = arith.constant 0 : i32
    return %arg0, %arg1, %c0_i32, %c0_i32_0 : i32, i32, i32, i32
  }
}

module attributes {stable_mosaic.version = 11 : i64} {
  func.func @_anchor_target_kernel(%arg0: i32, %arg1: i32, %arg2: memref<2x25xf32, #tpu.memory_space<smem>>, %arg3: memref<2xi32, #tpu.memory_space<smem>>, %arg4: memref<2x5xf32, #tpu.memory_space<smem>>, %arg5: memref<5x8x256xf32, #tpu.memory_space<vmem>>, %arg6: memref<4x8x256xf32, #tpu.memory_space<vmem>>, %arg7: memref<8x256xf32, #tpu.memory_space<vmem>>, %arg8: memref<1x6x8x256xf32, #tpu.memory_space<vmem>>) attributes {dimension_semantics = [#tpu.dimension_semantics<parallel>, #tpu.dimension_semantics<parallel>], iteration_bounds = array<i64: 2, 2>, scalar_prefetch = 0 : i64, scratch_operands = 0 : i64, tpu.core_type = #tpu.core_type<tc>, window_params = [{transform_indices = @transform_0, window_bounds = array<i64: 2, 25>}, {transform_indices = @transform_1, window_bounds = array<i64: 2>}, {transform_indices = @transform_2, window_bounds = array<i64: 2, 5>}, {transform_indices = @transform_3, window_bounds = array<i64: 5, 8, 256>}, {transform_indices = @transform_4, window_bounds = array<i64: 4, 8, 256>}, {transform_indices = @transform_5, window_bounds = array<i64: 8, 256>}, {transform_indices = @transform_6, window_bounds = array<i64: 1, 6, 8, 256>}]} {
    %c0 = arith.constant 0 : index
    %c0_0 = arith.constant 0 : index
    %c0_1 = arith.constant 0 : index
    %0 = vector.load %arg5[%c0, %c0_0, %c0_1] : memref<5x8x256xf32, #tpu.memory_space<vmem>>, vector<1x8x256xf32>
    %1 = vector.shape_cast %0 : vector<1x8x256xf32> to vector<8x256xf32>
    %c1 = arith.constant 1 : index
    %c0_2 = arith.constant 0 : index
    %c0_3 = arith.constant 0 : index
    %2 = vector.load %arg5[%c1, %c0_2, %c0_3] : memref<5x8x256xf32, #tpu.memory_space<vmem>>, vector<1x8x256xf32>
    %3 = vector.shape_cast %2 : vector<1x8x256xf32> to vector<8x256xf32>
    %c2 = arith.constant 2 : index
    %c0_4 = arith.constant 0 : index
    %c0_5 = arith.constant 0 : index
    %4 = vector.load %arg5[%c2, %c0_4, %c0_5] : memref<5x8x256xf32, #tpu.memory_space<vmem>>, vector<1x8x256xf32>
    %5 = vector.shape_cast %4 : vector<1x8x256xf32> to vector<8x256xf32>
    %c3 = arith.constant 3 : index
    %c0_6 = arith.constant 0 : index
    %c0_7 = arith.constant 0 : index
    %6 = vector.load %arg5[%c3, %c0_6, %c0_7] : memref<5x8x256xf32, #tpu.memory_space<vmem>>, vector<1x8x256xf32>
    %7 = vector.shape_cast %6 : vector<1x8x256xf32> to vector<8x256xf32>
    %c4 = arith.constant 4 : index
    %c0_8 = arith.constant 0 : index
    %c0_9 = arith.constant 0 : index
    %8 = vector.load %arg5[%c4, %c0_8, %c0_9] : memref<5x8x256xf32, #tpu.memory_space<vmem>>, vector<1x8x256xf32>
    %9 = vector.shape_cast %8 : vector<1x8x256xf32> to vector<8x256xf32>
    %c0_10 = arith.constant 0 : index
    %c0_11 = arith.constant 0 : index
    %10 = vector.load %arg7[%c0_10, %c0_11] : memref<8x256xf32, #tpu.memory_space<vmem>>, vector<8x256xf32>
    %cst = arith.constant 5.000000e-01 : f32
    %11 = vector.broadcast %cst : f32 to vector<8x256xf32>
    %12 = arith.cmpf ogt, %10, %11 : vector<8x256xf32>
    %cst_12 = arith.constant -1.000000e+30 : f32
    %13 = vector.broadcast %cst_12 : f32 to vector<8x256xf32>
    %cst_13 = arith.constant 0.000000e+00 : f32
    %14 = vector.broadcast %cst_13 : f32 to vector<8x256xf32>
    %cst_14 = arith.constant 5.000000e-01 : f32
    %15 = vector.broadcast %cst_14 : f32 to vector<8x256xf32>
    %cst_15 = arith.constant 5.000000e-01 : f32
    %16 = vector.broadcast %cst_15 : f32 to vector<8x256xf32>
    %cst_16 = arith.constant 1.000000e+00 : f32
    %17 = vector.broadcast %cst_16 : f32 to vector<8x256xf32>
    %cst_17 = arith.constant 1.000000e+00 : f32
    %18 = vector.broadcast %cst_17 : f32 to vector<8x256xf32>
    %19 = arith.index_cast %arg0 : i32 to index
    %20 = memref.load %arg3[%19] : memref<2xi32, #tpu.memory_space<smem>>
    %c0_i32 = arith.constant 0 : i32
    %21 = arith.subi %20, %c0_i32 : i32
    %22 = arith.addi %c0_i32, %21 : i32
    %c1_i32 = arith.constant 1 : i32
    %23:6 = scf.for %arg9 = %c0_i32 to %22 step %c1_i32 iter_args(%arg10 = %13, %arg11 = %14, %arg12 = %15, %arg13 = %16, %arg14 = %17, %arg15 = %18) -> (vector<8x256xf32>, vector<8x256xf32>, vector<8x256xf32>, vector<8x256xf32>, vector<8x256xf32>, vector<8x256xf32>)  : i32 {
      %c5_i32 = arith.constant 5 : i32
      %82 = arith.muli %c5_i32, %arg9 : i32
      %c0_i32_64 = arith.constant 0 : i32
      %83 = arith.addi %82, %c0_i32_64 : i32
      %84 = arith.index_cast %arg0 : i32 to index
      %85 = arith.index_cast %83 : i32 to index
      %86 = memref.load %arg2[%84, %85] : memref<2x25xf32, #tpu.memory_space<smem>>
      %c1_i32_65 = arith.constant 1 : i32
      %87 = arith.addi %82, %c1_i32_65 : i32
      %88 = arith.index_cast %arg0 : i32 to index
      %89 = arith.index_cast %87 : i32 to index
      %90 = memref.load %arg2[%88, %89] : memref<2x25xf32, #tpu.memory_space<smem>>
      %c2_i32 = arith.constant 2 : i32
      %91 = arith.addi %82, %c2_i32 : i32
      %92 = arith.index_cast %arg0 : i32 to index
      %93 = arith.index_cast %91 : i32 to index
      %94 = memref.load %arg2[%92, %93] : memref<2x25xf32, #tpu.memory_space<smem>>
      %c3_i32 = arith.constant 3 : i32
      %95 = arith.addi %82, %c3_i32 : i32
      %96 = arith.index_cast %arg0 : i32 to index
      %97 = arith.index_cast %95 : i32 to index
      %98 = memref.load %arg2[%96, %97] : memref<2x25xf32, #tpu.memory_space<smem>>
      %99 = arith.subf %94, %86 : f32
      %cst_66 = arith.constant 1.000000e+00 : f32
      %100 = arith.addf %99, %cst_66 : f32
      %101 = arith.subf %98, %90 : f32
      %cst_67 = arith.constant 1.000000e+00 : f32
      %102 = arith.addf %101, %cst_67 : f32
      %103 = arith.mulf %100, %102 : f32
      %cst_68 = arith.constant 1.000000e+00 : f32
      %104 = arith.cmpf oeq, %100, %cst_68 : f32
      %cst_69 = arith.constant 1.000000e+00 : f32
      %105 = arith.cmpf oeq, %102, %cst_69 : f32
      %106 = arith.andi %104, %105 : i1
      %cst_70 = arith.constant 0.000000e+00 : f32
      %cst_71 = arith.constant 1.000000e+00 : f32
      %107 = arith.select %106, %cst_70, %cst_71 : f32
      %108 = vector.broadcast %94 : f32 to vector<8x256xf32>
      %109 = arith.minimumf %5, %108 : vector<8x256xf32>
      %110 = vector.broadcast %86 : f32 to vector<8x256xf32>
      %111 = arith.maximumf %1, %110 : vector<8x256xf32>
      %112 = arith.subf %109, %111 : vector<8x256xf32>
      %cst_72 = arith.constant 1.000000e+00 : f32
      %113 = vector.broadcast %cst_72 : f32 to vector<8x256xf32>
      %114 = arith.addf %112, %113 : vector<8x256xf32>
      %cst_73 = arith.constant 0.000000e+00 : f32
      %115 = vector.broadcast %cst_73 : f32 to vector<8x256xf32>
      %116 = arith.maximumf %114, %115 : vector<8x256xf32>
      %117 = vector.broadcast %98 : f32 to vector<8x256xf32>
      %118 = arith.minimumf %7, %117 : vector<8x256xf32>
      %119 = vector.broadcast %90 : f32 to vector<8x256xf32>
      %120 = arith.maximumf %3, %119 : vector<8x256xf32>
      %121 = arith.subf %118, %120 : vector<8x256xf32>
      %cst_74 = arith.constant 1.000000e+00 : f32
      %122 = vector.broadcast %cst_74 : f32 to vector<8x256xf32>
      %123 = arith.addf %121, %122 : vector<8x256xf32>
      %cst_75 = arith.constant 0.000000e+00 : f32
      %124 = vector.broadcast %cst_75 : f32 to vector<8x256xf32>
      %125 = arith.maximumf %123, %124 : vector<8x256xf32>
      %126 = arith.mulf %116, %125 : vector<8x256xf32>
      %127 = vector.broadcast %103 : f32 to vector<8x256xf32>
      %128 = arith.addf %9, %127 : vector<8x256xf32>
      %129 = arith.subf %128, %126 : vector<8x256xf32>
      %130 = tpu.reciprocal %129 {approx = true} : vector<8x256xf32> -> vector<8x256xf32>
      %131 = arith.mulf %126, %130 : vector<8x256xf32>
      %132 = vector.broadcast %107 : f32 to vector<8x256xf32>
      %133 = arith.mulf %131, %132 : vector<8x256xf32>
      %134 = arith.index_cast %arg0 : i32 to index
      %135 = arith.index_cast %arg9 : i32 to index
      %136 = memref.load %arg4[%134, %135] : memref<2x5xf32, #tpu.memory_space<smem>>
      %137 = vector.broadcast %136 : f32 to vector<8x256xf32>
      %138 = arith.cmpf oeq, %133, %137 : vector<8x256xf32>
      %139 = arith.extui %138 : vector<8x256xi1> to vector<8x256xi32>
      %140 = arith.sitofp %139 : vector<8x256xi32> to vector<8x256xf32>
      %141 = arith.addf %arg11, %140 : vector<8x256xf32>
      %142 = arith.cmpf ogt, %133, %arg10 : vector<8x256xf32>
      %143 = arith.select %142, %133, %arg10 : vector<8x256xi1>, vector<8x256xf32>
      %cst_76 = arith.constant 5.000000e-01 : f32
      %144 = arith.mulf %cst_76, %100 : f32
      %145 = arith.addf %86, %144 : f32
      %146 = vector.broadcast %145 : f32 to vector<8x256xf32>
      %147 = arith.select %142, %146, %arg12 : vector<8x256xi1>, vector<8x256xf32>
      %cst_77 = arith.constant 5.000000e-01 : f32
      %148 = arith.mulf %cst_77, %102 : f32
      %149 = arith.addf %90, %148 : f32
      %150 = vector.broadcast %149 : f32 to vector<8x256xf32>
      %151 = arith.select %142, %150, %arg13 : vector<8x256xi1>, vector<8x256xf32>
      %152 = vector.broadcast %100 : f32 to vector<8x256xf32>
      %153 = arith.select %142, %152, %arg14 : vector<8x256xi1>, vector<8x256xf32>
      %154 = vector.broadcast %102 : f32 to vector<8x256xf32>
      %155 = arith.select %142, %154, %arg15 : vector<8x256xi1>, vector<8x256xf32>
      scf.yield %143, %141, %147, %151, %153, %155 : vector<8x256xf32>, vector<8x256xf32>, vector<8x256xf32>, vector<8x256xf32>, vector<8x256xf32>, vector<8x256xf32>
    }
    %cst_18 = arith.constant -1.000000e+00 : f32
    %24 = vector.broadcast %cst_18 : f32 to vector<8x256xf32>
    %cst_19 = arith.constant 3.000000e-01 : f32
    %25 = vector.broadcast %cst_19 : f32 to vector<8x256xf32>
    %26 = arith.cmpf olt, %23#0, %25 : vector<8x256xf32>
    %cst_20 = arith.constant 0.000000e+00 : f32
    %27 = vector.broadcast %cst_20 : f32 to vector<8x256xf32>
    %28 = arith.select %26, %27, %24 : vector<8x256xi1>, vector<8x256xf32>
    %cst_21 = arith.constant 0.000000e+00 : f32
    %29 = vector.broadcast %cst_21 : f32 to vector<8x256xf32>
    %30 = arith.cmpf ogt, %23#1, %29 : vector<8x256xf32>
    %cst_22 = arith.constant 1.000000e+00 : f32
    %31 = vector.broadcast %cst_22 : f32 to vector<8x256xf32>
    %32 = arith.select %30, %31, %28 : vector<8x256xi1>, vector<8x256xf32>
    %cst_23 = arith.constant 0.699999988 : f32
    %33 = vector.broadcast %cst_23 : f32 to vector<8x256xf32>
    %34 = arith.cmpf oge, %23#0, %33 : vector<8x256xf32>
    %cst_24 = arith.constant 1.000000e+00 : f32
    %35 = vector.broadcast %cst_24 : f32 to vector<8x256xf32>
    %36 = arith.select %34, %35, %32 : vector<8x256xi1>, vector<8x256xf32>
    %cst_25 = arith.constant -1.000000e+00 : f32
    %37 = vector.broadcast %cst_25 : f32 to vector<8x256xf32>
    %38 = arith.select %12, %36, %37 : vector<8x256xi1>, vector<8x256xf32>
    %c0_26 = arith.constant 0 : index
    %c0_27 = arith.constant 0 : index
    %c0_28 = arith.constant 0 : index
    %39 = vector.load %arg6[%c0_26, %c0_27, %c0_28] : memref<4x8x256xf32, #tpu.memory_space<vmem>>, vector<1x8x256xf32>
    %40 = vector.shape_cast %39 : vector<1x8x256xf32> to vector<8x256xf32>
    %c1_29 = arith.constant 1 : index
    %c0_30 = arith.constant 0 : index
    %c0_31 = arith.constant 0 : index
    %41 = vector.load %arg6[%c1_29, %c0_30, %c0_31] : memref<4x8x256xf32, #tpu.memory_space<vmem>>, vector<1x8x256xf32>
    %42 = vector.shape_cast %41 : vector<1x8x256xf32> to vector<8x256xf32>
    %c2_32 = arith.constant 2 : index
    %c0_33 = arith.constant 0 : index
    %c0_34 = arith.constant 0 : index
    %43 = vector.load %arg6[%c2_32, %c0_33, %c0_34] : memref<4x8x256xf32, #tpu.memory_space<vmem>>, vector<1x8x256xf32>
    %44 = vector.shape_cast %43 : vector<1x8x256xf32> to vector<8x256xf32>
    %c3_35 = arith.constant 3 : index
    %c0_36 = arith.constant 0 : index
    %c0_37 = arith.constant 0 : index
    %45 = vector.load %arg6[%c3_35, %c0_36, %c0_37] : memref<4x8x256xf32, #tpu.memory_space<vmem>>, vector<1x8x256xf32>
    %46 = vector.shape_cast %45 : vector<1x8x256xf32> to vector<8x256xf32>
    %47 = arith.subf %23#2, %40 : vector<8x256xf32>
    %48 = arith.mulf %47, %44 : vector<8x256xf32>
    %49 = arith.mulf %48, %10 : vector<8x256xf32>
    %50 = arith.subf %23#3, %42 : vector<8x256xf32>
    %51 = arith.mulf %50, %46 : vector<8x256xf32>
    %52 = arith.mulf %51, %10 : vector<8x256xf32>
    %53 = arith.mulf %23#4, %44 : vector<8x256xf32>
    %54 = math.log %53 : vector<8x256xf32>
    %55 = arith.mulf %54, %10 : vector<8x256xf32>
    %56 = arith.mulf %23#5, %46 : vector<8x256xf32>
    %57 = math.log %56 : vector<8x256xf32>
    %58 = arith.mulf %57, %10 : vector<8x256xf32>
    %c0_38 = arith.constant 0 : index
    %c0_39 = arith.constant 0 : index
    %c0_40 = arith.constant 0 : index
    %c0_41 = arith.constant 0 : index
    %59 = vector.load %arg8[%c0_38, %c0_39, %c0_40, %c0_41] : memref<1x6x8x256xf32, #tpu.memory_space<vmem>>, vector<1x1x8x256xf32>
    %60 = vector.shape_cast %59 : vector<1x1x8x256xf32> to vector<8x256xf32>
    %61 = vector.shape_cast %38 : vector<8x256xf32> to vector<1x1x8x256xf32>
    tpu.vector_store %arg8[%c0_38, %c0_39, %c0_40, %c0_41], %61 {strides = array<i32>} : memref<1x6x8x256xf32, #tpu.memory_space<vmem>>, vector<1x1x8x256xf32>,
    %cst_42 = arith.constant 1.000000e+00 : f32
    %62 = vector.broadcast %cst_42 : f32 to vector<8x256xf32>
    %63 = arith.cmpf oeq, %38, %62 : vector<8x256xf32>
    %cst_43 = arith.constant 1.000000e+00 : f32
    %cst_44 = arith.constant 0.000000e+00 : f32
    %64 = vector.broadcast %cst_43 : f32 to vector<8x256xf32>
    %65 = vector.broadcast %cst_44 : f32 to vector<8x256xf32>
    %66 = arith.select %63, %64, %65 : vector<8x256xi1>, vector<8x256xf32>
    %c0_45 = arith.constant 0 : index
    %c1_46 = arith.constant 1 : index
    %c0_47 = arith.constant 0 : index
    %c0_48 = arith.constant 0 : index
    %67 = vector.load %arg8[%c0_45, %c1_46, %c0_47, %c0_48] : memref<1x6x8x256xf32, #tpu.memory_space<vmem>>, vector<1x1x8x256xf32>
    %68 = vector.shape_cast %67 : vector<1x1x8x256xf32> to vector<8x256xf32>
    %69 = vector.shape_cast %66 : vector<8x256xf32> to vector<1x1x8x256xf32>
    tpu.vector_store %arg8[%c0_45, %c1_46, %c0_47, %c0_48], %69 {strides = array<i32>} : memref<1x6x8x256xf32, #tpu.memory_space<vmem>>, vector<1x1x8x256xf32>,
    %c0_49 = arith.constant 0 : index
    %c2_50 = arith.constant 2 : index
    %c0_51 = arith.constant 0 : index
    %c0_52 = arith.constant 0 : index
    %70 = vector.load %arg8[%c0_49, %c2_50, %c0_51, %c0_52] : memref<1x6x8x256xf32, #tpu.memory_space<vmem>>, vector<1x1x8x256xf32>
    %71 = vector.shape_cast %70 : vector<1x1x8x256xf32> to vector<8x256xf32>
    %72 = vector.shape_cast %49 : vector<8x256xf32> to vector<1x1x8x256xf32>
    tpu.vector_store %arg8[%c0_49, %c2_50, %c0_51, %c0_52], %72 {strides = array<i32>} : memref<1x6x8x256xf32, #tpu.memory_space<vmem>>, vector<1x1x8x256xf32>,
    %c0_53 = arith.constant 0 : index
    %c3_54 = arith.constant 3 : index
    %c0_55 = arith.constant 0 : index
    %c0_56 = arith.constant 0 : index
    %73 = vector.load %arg8[%c0_53, %c3_54, %c0_55, %c0_56] : memref<1x6x8x256xf32, #tpu.memory_space<vmem>>, vector<1x1x8x256xf32>
    %74 = vector.shape_cast %73 : vector<1x1x8x256xf32> to vector<8x256xf32>
    %75 = vector.shape_cast %52 : vector<8x256xf32> to vector<1x1x8x256xf32>
    tpu.vector_store %arg8[%c0_53, %c3_54, %c0_55, %c0_56], %75 {strides = array<i32>} : memref<1x6x8x256xf32, #tpu.memory_space<vmem>>, vector<1x1x8x256xf32>,
    %c0_57 = arith.constant 0 : index
    %c4_58 = arith.constant 4 : index
    %c0_59 = arith.constant 0 : index
    %c0_60 = arith.constant 0 : index
    %76 = vector.load %arg8[%c0_57, %c4_58, %c0_59, %c0_60] : memref<1x6x8x256xf32, #tpu.memory_space<vmem>>, vector<1x1x8x256xf32>
    %77 = vector.shape_cast %76 : vector<1x1x8x256xf32> to vector<8x256xf32>
    %78 = vector.shape_cast %55 : vector<8x256xf32> to vector<1x1x8x256xf32>
    tpu.vector_store %arg8[%c0_57, %c4_58, %c0_59, %c0_60], %78 {strides = array<i32>} : memref<1x6x8x256xf32, #tpu.memory_space<vmem>>, vector<1x1x8x256xf32>,
    %c0_61 = arith.constant 0 : index
    %c5 = arith.constant 5 : index
    %c0_62 = arith.constant 0 : index
    %c0_63 = arith.constant 0 : index
    %79 = vector.load %arg8[%c0_61, %c5, %c0_62, %c0_63] : memref<1x6x8x256xf32, #tpu.memory_space<vmem>>, vector<1x1x8x256xf32>
    %80 = vector.shape_cast %79 : vector<1x1x8x256xf32> to vector<8x256xf32>
    %81 = vector.shape_cast %58 : vector<8x256xf32> to vector<1x1x8x256xf32>
    tpu.vector_store %arg8[%c0_61, %c5, %c0_62, %c0_63], %81 {strides = array<i32>} : memref<1x6x8x256xf32, #tpu.memory_space<vmem>>, vector<1x1x8x256xf32>,
    return
  }
  func.func @transform_0(%arg0: i32, %arg1: i32) -> (i32, i32) {
    %c0_i32 = arith.constant 0 : i32
    %c0_i32_0 = arith.constant 0 : i32
    %c0_i32_1 = arith.constant 0 : i32
    return %c0_i32, %c0_i32_0 : i32, i32
  }
  func.func @transform_1(%arg0: i32, %arg1: i32) -> i32 {
    %c0_i32 = arith.constant 0 : i32
    %c0_i32_0 = arith.constant 0 : i32
    return %c0_i32 : i32
  }
  func.func @transform_2(%arg0: i32, %arg1: i32) -> (i32, i32) {
    %c0_i32 = arith.constant 0 : i32
    %c0_i32_0 = arith.constant 0 : i32
    %c0_i32_1 = arith.constant 0 : i32
    return %c0_i32, %c0_i32_0 : i32, i32
  }
  func.func @transform_3(%arg0: i32, %arg1: i32) -> (i32, i32, i32) {
    %c0_i32 = arith.constant 0 : i32
    %c0_i32_0 = arith.constant 0 : i32
    %c0_i32_1 = arith.constant 0 : i32
    return %c0_i32, %c0_i32_0, %arg1 : i32, i32, i32
  }
  func.func @transform_4(%arg0: i32, %arg1: i32) -> (i32, i32, i32) {
    %c0_i32 = arith.constant 0 : i32
    %c0_i32_0 = arith.constant 0 : i32
    %c0_i32_1 = arith.constant 0 : i32
    return %c0_i32, %c0_i32_0, %arg1 : i32, i32, i32
  }
  func.func @transform_5(%arg0: i32, %arg1: i32) -> (i32, i32) {
    %c0_i32 = arith.constant 0 : i32
    %c0_i32_0 = arith.constant 0 : i32
    return %c0_i32, %arg1 : i32, i32
  }
  func.func @transform_6(%arg0: i32, %arg1: i32) -> (i32, i32, i32, i32) {
    %c0_i32 = arith.constant 0 : i32
    %c0_i32_0 = arith.constant 0 : i32
    %c0_i32_1 = arith.constant 0 : i32
    return %arg0, %c0_i32, %c0_i32_0, %arg1 : i32, i32, i32, i32
  }
}

</mosaic_0001>

<llo_original>
// kernel: squeeze.20
$region0: #{squeeze.20}
  %s0 = inlined_call_operand.vmem [shape: f32[2,1,2304], index: 0, kind: input, shape index: {}]
  %s1 = inlined_call_operand.vmem [shape: f32[2,16,24,6], index: 1, kind: output, shape index: {}]
  $region1: #{squeeze.20} parent=0
    #allocation0 [shape = 'u8[73728]{0}', space=vmem, size = 0x12000, scoped, tag = 'scoped mem for input reshape']
    %s3 = sshll.u32 1, 2
    %s4 = ssub.s32 %s3, 1
    %s5 = smul.addr 2, 17
    %s6 = scalar_lea.vmem %s0, %s5
    %v7 = vld [vmem:[%s6] sm:%s4]
    %s8 = scalar_lea.vmem [#allocation0], 136
    %9 = vst [vmem:[%s8] sm:%s4] %v7
    %s10 = smul.addr 2, 16
    %s11 = scalar_lea.vmem %s0, %s10
    %v12 = vld [vmem:[%s11] sm:%s4]
    %s13 = scalar_lea.vmem [#allocation0], 128
    %14 = vst [vmem:[%s13] sm:%s4] %v12
    %s15 = smul.addr 2, 15
    %s16 = scalar_lea.vmem %s0, %s15
    %v17 = vld [vmem:[%s16] sm:%s4]
    %s18 = scalar_lea.vmem [#allocation0], 120
    %19 = vst [vmem:[%s18] sm:%s4] %v17
    %s20 = smul.addr 2, 14
    %s21 = scalar_lea.vmem %s0, %s20
    %v22 = vld [vmem:[%s21] sm:%s4]
    %s23 = scalar_lea.vmem [#allocation0], 112
    %24 = vst [vmem:[%s23] sm:%s4] %v22
    %s25 = smul.addr 2, 13
    %s26 = scalar_lea.vmem %s0, %s25
    %v27 = vld [vmem:[%s26] sm:%s4]
    %s28 = scalar_lea.vmem [#allocation0], 104
    %29 = vst [vmem:[%s28] sm:%s4] %v27
    %s30 = smul.addr 2, 12
    %s31 = scalar_lea.vmem %s0, %s30
    %v32 = vld [vmem:[%s31] sm:%s4]
    %s33 = scalar_lea.vmem [#allocation0], 96
    %34 = vst [vmem:[%s33] sm:%s4] %v32
    %s35 = smul.addr 2, 11
    %s36 = scalar_lea.vmem %s0, %s35
    %v37 = vld [vmem:[%s36] sm:%s4]
    %s38 = scalar_lea.vmem [#allocation0], 88
    %39 = vst [vmem:[%s38] sm:%s4] %v37
    %s40 = smul.addr 2, 10
    %s41 = scalar_lea.vmem %s0, %s40
    %v42 = vld [vmem:[%s41] sm:%s4]
    %s43 = scalar_lea.vmem [#allocation0], 80
    %44 = vst [vmem:[%s43] sm:%s4] %v42
    %s45 = smul.addr 2, 9
    %s46 = scalar_lea.vmem %s0, %s45
    %v47 = vld [vmem:[%s46] sm:%s4]
    %s48 = scalar_lea.vmem [#allocation0], 72
    %49 = vst [vmem:[%s48] sm:%s4] %v47
    %s50 = smul.addr 2, 8
    %s51 = scalar_lea.vmem %s0, %s50
    %v52 = vld [vmem:[%s51] sm:%s4]
    %s53 = scalar_lea.vmem [#allocation0], 64
    %54 = vst [vmem:[%s53] sm:%s4] %v52
    %s55 = smul.addr 2, 7
    %s56 = scalar_lea.vmem %s0, %s55
    %v57 = vld [vmem:[%s56] sm:%s4]
    %s58 = scalar_lea.vmem [#allocation0], 56
    %59 = vst [vmem:[%s58] sm:%s4] %v57
    %s60 = smul.addr 2, 6
    %s61 = scalar_lea.vmem %s0, %s60
    %v62 = vld [vmem:[%s61] sm:%s4]
    %s63 = scalar_lea.vmem [#allocation0], 48
    %64 = vst [vmem:[%s63] sm:%s4] %v62
    %s65 = smul.addr 2, 5
    %s66 = scalar_lea.vmem %s0, %s65
    %v67 = vld [vmem:[%s66] sm:%s4]
    %s68 = scalar_lea.vmem [#allocation0], 40
    %69 = vst [vmem:[%s68] sm:%s4] %v67
    %s70 = smul.addr 2, 4
    %s71 = scalar_lea.vmem %s0, %s70
    %v72 = vld [vmem:[%s71] sm:%s4]
    %s73 = scalar_lea.vmem [#allocation0], 32
    %74 = vst [vmem:[%s73] sm:%s4] %v72
    %s75 = smul.addr 2, 3
    %s76 = scalar_lea.vmem %s0, %s75
    %v77 = vld [vmem:[%s76] sm:%s4]
    %s78 = scalar_lea.vmem [#allocation0], 24
    %79 = vst [vmem:[%s78] sm:%s4] %v77
    %s80 = smul.addr 2, 2
    %s81 = scalar_lea.vmem %s0, %s80
    %v82 = vld [vmem:[%s81] sm:%s4]
    %s83 = scalar_lea.vmem [#allocation0], 16
    %84 = vst [vmem:[%s83] sm:%s4] %v82
    %s85 = scalar_lea.vmem %s0, 2
    %v86 = vld [vmem:[%s85] sm:%s4]
    %s87 = scalar_lea.vmem [#allocation0], 8
    %88 = vst [vmem:[%s87] sm:%s4] %v86
    %v89 = vld [vmem:[%s0] sm:%s4]
    %90 = vst [vmem:[#allocation0] sm:%s4] %v89
    %v91 = vld [vmem:[#allocation0] sm:$0x3]
    %vm92 = vcmask 48128
    %93 = vst.msk [vmem:[%s1] sm:$0x1] %vm92, %v91
    %s94 = scalar_lea.vmem %s1, 383
    %95 = vst.msk [vmem:[%s94] sm:$0x2] %vm92, %v91
    %s96 = scalar_lea.vmem [#allocation0], 24
    %v97 = vld [vmem:[%s96] sm:$0x3]
    %vm98 = vcmask 48128
    %s99 = scalar_lea.vmem %s1, 64
    %100 = vst.msk [vmem:[%s99] sm:$0x1] %vm98, %v97
    %s101 = scalar_lea.vmem %s1, 447
    %102 = vst.msk [vmem:[%s101] sm:$0x2] %vm98, %v97
    %s103 = scalar_lea.vmem [#allocation0], 48
    %v104 = vld [vmem:[%s103] sm:$0x3]
    %vm105 = vcmask 48128
    %s106 = scalar_lea.vmem %s1, 128
    %107 = vst.msk [vmem:[%s106] sm:$0x1] %vm105, %v104
    %s108 = scalar_lea.vmem %s1, 511
    %109 = vst.msk [vmem:[%s108] sm:$0x2] %vm105, %v104
    %s110 = scalar_lea.vmem [#allocation0], 72
    %v111 = vld [vmem:[%s110] sm:$0x3]
    %vm112 = vcmask 48128
    %s113 = scalar_lea.vmem %s1, 192
    %114 = vst.msk [vmem:[%s113] sm:$0x1] %vm112, %v111
    %s115 = scalar_lea.vmem %s1, 575
    %116 = vst.msk [vmem:[%s115] sm:$0x2] %vm112, %v111
    %s117 = scalar_lea.vmem [#allocation0], 96
    %v118 = vld [vmem:[%s117] sm:$0x3]
    %vm119 = vcmask 48128
    %s120 = scalar_lea.vmem %s1, 256
    %121 = vst.msk [vmem:[%s120] sm:$0x1] %vm119, %v118
    %s122 = scalar_lea.vmem %s1, 639
    %123 = vst.msk [vmem:[%s122] sm:$0x2] %vm119, %v118
    %s124 = scalar_lea.vmem [#allocation0], 120
    %v125 = vld [vmem:[%s124] sm:$0x3]
    %vm126 = vcmask 48128
    %s127 = scalar_lea.vmem %s1, 320
    %128 = vst.msk [vmem:[%s127] sm:$0x1] %vm126, %v125
    %s129 = scalar_lea.vmem %s1, 703
    %130 = vst.msk [vmem:[%s129] sm:$0x2] %vm126, %v125
    %s131 = scalar_lea.vmem [#allocation0], 16
    %v132 = vld [vmem:[%s131] sm:$0x3]
    %s133 = scalar_lea.vmem [#allocation0], 38
    %v134 = vld [vmem:[%s133] sm:$0xc]
    %vm135 = vcmask 1043458
    %v136 = vsel %vm135, %v134, %v132
    %s137 = scalar_lea.vmem [#allocation0], 60
    %v138 = vld [vmem:[%s137] sm:$0x30]
    %vm139 = vcmask 1045508
    %v140 = vsel %vm139, %v138, %v136
    %s141 = scalar_lea.vmem [#allocation0], 82
    %v142 = vld [vmem:[%s141] sm:$0xc0]
    %vm143 = vcmask 1047558
    %v144 = vsel %vm143, %v142, %v140
    %145 = vrot.lane.b32.xlu0 %v144, 126
    %v146 = vpop.permute.xlu0 %145
    %vm147 = vcmask 48128
    %s148 = scalar_lea.vmem %s1, 43
    %149 = vst.msk [vmem:[%s148] sm:$0x1] %vm147, %v146
    %s150 = scalar_lea.vmem %s1, 426
    %151 = vst.msk [vmem:[%s150] sm:$0x2] %vm147, %v146
    %s152 = scalar_lea.vmem %s1, 105
    %153 = vst.msk [vmem:[%s152] sm:$0x4] %vm147, %v146
    %s154 = scalar_lea.vmem %s1, 488
    %155 = vst.msk [vmem:[%s154] sm:$0x8] %vm147, %v146
    %s156 = scalar_lea.vmem %s1, 167
    %157 = vst.msk [vmem:[%s156] sm:$0x10] %vm147, %v146
    %s158 = scalar_lea.vmem %s1, 550
    %159 = vst.msk [vmem:[%s158] sm:$0x20] %vm147, %v146
    %s160 = scalar_lea.vmem %s1, 229
    %161 = vst.msk [vmem:[%s160] sm:$0x40] %vm147, %v146
    %s162 = scalar_lea.vmem %s1, 612
    %163 = vst.msk [vmem:[%s162] sm:$0x80] %vm147, %v146
    %s164 = scalar_lea.vmem [#allocation0], 112
    %v165 = vld [vmem:[%s164] sm:$0x3]
    %s166 = scalar_lea.vmem [#allocation0], 134
    %v167 = vld [vmem:[%s166] sm:$0xc]
    %vm168 = vcmask 1043458
    %v169 = vsel %vm168, %v167, %v165
    %170 = vrot.lane.b32.xlu0 %v169, 126
    %v171 = vpop.permute.xlu0 %170
    %vm172 = vcmask 48128
    %s173 = scalar_lea.vmem %s1, 299
    %174 = vst.msk [vmem:[%s173] sm:$0x1] %vm172, %v171
    %s175 = scalar_lea.vmem %s1, 682
    %176 = vst.msk [vmem:[%s175] sm:$0x2] %vm172, %v171
    %s177 = scalar_lea.vmem %s1, 361
    %178 = vst.msk [vmem:[%s177] sm:$0x4] %vm172, %v171
    %s179 = scalar_lea.vmem %s1, 744
    %180 = vst.msk [vmem:[%s179] sm:$0x8] %vm172, %v171
    %s181 = scalar_lea.vmem [#allocation0], 8
    %v182 = vld [vmem:[%s181] sm:$0x3]
    %s183 = scalar_lea.vmem [#allocation0], 30
    %v184 = vld [vmem:[%s183] sm:$0xc]
    %vm185 = vcmask 1043458
    %v186 = vsel %vm185, %v184, %v182
    %s187 = scalar_lea.vmem [#allocation0], 52
    %v188 = vld [vmem:[%s187] sm:$0x30]
    %vm189 = vcmask 1045508
    %v190 = vsel %vm189, %v188, %v186
    %s191 = scalar_lea.vmem [#allocation0], 74
    %v192 = vld [vmem:[%s191] sm:$0xc0]
    %vm193 = vcmask 1047558
    %v194 = vsel %vm193, %v192, %v190
    %195 = vrot.lane.b32.xlu0 %v194, 124
    %v196 = vpop.permute.xlu0 %195
    %vm197 = vcmask 48128
    %s198 = scalar_lea.vmem %s1, 22
    %199 = vst.msk [vmem:[%s198] sm:$0x1] %vm197, %v196
    %s200 = scalar_lea.vmem %s1, 405
    %201 = vst.msk [vmem:[%s200] sm:$0x2] %vm197, %v196
    %s202 = scalar_lea.vmem %s1, 84
    %203 = vst.msk [vmem:[%s202] sm:$0x4] %vm197, %v196
    %s204 = scalar_lea.vmem %s1, 467
    %205 = vst.msk [vmem:[%s204] sm:$0x8] %vm197, %v196
    %s206 = scalar_lea.vmem %s1, 146
    %207 = vst.msk [vmem:[%s206] sm:$0x10] %vm197, %v196
    %s208 = scalar_lea.vmem %s1, 529
    %209 = vst.msk [vmem:[%s208] sm:$0x20] %vm197, %v196
    %s210 = scalar_lea.vmem %s1, 208
    %211 = vst.msk [vmem:[%s210] sm:$0x40] %vm197, %v196
    %s212 = scalar_lea.vmem %s1, 591
    %213 = vst.msk [vmem:[%s212] sm:$0x80] %vm197, %v196
    %s214 = scalar_lea.vmem [#allocation0], 104
    %v215 = vld [vmem:[%s214] sm:$0x3]
    %s216 = scalar_lea.vmem [#allocation0], 126
    %v217 = vld [vmem:[%s216] sm:$0xc]
    %vm218 = vcmask 1043458
    %v219 = vsel %vm218, %v217, %v215
    %220 = vrot.lane.b32.xlu0 %v219, 124
    %v221 = vpop.permute.xlu0 %220
    %vm222 = vcmask 48128
    %s223 = scalar_lea.vmem %s1, 278
    %224 = vst.msk [vmem:[%s223] sm:$0x1] %vm222, %v221
    %s225 = scalar_lea.vmem %s1, 661
    %226 = vst.msk [vmem:[%s225] sm:$0x2] %vm222, %v221
    %s227 = scalar_lea.vmem %s1, 340
    %228 = vst.msk [vmem:[%s227] sm:$0x4] %vm222, %v221
    %s229 = scalar_lea.vmem %s1, 723
    %230 = vst.msk [vmem:[%s229] sm:$0x8] %vm222, %v221
    %v231 = vld [vmem:[#allocation0] sm:$0x3]
    %s232 = scalar_lea.vmem [#allocation0], 22
    %v233 = vld [vmem:[%s232] sm:$0xc]
    %vm234 = vcmask 1043458
    %v235 = vsel %vm234, %v233, %v231
    %s236 = scalar_lea.vmem [#allocation0], 44
    %v237 = vld [vmem:[%s236] sm:$0x30]
    %vm238 = vcmask 1045508
    %v239 = vsel %vm238, %v237, %v235
    %s240 = scalar_lea.vmem [#allocation0], 66
    %v241 = vld [vmem:[%s240] sm:$0xc0]
    %vm242 = vcmask 1047558
    %v243 = vsel %vm242, %v241, %v239
    %244 = vrot.lane.b32.xlu0 %v243, 122
    %v245 = vpop.permute.xlu0 %244
    %vm246 = vcmask 48128
    %s247 = scalar_lea.vmem %s1, 1
    %248 = vst.msk [vmem:[%s247] sm:$0x1] %vm246, %v245
    %s249 = scalar_lea.vmem %s1, 384
    %250 = vst.msk [vmem:[%s249] sm:$0x2] %vm246, %v245
    %s251 = scalar_lea.vmem %s1, 63
    %252 = vst.msk [vmem:[%s251] sm:$0x4] %vm246, %v245
    %s253 = scalar_lea.vmem %s1, 446
    %254 = vst.msk [vmem:[%s253] sm:$0x8] %vm246, %v245
    %s255 = scalar_lea.vmem %s1, 125
    %256 = vst.msk [vmem:[%s255] sm:$0x10] %vm246, %v245
    %s257 = scalar_lea.vmem %s1, 508
    %258 = vst.msk [vmem:[%s257] sm:$0x20] %vm246, %v245
    %s259 = scalar_lea.vmem %s1, 187
    %260 = vst.msk [vmem:[%s259] sm:$0x40] %vm246, %v245
    %s261 = scalar_lea.vmem %s1, 570
    %262 = vst.msk [vmem:[%s261] sm:$0x80] %vm246, %v245
    %s263 = scalar_lea.vmem [#allocation0], 96
    %v264 = vld [vmem:[%s263] sm:$0x3]
    %s265 = scalar_lea.vmem [#allocation0], 118
    %v266 = vld [vmem:[%s265] sm:$0xc]
    %vm267 = vcmask 1043458
    %v268 = vsel %vm267, %v266, %v264
    %269 = vrot.lane.b32.xlu0 %v268, 122
    %v270 = vpop.permute.xlu0 %269
    %vm271 = vcmask 48128
    %s272 = scalar_lea.vmem %s1, 257
    %273 = vst.msk [vmem:[%s272] sm:$0x1] %vm271, %v270
    %s274 = scalar_lea.vmem %s1, 640
    %275 = vst.msk [vmem:[%s274] sm:$0x2] %vm271, %v270
    %s276 = scalar_lea.vmem %s1, 319
    %277 = vst.msk [vmem:[%s276] sm:$0x4] %vm271, %v270
    %s278 = scalar_lea.vmem %s1, 702
    %279 = vst.msk [vmem:[%s278] sm:$0x8] %vm271, %v270
    %s280 = scalar_lea.vmem [#allocation0], 16
    %v281 = vld [vmem:[%s280] sm:$0x3]
    %s282 = scalar_lea.vmem [#allocation0], 38
    %v283 = vld [vmem:[%s282] sm:$0xc]
    %vm284 = vcmask 1043458
    %v285 = vsel %vm284, %v283, %v281
    %s286 = scalar_lea.vmem [#allocation0], 60
    %v287 = vld [vmem:[%s286] sm:$0x30]
    %vm288 = vcmask 1045508
    %v289 = vsel %vm288, %v287, %v285
    %s290 = scalar_lea.vmem [#allocation0], 82
    %v291 = vld [vmem:[%s290] sm:$0xc0]
    %vm292 = vcmask 1047558
    %v293 = vsel %vm292, %v291, %v289
    %294 = vrot.lane.b32.xlu0 %v293, 120
    %v295 = vpop.permute.xlu0 %294
    %vm296 = vcmask 48128
    %s297 = scalar_lea.vmem %s1, 44
    %298 = vst.msk [vmem:[%s297] sm:$0x1] %vm296, %v295
    %s299 = scalar_lea.vmem %s1, 427
    %300 = vst.msk [vmem:[%s299] sm:$0x2] %vm296, %v295
    %s301 = scalar_lea.vmem %s1, 106
    %302 = vst.msk [vmem:[%s301] sm:$0x4] %vm296, %v295
    %s303 = scalar_lea.vmem %s1, 489
    %304 = vst.msk [vmem:[%s303] sm:$0x8] %vm296, %v295
    %s305 = scalar_lea.vmem %s1, 168
    %306 = vst.msk [vmem:[%s305] sm:$0x10] %vm296, %v295
    %s307 = scalar_lea.vmem %s1, 551
    %308 = vst.msk [vmem:[%s307] sm:$0x20] %vm296, %v295
    %s309 = scalar_lea.vmem %s1, 230
    %310 = vst.msk [vmem:[%s309] sm:$0x40] %vm296, %v295
    %s311 = scalar_lea.vmem %s1, 613
    %312 = vst.msk [vmem:[%s311] sm:$0x80] %vm296, %v295
    %s313 = scalar_lea.vmem [#allocation0], 112
    %v314 = vld [vmem:[%s313] sm:$0x3]
    %s315 = scalar_lea.vmem [#allocation0], 134
    %v316 = vld [vmem:[%s315] sm:$0xc]
    %vm317 = vcmask 1043458
    %v318 = vsel %vm317, %v316, %v314
    %319 = vrot.lane.b32.xlu0 %v318, 120
    %v320 = vpop.permute.xlu0 %319
    %vm321 = vcmask 48128
    %s322 = scalar_lea.vmem %s1, 300
    %323 = vst.msk [vmem:[%s322] sm:$0x1] %vm321, %v320
    %s324 = scalar_lea.vmem %s1, 683
    %325 = vst.msk [vmem:[%s324] sm:$0x2] %vm321, %v320
    %s326 = scalar_lea.vmem %s1, 362
    %327 = vst.msk [vmem:[%s326] sm:$0x4] %vm321, %v320
    %s328 = scalar_lea.vmem %s1, 745
    %329 = vst.msk [vmem:[%s328] sm:$0x8] %vm321, %v320
    %s330 = scalar_lea.vmem [#allocation0], 8
    %v331 = vld [vmem:[%s330] sm:$0x3]
    %s332 = scalar_lea.vmem [#allocation0], 30
    %v333 = vld [vmem:[%s332] sm:$0xc]
    %vm334 = vcmask 1043458
    %v335 = vsel %vm334, %v333, %v331
    %s336 = scalar_lea.vmem [#allocation0], 52
    %v337 = vld [vmem:[%s336] sm:$0x30]
    %vm338 = vcmask 1045508
    %v339 = vsel %vm338, %v337, %v335
    %s340 = scalar_lea.vmem [#allocation0], 74
    %v341 = vld [vmem:[%s340] sm:$0xc0]
    %vm342 = vcmask 1047558
    %v343 = vsel %vm342, %v341, %v339
    %344 = vrot.lane.b32.xlu0 %v343, 118
    %v345 = vpop.permute.xlu0 %344
    %vm346 = vcmask 48128
    %s347 = scalar_lea.vmem %s1, 23
    %348 = vst.msk [vmem:[%s347] sm:$0x1] %vm346, %v345
    %s349 = scalar_lea.vmem %s1, 406
    %350 = vst.msk [vmem:[%s349] sm:$0x2] %vm346, %v345
    %s351 = scalar_lea.vmem %s1, 85
    %352 = vst.msk [vmem:[%s351] sm:$0x4] %vm346, %v345
    %s353 = scalar_lea.vmem %s1, 468
    %354 = vst.msk [vmem:[%s353] sm:$0x8] %vm346, %v345
    %s355 = scalar_lea.vmem %s1, 147
    %356 = vst.msk [vmem:[%s355] sm:$0x10] %vm346, %v345
    %s357 = scalar_lea.vmem %s1, 530
    %358 = vst.msk [vmem:[%s357] sm:$0x20] %vm346, %v345
    %s359 = scalar_lea.vmem %s1, 209
    %360 = vst.msk [vmem:[%s359] sm:$0x40] %vm346, %v345
    %s361 = scalar_lea.vmem %s1, 592
    %362 = vst.msk [vmem:[%s361] sm:$0x80] %vm346, %v345
    %s363 = scalar_lea.vmem [#allocation0], 104
    %v364 = vld [vmem:[%s363] sm:$0x3]
    %s365 = scalar_lea.vmem [#allocation0], 126
    %v366 = vld [vmem:[%s365] sm:$0xc]
    %vm367 = vcmask 1043458
    %v368 = vsel %vm367, %v366, %v364
    %369 = vrot.lane.b32.xlu0 %v368, 118
    %v370 = vpop.permute.xlu0 %369
    %vm371 = vcmask 48128
    %s372 = scalar_lea.vmem %s1, 279
    %373 = vst.msk [vmem:[%s372] sm:$0x1] %vm371, %v370
    %s374 = scalar_lea.vmem %s1, 662
    %375 = vst.msk [vmem:[%s374] sm:$0x2] %vm371, %v370
    %s376 = scalar_lea.vmem %s1, 341
    %377 = vst.msk [vmem:[%s376] sm:$0x4] %vm371, %v370
    %s378 = scalar_lea.vmem %s1, 724
    %379 = vst.msk [vmem:[%s378] sm:$0x8] %vm371, %v370
    %v380 = vld [vmem:[#allocation0] sm:$0x3]
    %s381 = scalar_lea.vmem [#allocation0], 22
    %v382 = vld [vmem:[%s381] sm:$0xc]
    %vm383 = vcmask 1043458
    %v384 = vsel %vm383, %v382, %v380
    %s385 = scalar_lea.vmem [#allocation0], 44
    %v386 = vld [vmem:[%s385] sm:$0x30]
    %vm387 = vcmask 1045508
    %v388 = vsel %vm387, %v386, %v384
    %s389 = scalar_lea.vmem [#allocation0], 66
    %v390 = vld [vmem:[%s389] sm:$0xc0]
    %vm391 = vcmask 1047558
    %v392 = vsel %vm391, %v390, %v388
    %393 = vrot.lane.b32.xlu0 %v392, 116
    %v394 = vpop.permute.xlu0 %393
    %vm395 = vcmask 48128
    %s396 = scalar_lea.vmem %s1, 2
    %397 = vst.msk [vmem:[%s396] sm:$0x1] %vm395, %v394
    %s398 = scalar_lea.vmem %s1, 385
    %399 = vst.msk [vmem:[%s398] sm:$0x2] %vm395, %v394
    %s400 = scalar_lea.vmem %s1, 64
    %401 = vst.msk [vmem:[%s400] sm:$0x4] %vm395, %v394
    %s402 = scalar_lea.vmem %s1, 447
    %403 = vst.msk [vmem:[%s402] sm:$0x8] %vm395, %v394
    %s404 = scalar_lea.vmem %s1, 126
    %405 = vst.msk [vmem:[%s404] sm:$0x10] %vm395, %v394
    %s406 = scalar_lea.vmem %s1, 509
    %407 = vst.msk [vmem:[%s406] sm:$0x20] %vm395, %v394
    %s408 = scalar_lea.vmem %s1, 188
    %409 = vst.msk [vmem:[%s408] sm:$0x40] %vm395, %v394
    %s410 = scalar_lea.vmem %s1, 571
    %411 = vst.msk [vmem:[%s410] sm:$0x80] %vm395, %v394
    %s412 = scalar_lea.vmem [#allocation0], 96
    %v413 = vld [vmem:[%s412] sm:$0x3]
    %s414 = scalar_lea.vmem [#allocation0], 118
    %v415 = vld [vmem:[%s414] sm:$0xc]
    %vm416 = vcmask 1043458
    %v417 = vsel %vm416, %v415, %v413
    %418 = vrot.lane.b32.xlu0 %v417, 116
    %v419 = vpop.permute.xlu0 %418
    %vm420 = vcmask 48128
    %s421 = scalar_lea.vmem %s1, 258
    %422 = vst.msk [vmem:[%s421] sm:$0x1] %vm420, %v419
    %s423 = scalar_lea.vmem %s1, 641
    %424 = vst.msk [vmem:[%s423] sm:$0x2] %vm420, %v419
    %s425 = scalar_lea.vmem %s1, 320
    %426 = vst.msk [vmem:[%s425] sm:$0x4] %vm420, %v419
    %s427 = scalar_lea.vmem %s1, 703
    %428 = vst.msk [vmem:[%s427] sm:$0x8] %vm420, %v419
    %s429 = scalar_lea.vmem [#allocation0], 16
    %v430 = vld [vmem:[%s429] sm:$0x3]
    %s431 = scalar_lea.vmem [#allocation0], 38
    %v432 = vld [vmem:[%s431] sm:$0xc]
    %vm433 = vcmask 1043458
    %v434 = vsel %vm433, %v432, %v430
    %s435 = scalar_lea.vmem [#allocation0], 60
    %v436 = vld [vmem:[%s435] sm:$0x30]
    %vm437 = vcmask 1045508
    %v438 = vsel %vm437, %v436, %v434
    %s439 = scalar_lea.vmem [#allocation0], 82
    %v440 = vld [vmem:[%s439] sm:$0xc0]
    %vm441 = vcmask 1047558
    %v442 = vsel %vm441, %v440, %v438
    %443 = vrot.lane.b32.xlu0 %v442, 114
    %v444 = vpop.permute.xlu0 %443
    %vm445 = vcmask 48128
    %s446 = scalar_lea.vmem %s1, 45
    %447 = vst.msk [vmem:[%s446] sm:$0x1] %vm445, %v444
    %s448 = scalar_lea.vmem %s1, 428
    %449 = vst.msk [vmem:[%s448] sm:$0x2] %vm445, %v444
    %s450 = scalar_lea.vmem %s1, 107
    %451 = vst.msk [vmem:[%s450] sm:$0x4] %vm445, %v444
    %s452 = scalar_lea.vmem %s1, 490
    %453 = vst.msk [vmem:[%s452] sm:$0x8] %vm445, %v444
    %s454 = scalar_lea.vmem %s1, 169
    %455 = vst.msk [vmem:[%s454] sm:$0x10] %vm445, %v444
    %s456 = scalar_lea.vmem %s1, 552
    %457 = vst.msk [vmem:[%s456] sm:$0x20] %vm445, %v444
    %s458 = scalar_lea.vmem %s1, 231
    %459 = vst.msk [vmem:[%s458] sm:$0x40] %vm445, %v444
    %s460 = scalar_lea.vmem %s1, 614
    %461 = vst.msk [vmem:[%s460] sm:$0x80] %vm445, %v444
    %s462 = scalar_lea.vmem [#allocation0], 112
    %v463 = vld [vmem:[%s462] sm:$0x3]
    %s464 = scalar_lea.vmem [#allocation0], 134
    %v465 = vld [vmem:[%s464] sm:$0xc]
    %vm466 = vcmask 1043458
    %v467 = vsel %vm466, %v465, %v463
    %468 = vrot.lane.b32.xlu0 %v467, 114
    %v469 = vpop.permute.xlu0 %468
    %vm470 = vcmask 48128
    %s471 = scalar_lea.vmem %s1, 301
    %472 = vst.msk [vmem:[%s471] sm:$0x1] %vm470, %v469
    %s473 = scalar_lea.vmem %s1, 684
    %474 = vst.msk [vmem:[%s473] sm:$0x2] %vm470, %v469
    %s475 = scalar_lea.vmem %s1, 363
    %476 = vst.msk [vmem:[%s475] sm:$0x4] %vm470, %v469
    %s477 = scalar_lea.vmem %s1, 746
    %478 = vst.msk [vmem:[%s477] sm:$0x8] %vm470, %v469
    %s479 = scalar_lea.vmem [#allocation0], 8
    %v480 = vld [vmem:[%s479] sm:$0x3]
    %s481 = scalar_lea.vmem [#allocation0], 30
    %v482 = vld [vmem:[%s481] sm:$0xc]
    %vm483 = vcmask 1043458
    %v484 = vsel %vm483, %v482, %v480
    %s485 = scalar_lea.vmem [#allocation0], 52
    %v486 = vld [vmem:[%s485] sm:$0x30]
    %vm487 = vcmask 1045508
    %v488 = vsel %vm487, %v486, %v484
    %s489 = scalar_lea.vmem [#allocation0], 74
    %v490 = vld [vmem:[%s489] sm:$0xc0]
    %vm491 = vcmask 1047558
    %v492 = vsel %vm491, %v490, %v488
    %493 = vrot.lane.b32.xlu0 %v492, 112
    %v494 = vpop.permute.xlu0 %493
    %vm495 = vcmask 48128
    %s496 = scalar_lea.vmem %s1, 24
    %497 = vst.msk [vmem:[%s496] sm:$0x1] %vm495, %v494
    %s498 = scalar_lea.vmem %s1, 407
    %499 = vst.msk [vmem:[%s498] sm:$0x2] %vm495, %v494
    %s500 = scalar_lea.vmem %s1, 86
    %501 = vst.msk [vmem:[%s500] sm:$0x4] %vm495, %v494
    %s502 = scalar_lea.vmem %s1, 469
    %503 = vst.msk [vmem:[%s502] sm:$0x8] %vm495, %v494
    %s504 = scalar_lea.vmem %s1, 148
    %505 = vst.msk [vmem:[%s504] sm:$0x10] %vm495, %v494
    %s506 = scalar_lea.vmem %s1, 531
    %507 = vst.msk [vmem:[%s506] sm:$0x20] %vm495, %v494
    %s508 = scalar_lea.vmem %s1, 210
    %509 = vst.msk [vmem:[%s508] sm:$0x40] %vm495, %v494
    %s510 = scalar_lea.vmem %s1, 593
    %511 = vst.msk [vmem:[%s510] sm:$0x80] %vm495, %v494
    %s512 = scalar_lea.vmem [#allocation0], 104
    %v513 = vld [vmem:[%s512] sm:$0x3]
    %s514 = scalar_lea.vmem [#allocation0], 126
    %v515 = vld [vmem:[%s514] sm:$0xc]
    %vm516 = vcmask 1043458
    %v517 = vsel %vm516, %v515, %v513
    %518 = vrot.lane.b32.xlu0 %v517, 112
    %v519 = vpop.permute.xlu0 %518
    %vm520 = vcmask 48128
    %s521 = scalar_lea.vmem %s1, 280
    %522 = vst.msk [vmem:[%s521] sm:$0x1] %vm520, %v519
    %s523 = scalar_lea.vmem %s1, 663
    %524 = vst.msk [vmem:[%s523] sm:$0x2] %vm520, %v519
    %s525 = scalar_lea.vmem %s1, 342
    %526 = vst.msk [vmem:[%s525] sm:$0x4] %vm520, %v519
    %s527 = scalar_lea.vmem %s1, 725
    %528 = vst.msk [vmem:[%s527] sm:$0x8] %vm520, %v519
    %v529 = vld [vmem:[#allocation0] sm:$0x3]
    %s530 = scalar_lea.vmem [#allocation0], 22
    %v531 = vld [vmem:[%s530] sm:$0xc]
    %vm532 = vcmask 1043458
    %v533 = vsel %vm532, %v531, %v529
    %s534 = scalar_lea.vmem [#allocation0], 44
    %v535 = vld [vmem:[%s534] sm:$0x30]
    %vm536 = vcmask 1045508
    %v537 = vsel %vm536, %v535, %v533
    %s538 = scalar_lea.vmem [#allocation0], 66
    %v539 = vld [vmem:[%s538] sm:$0xc0]
    %vm540 = vcmask 1047558
    %v541 = vsel %vm540, %v539, %v537
    %542 = vrot.lane.b32.xlu0 %v541, 110
    %v543 = vpop.permute.xlu0 %542
    %vm544 = vcmask 48128
    %s545 = scalar_lea.vmem %s1, 3
    %546 = vst.msk [vmem:[%s545] sm:$0x1] %vm544, %v543
    %s547 = scalar_lea.vmem %s1, 386
    %548 = vst.msk [vmem:[%s547] sm:$0x2] %vm544, %v543
    %s549 = scalar_lea.vmem %s1, 65
    %550 = vst.msk [vmem:[%s549] sm:$0x4] %vm544, %v543
    %s551 = scalar_lea.vmem %s1, 448
    %552 = vst.msk [vmem:[%s551] sm:$0x8] %vm544, %v543
    %s553 = scalar_lea.vmem %s1, 127
    %554 = vst.msk [vmem:[%s553] sm:$0x10] %vm544, %v543
    %s555 = scalar_lea.vmem %s1, 510
    %556 = vst.msk [vmem:[%s555] sm:$0x20] %vm544, %v543
    %s557 = scalar_lea.vmem %s1, 189
    %558 = vst.msk [vmem:[%s557] sm:$0x40] %vm544, %v543
    %s559 = scalar_lea.vmem %s1, 572
    %560 = vst.msk [vmem:[%s559] sm:$0x80] %vm544, %v543
    %s561 = scalar_lea.vmem [#allocation0], 96
    %v562 = vld [vmem:[%s561] sm:$0x3]
    %s563 = scalar_lea.vmem [#allocation0], 118
    %v564 = vld [vmem:[%s563] sm:$0xc]
    %vm565 = vcmask 1043458
    %v566 = vsel %vm565, %v564, %v562
    %567 = vrot.lane.b32.xlu0 %v566, 110
    %v568 = vpop.permute.xlu0 %567
    %vm569 = vcmask 48128
    %s570 = scalar_lea.vmem %s1, 259
    %571 = vst.msk [vmem:[%s570] sm:$0x1] %vm569, %v568
    %s572 = scalar_lea.vmem %s1, 642
    %573 = vst.msk [vmem:[%s572] sm:$0x2] %vm569, %v568
    %s574 = scalar_lea.vmem %s1, 321
    %575 = vst.msk [vmem:[%s574] sm:$0x4] %vm569, %v568
    %s576 = scalar_lea.vmem %s1, 704
    %577 = vst.msk [vmem:[%s576] sm:$0x8] %vm569, %v568
    %s578 = scalar_lea.vmem [#allocation0], 16
    %v579 = vld [vmem:[%s578] sm:$0x3]
    %s580 = scalar_lea.vmem [#allocation0], 38
    %v581 = vld [vmem:[%s580] sm:$0xc]
    %vm582 = vcmask 1043458
    %v583 = vsel %vm582, %v581, %v579
    %s584 = scalar_lea.vmem [#allocation0], 60
    %v585 = vld [vmem:[%s584] sm:$0x30]
    %vm586 = vcmask 1045508
    %v587 = vsel %vm586, %v585, %v583
    %s588 = scalar_lea.vmem [#allocation0], 82
    %v589 = vld [vmem:[%s588] sm:$0xc0]
    %vm590 = vcmask 1047558
    %v591 = vsel %vm590, %v589, %v587
    %592 = vrot.lane.b32.xlu0 %v591, 108
    %v593 = vpop.permute.xlu0 %592
    %vm594 = vcmask 48128
    %s595 = scalar_lea.vmem %s1, 46
    %596 = vst.msk [vmem:[%s595] sm:$0x1] %vm594, %v593
    %s597 = scalar_lea.vmem %s1, 429
    %598 = vst.msk [vmem:[%s597] sm:$0x2] %vm594, %v593
    %s599 = scalar_lea.vmem %s1, 108
    %600 = vst.msk [vmem:[%s599] sm:$0x4] %vm594, %v593
    %s601 = scalar_lea.vmem %s1, 491
    %602 = vst.msk [vmem:[%s601] sm:$0x8] %vm594, %v593
    %s603 = scalar_lea.vmem %s1, 170
    %604 = vst.msk [vmem:[%s603] sm:$0x10] %vm594, %v593
    %s605 = scalar_lea.vmem %s1, 553
    %606 = vst.msk [vmem:[%s605] sm:$0x20] %vm594, %v593
    %s607 = scalar_lea.vmem %s1, 232
    %608 = vst.msk [vmem:[%s607] sm:$0x40] %vm594, %v593
    %s609 = scalar_lea.vmem %s1, 615
    %610 = vst.msk [vmem:[%s609] sm:$0x80] %vm594, %v593
    %s611 = scalar_lea.vmem [#allocation0], 112
    %v612 = vld [vmem:[%s611] sm:$0x3]
    %s613 = scalar_lea.vmem [#allocation0], 134
    %v614 = vld [vmem:[%s613] sm:$0xc]
    %vm615 = vcmask 1043458
    %v616 = vsel %vm615, %v614, %v612
    %617 = vrot.lane.b32.xlu0 %v616, 108
    %v618 = vpop.permute.xlu0 %617
    %vm619 = vcmask 48128
    %s620 = scalar_lea.vmem %s1, 302
    %621 = vst.msk [vmem:[%s620] sm:$0x1] %vm619, %v618
    %s622 = scalar_lea.vmem %s1, 685
    %623 = vst.msk [vmem:[%s622] sm:$0x2] %vm619, %v618
    %s624 = scalar_lea.vmem %s1, 364
    %625 = vst.msk [vmem:[%s624] sm:$0x4] %vm619, %v618
    %s626 = scalar_lea.vmem %s1, 747
    %627 = vst.msk [vmem:[%s626] sm:$0x8] %vm619, %v618
    %s628 = scalar_lea.vmem [#allocation0], 8
    %v629 = vld [vmem:[%s628] sm:$0x3]
    %s630 = scalar_lea.vmem [#allocation0], 30
    %v631 = vld [vmem:[%s630] sm:$0xc]
    %vm632 = vcmask 1043458
    %v633 = vsel %vm632, %v631, %v629
    %s634 = scalar_lea.vmem [#allocation0], 52
    %v635 = vld [vmem:[%s634] sm:$0x30]
    %vm636 = vcmask 1045508
    %v637 = vsel %vm636, %v635, %v633
    %s638 = scalar_lea.vmem [#allocation0], 74
    %v639 = vld [vmem:[%s638] sm:$0xc0]
    %vm640 = vcmask 1047558
    %v641 = vsel %vm640, %v639, %v637
    %642 = vrot.lane.b32.xlu0 %v641, 106
    %v643 = vpop.permute.xlu0 %642
    %vm644 = vcmask 48128
    %s645 = scalar_lea.vmem %s1, 25
    %646 = vst.msk [vmem:[%s645] sm:$0x1] %vm644, %v643
    %s647 = scalar_lea.vmem %s1, 408
    %648 = vst.msk [vmem:[%s647] sm:$0x2] %vm644, %v643
    %s649 = scalar_lea.vmem %s1, 87
    %650 = vst.msk [vmem:[%s649] sm:$0x4] %vm644, %v643
    %s651 = scalar_lea.vmem %s1, 470
    %652 = vst.msk [vmem:[%s651] sm:$0x8] %vm644, %v643
    %s653 = scalar_lea.vmem %s1, 149
    %654 = vst.msk [vmem:[%s653] sm:$0x10] %vm644, %v643
    %s655 = scalar_lea.vmem %s1, 532
    %656 = vst.msk [vmem:[%s655] sm:$0x20] %vm644, %v643
    %s657 = scalar_lea.vmem %s1, 211
    %658 = vst.msk [vmem:[%s657] sm:$0x40] %vm644, %v643
    %s659 = scalar_lea.vmem %s1, 594
    %660 = vst.msk [vmem:[%s659] sm:$0x80] %vm644, %v643
    %s661 = scalar_lea.vmem [#allocation0], 104
    %v662 = vld [vmem:[%s661] sm:$0x3]
    %s663 = scalar_lea.vmem [#allocation0], 126
    %v664 = vld [vmem:[%s663] sm:$0xc]
    %vm665 = vcmask 1043458
    %v666 = vsel %vm665, %v664, %v662
    %667 = vrot.lane.b32.xlu0 %v666, 106
    %v668 = vpop.permute.xlu0 %667
    %vm669 = vcmask 48128
    %s670 = scalar_lea.vmem %s1, 281
    %671 = vst.msk [vmem:[%s670] sm:$0x1] %vm669, %v668
    %s672 = scalar_lea.vmem %s1, 664
    %673 = vst.msk [vmem:[%s672] sm:$0x2] %vm669, %v668
    %s674 = scalar_lea.vmem %s1, 343
    %675 = vst.msk [vmem:[%s674] sm:$0x4] %vm669, %v668
    %s676 = scalar_lea.vmem %s1, 726
    %677 = vst.msk [vmem:[%s676] sm:$0x8] %vm669, %v668
    %v678 = vld [vmem:[#allocation0] sm:$0x3]
    %s679 = scalar_lea.vmem [#allocation0], 22
    %v680 = vld [vmem:[%s679] sm:$0xc]
    %vm681 = vcmask 1043458
    %v682 = vsel %vm681, %v680, %v678
    %s683 = scalar_lea.vmem [#allocation0], 44
    %v684 = vld [vmem:[%s683] sm:$0x30]
    %vm685 = vcmask 1045508
    %v686 = vsel %vm685, %v684, %v682
    %s687 = scalar_lea.vmem [#allocation0], 66
    %v688 = vld [vmem:[%s687] sm:$0xc0]
    %vm689 = vcmask 1047558
    %v690 = vsel %vm689, %v688, %v686
    %691 = vrot.lane.b32.xlu0 %v690, 104
    %v692 = vpop.permute.xlu0 %691
    %vm693 = vcmask 48128
    %s694 = scalar_lea.vmem %s1, 4
    %695 = vst.msk [vmem:[%s694] sm:$0x1] %vm693, %v692
    %s696 = scalar_lea.vmem %s1, 387
    %697 = vst.msk [vmem:[%s696] sm:$0x2] %vm693, %v692
    %s698 = scalar_lea.vmem %s1, 66
    %699 = vst.msk [vmem:[%s698] sm:$0x4] %vm693, %v692
    %s700 = scalar_lea.vmem %s1, 449
    %701 = vst.msk [vmem:[%s700] sm:$0x8] %vm693, %v692
    %s702 = scalar_lea.vmem %s1, 128
    %703 = vst.msk [vmem:[%s702] sm:$0x10] %vm693, %v692
    %s704 = scalar_lea.vmem %s1, 511
    %705 = vst.msk [vmem:[%s704] sm:$0x20] %vm693, %v692
    %s706 = scalar_lea.vmem %s1, 190
    %707 = vst.msk [vmem:[%s706] sm:$0x40] %vm693, %v692
    %s708 = scalar_lea.vmem %s1, 573
    %709 = vst.msk [vmem:[%s708] sm:$0x80] %vm693, %v692
    %s710 = scalar_lea.vmem [#allocation0], 96
    %v711 = vld [vmem:[%s710] sm:$0x3]
    %s712 = scalar_lea.vmem [#allocation0], 118
    %v713 = vld [vmem:[%s712] sm:$0xc]
    %vm714 = vcmask 1043458
    %v715 = vsel %vm714, %v713, %v711
    %716 = vrot.lane.b32.xlu0 %v715, 104
    %v717 = vpop.permute.xlu0 %716
    %vm718 = vcmask 48128
    %s719 = scalar_lea.vmem %s1, 260
    %720 = vst.msk [vmem:[%s719] sm:$0x1] %vm718, %v717
    %s721 = scalar_lea.vmem %s1, 643
    %722 = vst.msk [vmem:[%s721] sm:$0x2] %vm718, %v717
    %s723 = scalar_lea.vmem %s1, 322
    %724 = vst.msk [vmem:[%s723] sm:$0x4] %vm718, %v717
    %s725 = scalar_lea.vmem %s1, 705
    %726 = vst.msk [vmem:[%s725] sm:$0x8] %vm718, %v717
    %s727 = scalar_lea.vmem [#allocation0], 16
    %v728 = vld [vmem:[%s727] sm:$0x3]
    %s729 = scalar_lea.vmem [#allocation0], 38
    %v730 = vld [vmem:[%s729] sm:$0xc]
    %vm731 = vcmask 1043458
    %v732 = vsel %vm731, %v730, %v728
    %s733 = scalar_lea.vmem [#allocation0], 60
    %v734 = vld [vmem:[%s733] sm:$0x30]
    %vm735 = vcmask 1045508
    %v736 = vsel %vm735, %v734, %v732
    %s737 = scalar_lea.vmem [#allocation0], 82
    %v738 = vld [vmem:[%s737] sm:$0xc0]
    %vm739 = vcmask 1047558
    %v740 = vsel %vm739, %v738, %v736
    %741 = vrot.lane.b32.xlu0 %v740, 102
    %v742 = vpop.permute.xlu0 %741
    %vm743 = vcmask 48128
    %s744 = scalar_lea.vmem %s1, 47
    %745 = vst.msk [vmem:[%s744] sm:$0x1] %vm743, %v742
    %s746 = scalar_lea.vmem %s1, 430
    %747 = vst.msk [vmem:[%s746] sm:$0x2] %vm743, %v742
    %s748 = scalar_lea.vmem %s1, 109
    %749 = vst.msk [vmem:[%s748] sm:$0x4] %vm743, %v742
    %s750 = scalar_lea.vmem %s1, 492
    %751 = vst.msk [vmem:[%s750] sm:$0x8] %vm743, %v742
    %s752 = scalar_lea.vmem %s1, 171
    %753 = vst.msk [vmem:[%s752] sm:$0x10] %vm743, %v742
    %s754 = scalar_lea.vmem %s1, 554
    %755 = vst.msk [vmem:[%s754] sm:$0x20] %vm743, %v742
    %s756 = scalar_lea.vmem %s1, 233
    %757 = vst.msk [vmem:[%s756] sm:$0x40] %vm743, %v742
    %s758 = scalar_lea.vmem %s1, 616
    %759 = vst.msk [vmem:[%s758] sm:$0x80] %vm743, %v742
    %s760 = scalar_lea.vmem [#allocation0], 112
    %v761 = vld [vmem:[%s760] sm:$0x3]
    %s762 = scalar_lea.vmem [#allocation0], 134
    %v763 = vld [vmem:[%s762] sm:$0xc]
    %vm764 = vcmask 1043458
    %v765 = vsel %vm764, %v763, %v761
    %766 = vrot.lane.b32.xlu0 %v765, 102
    %v767 = vpop.permute.xlu0 %766
    %vm768 = vcmask 48128
    %s769 = scalar_lea.vmem %s1, 303
    %770 = vst.msk [vmem:[%s769] sm:$0x1] %vm768, %v767
    %s771 = scalar_lea.vmem %s1, 686
    %772 = vst.msk [vmem:[%s771] sm:$0x2] %vm768, %v767
    %s773 = scalar_lea.vmem %s1, 365
    %774 = vst.msk [vmem:[%s773] sm:$0x4] %vm768, %v767
    %s775 = scalar_lea.vmem %s1, 748
    %776 = vst.msk [vmem:[%s775] sm:$0x8] %vm768, %v767
    %s777 = scalar_lea.vmem [#allocation0], 8
    %v778 = vld [vmem:[%s777] sm:$0x3]
    %s779 = scalar_lea.vmem [#allocation0], 30
    %v780 = vld [vmem:[%s779] sm:$0xc]
    %vm781 = vcmask 1043458
    %v782 = vsel %vm781, %v780, %v778
    %s783 = scalar_lea.vmem [#allocation0], 52
    %v784 = vld [vmem:[%s783] sm:$0x30]
    %vm785 = vcmask 1045508
    %v786 = vsel %vm785, %v784, %v782
    %s787 = scalar_lea.vmem [#allocation0], 74
    %v788 = vld [vmem:[%s787] sm:$0xc0]
    %vm789 = vcmask 1047558
    %v790 = vsel %vm789, %v788, %v786
    %791 = vrot.lane.b32.xlu0 %v790, 100
    %v792 = vpop.permute.xlu0 %791
    %vm793 = vcmask 48128
    %s794 = scalar_lea.vmem %s1, 26
    %795 = vst.msk [vmem:[%s794] sm:$0x1] %vm793, %v792
    %s796 = scalar_lea.vmem %s1, 409
    %797 = vst.msk [vmem:[%s796] sm:$0x2] %vm793, %v792
    %s798 = scalar_lea.vmem %s1, 88
    %799 = vst.msk [vmem:[%s798] sm:$0x4] %vm793, %v792
    %s800 = scalar_lea.vmem %s1, 471
    %801 = vst.msk [vmem:[%s800] sm:$0x8] %vm793, %v792
    %s802 = scalar_lea.vmem %s1, 150
    %803 = vst.msk [vmem:[%s802] sm:$0x10] %vm793, %v792
    %s804 = scalar_lea.vmem %s1, 533
    %805 = vst.msk [vmem:[%s804] sm:$0x20] %vm793, %v792
    %s806 = scalar_lea.vmem %s1, 212
    %807 = vst.msk [vmem:[%s806] sm:$0x40] %vm793, %v792
    %s808 = scalar_lea.vmem %s1, 595
    %809 = vst.msk [vmem:[%s808] sm:$0x80] %vm793, %v792
    %s810 = scalar_lea.vmem [#allocation0], 104
    %v811 = vld [vmem:[%s810] sm:$0x3]
    %s812 = scalar_lea.vmem [#allocation0], 126
    %v813 = vld [vmem:[%s812] sm:$0xc]
    %vm814 = vcmask 1043458
    %v815 = vsel %vm814, %v813, %v811
    %816 = vrot.lane.b32.xlu0 %v815, 100
    %v817 = vpop.permute.xlu0 %816
    %vm818 = vcmask 48128
    %s819 = scalar_lea.vmem %s1, 282
    %820 = vst.msk [vmem:[%s819] sm:$0x1] %vm818, %v817
    %s821 = scalar_lea.vmem %s1, 665
    %822 = vst.msk [vmem:[%s821] sm:$0x2] %vm818, %v817
    %s823 = scalar_lea.vmem %s1, 344
    %824 = vst.msk [vmem:[%s823] sm:$0x4] %vm818, %v817
    %s825 = scalar_lea.vmem %s1, 727
    %826 = vst.msk [vmem:[%s825] sm:$0x8] %vm818, %v817
    %v827 = vld [vmem:[#allocation0] sm:$0x3]
    %s828 = scalar_lea.vmem [#allocation0], 22
    %v829 = vld [vmem:[%s828] sm:$0xc]
    %vm830 = vcmask 1043458
    %v831 = vsel %vm830, %v829, %v827
    %s832 = scalar_lea.vmem [#allocation0], 44
    %v833 = vld [vmem:[%s832] sm:$0x30]
    %vm834 = vcmask 1045508
    %v835 = vsel %vm834, %v833, %v831
    %s836 = scalar_lea.vmem [#allocation0], 66
    %v837 = vld [vmem:[%s836] sm:$0xc0]
    %vm838 = vcmask 1047558
    %v839 = vsel %vm838, %v837, %v835
    %840 = vrot.lane.b32.xlu0 %v839, 98
    %v841 = vpop.permute.xlu0 %840
    %vm842 = vcmask 48128
    %s843 = scalar_lea.vmem %s1, 5
    %844 = vst.msk [vmem:[%s843] sm:$0x1] %vm842, %v841
    %s845 = scalar_lea.vmem %s1, 388
    %846 = vst.msk [vmem:[%s845] sm:$0x2] %vm842, %v841
    %s847 = scalar_lea.vmem %s1, 67
    %848 = vst.msk [vmem:[%s847] sm:$0x4] %vm842, %v841
    %s849 = scalar_lea.vmem %s1, 450
    %850 = vst.msk [vmem:[%s849] sm:$0x8] %vm842, %v841
    %s851 = scalar_lea.vmem %s1, 129
    %852 = vst.msk [vmem:[%s851] sm:$0x10] %vm842, %v841
    %s853 = scalar_lea.vmem %s1, 512
    %854 = vst.msk [vmem:[%s853] sm:$0x20] %vm842, %v841
    %s855 = scalar_lea.vmem %s1, 191
    %856 = vst.msk [vmem:[%s855] sm:$0x40] %vm842, %v841
    %s857 = scalar_lea.vmem %s1, 574
    %858 = vst.msk [vmem:[%s857] sm:$0x80] %vm842, %v841
    %s859 = scalar_lea.vmem [#allocation0], 96
    %v860 = vld [vmem:[%s859] sm:$0x3]
    %s861 = scalar_lea.vmem [#allocation0], 118
    %v862 = vld [vmem:[%s861] sm:$0xc]
    %vm863 = vcmask 1043458
    %v864 = vsel %vm863, %v862, %v860
    %865 = vrot.lane.b32.xlu0 %v864, 98
    %v866 = vpop.permute.xlu0 %865
    %vm867 = vcmask 48128
    %s868 = scalar_lea.vmem %s1, 261
    %869 = vst.msk [vmem:[%s868] sm:$0x1] %vm867, %v866
    %s870 = scalar_lea.vmem %s1, 644
    %871 = vst.msk [vmem:[%s870] sm:$0x2] %vm867, %v866
    %s872 = scalar_lea.vmem %s1, 323
    %873 = vst.msk [vmem:[%s872] sm:$0x4] %vm867, %v866
    %s874 = scalar_lea.vmem %s1, 706
    %875 = vst.msk [vmem:[%s874] sm:$0x8] %vm867, %v866
    %s876 = scalar_lea.vmem [#allocation0], 16
    %v877 = vld [vmem:[%s876] sm:$0x3]
    %s878 = scalar_lea.vmem [#allocation0], 38
    %v879 = vld [vmem:[%s878] sm:$0xc]
    %vm880 = vcmask 1043458
    %v881 = vsel %vm880, %v879, %v877
    %s882 = scalar_lea.vmem [#allocation0], 60
    %v883 = vld [vmem:[%s882] sm:$0x30]
    %vm884 = vcmask 1045508
    %v885 = vsel %vm884, %v883, %v881
    %s886 = scalar_lea.vmem [#allocation0], 82
    %v887 = vld [vmem:[%s886] sm:$0xc0]
    %vm888 = vcmask 1047558
    %v889 = vsel %vm888, %v887, %v885
    %890 = vrot.lane.b32.xlu0 %v889, 96
    %v891 = vpop.permute.xlu0 %890
    %vm892 = vcmask 48128
    %s893 = scalar_lea.vmem %s1, 48
    %894 = vst.msk [vmem:[%s893] sm:$0x1] %vm892, %v891
    %s895 = scalar_lea.vmem %s1, 431
    %896 = vst.msk [vmem:[%s895] sm:$0x2] %vm892, %v891
    %s897 = scalar_lea.vmem %s1, 110
    %898 = vst.msk [vmem:[%s897] sm:$0x4] %vm892, %v891
    %s899 = scalar_lea.vmem %s1, 493
    %900 = vst.msk [vmem:[%s899] sm:$0x8] %vm892, %v891
    %s901 = scalar_lea.vmem %s1, 172
    %902 = vst.msk [vmem:[%s901] sm:$0x10] %vm892, %v891
    %s903 = scalar_lea.vmem %s1, 555
    %904 = vst.msk [vmem:[%s903] sm:$0x20] %vm892, %v891
    %s905 = scalar_lea.vmem %s1, 234
    %906 = vst.msk [vmem:[%s905] sm:$0x40] %vm892, %v891
    %s907 = scalar_lea.vmem %s1, 617
    %908 = vst.msk [vmem:[%s907] sm:$0x80] %vm892, %v891
    %s909 = scalar_lea.vmem [#allocation0], 112
    %v910 = vld [vmem:[%s909] sm:$0x3]
    %s911 = scalar_lea.vmem [#allocation0], 134
    %v912 = vld [vmem:[%s911] sm:$0xc]
    %vm913 = vcmask 1043458
    %v914 = vsel %vm913, %v912, %v910
    %915 = vrot.lane.b32.xlu0 %v914, 96
    %v916 = vpop.permute.xlu0 %915
    %vm917 = vcmask 48128
    %s918 = scalar_lea.vmem %s1, 304
    %919 = vst.msk [vmem:[%s918] sm:$0x1] %vm917, %v916
    %s920 = scalar_lea.vmem %s1, 687
    %921 = vst.msk [vmem:[%s920] sm:$0x2] %vm917, %v916
    %s922 = scalar_lea.vmem %s1, 366
    %923 = vst.msk [vmem:[%s922] sm:$0x4] %vm917, %v916
    %s924 = scalar_lea.vmem %s1, 749
    %925 = vst.msk [vmem:[%s924] sm:$0x8] %vm917, %v916
    %s926 = scalar_lea.vmem [#allocation0], 8
    %v927 = vld [vmem:[%s926] sm:$0x3]
    %s928 = scalar_lea.vmem [#allocation0], 30
    %v929 = vld [vmem:[%s928] sm:$0xc]
    %vm930 = vcmask 1043458
    %v931 = vsel %vm930, %v929, %v927
    %s932 = scalar_lea.vmem [#allocation0], 52
    %v933 = vld [vmem:[%s932] sm:$0x30]
    %vm934 = vcmask 1045508
    %v935 = vsel %vm934, %v933, %v931
    %s936 = scalar_lea.vmem [#allocation0], 74
    %v937 = vld [vmem:[%s936] sm:$0xc0]
    %vm938 = vcmask 1047558
    %v939 = vsel %vm938, %v937, %v935
    %940 = vrot.lane.b32.xlu0 %v939, 94
    %v941 = vpop.permute.xlu0 %940
    %vm942 = vcmask 48128
    %s943 = scalar_lea.vmem %s1, 27
    %944 = vst.msk [vmem:[%s943] sm:$0x1] %vm942, %v941
    %s945 = scalar_lea.vmem %s1, 410
    %946 = vst.msk [vmem:[%s945] sm:$0x2] %vm942, %v941
    %s947 = scalar_lea.vmem %s1, 89
    %948 = vst.msk [vmem:[%s947] sm:$0x4] %vm942, %v941
    %s949 = scalar_lea.vmem %s1, 472
    %950 = vst.msk [vmem:[%s949] sm:$0x8] %vm942, %v941
    %s951 = scalar_lea.vmem %s1, 151
    %952 = vst.msk [vmem:[%s951] sm:$0x10] %vm942, %v941
    %s953 = scalar_lea.vmem %s1, 534
    %954 = vst.msk [vmem:[%s953] sm:$0x20] %vm942, %v941
    %s955 = scalar_lea.vmem %s1, 213
    %956 = vst.msk [vmem:[%s955] sm:$0x40] %vm942, %v941
    %s957 = scalar_lea.vmem %s1, 596
    %958 = vst.msk [vmem:[%s957] sm:$0x80] %vm942, %v941
    %s959 = scalar_lea.vmem [#allocation0], 104
    %v960 = vld [vmem:[%s959] sm:$0x3]
    %s961 = scalar_lea.vmem [#allocation0], 126
    %v962 = vld [vmem:[%s961] sm:$0xc]
    %vm963 = vcmask 1043458
    %v964 = vsel %vm963, %v962, %v960
    %965 = vrot.lane.b32.xlu0 %v964, 94
    %v966 = vpop.permute.xlu0 %965
    %vm967 = vcmask 48128
    %s968 = scalar_lea.vmem %s1, 283
    %969 = vst.msk [vmem:[%s968] sm:$0x1] %vm967, %v966
    %s970 = scalar_lea.vmem %s1, 666
    %971 = vst.msk [vmem:[%s970] sm:$0x2] %vm967, %v966
    %s972 = scalar_lea.vmem %s1, 345
    %973 = vst.msk [vmem:[%s972] sm:$0x4] %vm967, %v966
    %s974 = scalar_lea.vmem %s1, 728
    %975 = vst.msk [vmem:[%s974] sm:$0x8] %vm967, %v966
    %v976 = vld [vmem:[#allocation0] sm:$0x3]
    %s977 = scalar_lea.vmem [#allocation0], 22
    %v978 = vld [vmem:[%s977] sm:$0xc]
    %vm979 = vcmask 1043458
    %v980 = vsel %vm979, %v978, %v976
    %s981 = scalar_lea.vmem [#allocation0], 44
    %v982 = vld [vmem:[%s981] sm:$0x30]
    %vm983 = vcmask 1045508
    %v984 = vsel %vm983, %v982, %v980
    %s985 = scalar_lea.vmem [#allocation0], 66
    %v986 = vld [vmem:[%s985] sm:$0xc0]
    %vm987 = vcmask 1047558
    %v988 = vsel %vm987, %v986, %v984
    %989 = vrot.lane.b32.xlu0 %v988, 92
    %v990 = vpop.permute.xlu0 %989
    %vm991 = vcmask 48128
    %s992 = scalar_lea.vmem %s1, 6
    %993 = vst.msk [vmem:[%s992] sm:$0x1] %vm991, %v990
    %s994 = scalar_lea.vmem %s1, 389
    %995 = vst.msk [vmem:[%s994] sm:$0x2] %vm991, %v990
    %s996 = scalar_lea.vmem %s1, 68
    %997 = vst.msk [vmem:[%s996] sm:$0x4] %vm991, %v990
    %s998 = scalar_lea.vmem %s1, 451
    %999 = vst.msk [vmem:[%s998] sm:$0x8] %vm991, %v990
    %s1000 = scalar_lea.vmem %s1, 130
    %1001 = vst.msk [vmem:[%s1000] sm:$0x10] %vm991, %v990
    %s1002 = scalar_lea.vmem %s1, 513
    %1003 = vst.msk [vmem:[%s1002] sm:$0x20] %vm991, %v990
    %s1004 = scalar_lea.vmem %s1, 192
    %1005 = vst.msk [vmem:[%s1004] sm:$0x40] %vm991, %v990
    %s1006 = scalar_lea.vmem %s1, 575
    %1007 = vst.msk [vmem:[%s1006] sm:$0x80] %vm991, %v990
    %s1008 = scalar_lea.vmem [#allocation0], 96
    %v1009 = vld [vmem:[%s1008] sm:$0x3]
    %s1010 = scalar_lea.vmem [#allocation0], 118
    %v1011 = vld [vmem:[%s1010] sm:$0xc]
    %vm1012 = vcmask 1043458
    %v1013 = vsel %vm1012, %v1011, %v1009
    %1014 = vrot.lane.b32.xlu0 %v1013, 92
    %v1015 = vpop.permute.xlu0 %1014
    %vm1016 = vcmask 48128
    %s1017 = scalar_lea.vmem %s1, 262
    %1018 = vst.msk [vmem:[%s1017] sm:$0x1] %vm1016, %v1015
    %s1019 = scalar_lea.vmem %s1, 645
    %1020 = vst.msk [vmem:[%s1019] sm:$0x2] %vm1016, %v1015
    %s1021 = scalar_lea.vmem %s1, 324
    %1022 = vst.msk [vmem:[%s1021] sm:$0x4] %vm1016, %v1015
    %s1023 = scalar_lea.vmem %s1, 707
    %1024 = vst.msk [vmem:[%s1023] sm:$0x8] %vm1016, %v1015
    %s1025 = scalar_lea.vmem [#allocation0], 16
    %v1026 = vld [vmem:[%s1025] sm:$0x3]
    %s1027 = scalar_lea.vmem [#allocation0], 38
    %v1028 = vld [vmem:[%s1027] sm:$0xc]
    %vm1029 = vcmask 1043458
    %v1030 = vsel %vm1029, %v1028, %v1026
    %s1031 = scalar_lea.vmem [#allocation0], 60
    %v1032 = vld [vmem:[%s1031] sm:$0x30]
    %vm1033 = vcmask 1045508
    %v1034 = vsel %vm1033, %v1032, %v1030
    %s1035 = scalar_lea.vmem [#allocation0], 82
    %v1036 = vld [vmem:[%s1035] sm:$0xc0]
    %vm1037 = vcmask 1047558
    %v1038 = vsel %vm1037, %v1036, %v1034
    %1039 = vrot.lane.b32.xlu0 %v1038, 90
    %v1040 = vpop.permute.xlu0 %1039
    %vm1041 = vcmask 48128
    %s1042 = scalar_lea.vmem %s1, 49
    %1043 = vst.msk [vmem:[%s1042] sm:$0x1] %vm1041, %v1040
    %s1044 = scalar_lea.vmem %s1, 432
    %1045 = vst.msk [vmem:[%s1044] sm:$0x2] %vm1041, %v1040
    %s1046 = scalar_lea.vmem %s1, 111
    %1047 = vst.msk [vmem:[%s1046] sm:$0x4] %vm1041, %v1040
    %s1048 = scalar_lea.vmem %s1, 494
    %1049 = vst.msk [vmem:[%s1048] sm:$0x8] %vm1041, %v1040
    %s1050 = scalar_lea.vmem %s1, 173
    %1051 = vst.msk [vmem:[%s1050] sm:$0x10] %vm1041, %v1040
    %s1052 = scalar_lea.vmem %s1, 556
    %1053 = vst.msk [vmem:[%s1052] sm:$0x20] %vm1041, %v1040
    %s1054 = scalar_lea.vmem %s1, 235
    %1055 = vst.msk [vmem:[%s1054] sm:$0x40] %vm1041, %v1040
    %s1056 = scalar_lea.vmem %s1, 618
    %1057 = vst.msk [vmem:[%s1056] sm:$0x80] %vm1041, %v1040
    %s1058 = scalar_lea.vmem [#allocation0], 112
    %v1059 = vld [vmem:[%s1058] sm:$0x3]
    %s1060 = scalar_lea.vmem [#allocation0], 134
    %v1061 = vld [vmem:[%s1060] sm:$0xc]
    %vm1062 = vcmask 1043458
    %v1063 = vsel %vm1062, %v1061, %v1059
    %1064 = vrot.lane.b32.xlu0 %v1063, 90
    %v1065 = vpop.permute.xlu0 %1064
    %vm1066 = vcmask 48128
    %s1067 = scalar_lea.vmem %s1, 305
    %1068 = vst.msk [vmem:[%s1067] sm:$0x1] %vm1066, %v1065
    %s1069 = scalar_lea.vmem %s1, 688
    %1070 = vst.msk [vmem:[%s1069] sm:$0x2] %vm1066, %v1065
    %s1071 = scalar_lea.vmem %s1, 367
    %1072 = vst.msk [vmem:[%s1071] sm:$0x4] %vm1066, %v1065
    %s1073 = scalar_lea.vmem %s1, 750
    %1074 = vst.msk [vmem:[%s1073] sm:$0x8] %vm1066, %v1065
    %s1075 = scalar_lea.vmem [#allocation0], 8
    %v1076 = vld [vmem:[%s1075] sm:$0x3]
    %s1077 = scalar_lea.vmem [#allocation0], 30
    %v1078 = vld [vmem:[%s1077] sm:$0xc]
    %vm1079 = vcmask 1043458
    %v1080 = vsel %vm1079, %v1078, %v1076
    %s1081 = scalar_lea.vmem [#allocation0], 52
    %v1082 = vld [vmem:[%s1081] sm:$0x30]
    %vm1083 = vcmask 1045508
    %v1084 = vsel %vm1083, %v1082, %v1080
    %s1085 = scalar_lea.vmem [#allocation0], 74
    %v1086 = vld [vmem:[%s1085] sm:$0xc0]
    %vm1087 = vcmask 1047558
    %v1088 = vsel %vm1087, %v1086, %v1084
    %1089 = vrot.lane.b32.xlu0 %v1088, 88
    %v1090 = vpop.permute.xlu0 %1089
    %vm1091 = vcmask 48128
    %s1092 = scalar_lea.vmem %s1, 28
    %1093 = vst.msk [vmem:[%s1092] sm:$0x1] %vm1091, %v1090
    %s1094 = scalar_lea.vmem %s1, 411
    %1095 = vst.msk [vmem:[%s1094] sm:$0x2] %vm1091, %v1090
    %s1096 = scalar_lea.vmem %s1, 90
    %1097 = vst.msk [vmem:[%s1096] sm:$0x4] %vm1091, %v1090
    %s1098 = scalar_lea.vmem %s1, 473
    %1099 = vst.msk [vmem:[%s1098] sm:$0x8] %vm1091, %v1090
    %s1100 = scalar_lea.vmem %s1, 152
    %1101 = vst.msk [vmem:[%s1100] sm:$0x10] %vm1091, %v1090
    %s1102 = scalar_lea.vmem %s1, 535
    %1103 = vst.msk [vmem:[%s1102] sm:$0x20] %vm1091, %v1090
    %s1104 = scalar_lea.vmem %s1, 214
    %1105 = vst.msk [vmem:[%s1104] sm:$0x40] %vm1091, %v1090
    %s1106 = scalar_lea.vmem %s1, 597
    %1107 = vst.msk [vmem:[%s1106] sm:$0x80] %vm1091, %v1090
    %s1108 = scalar_lea.vmem [#allocation0], 104
    %v1109 = vld [vmem:[%s1108] sm:$0x3]
    %s1110 = scalar_lea.vmem [#allocation0], 126
    %v1111 = vld [vmem:[%s1110] sm:$0xc]
    %vm1112 = vcmask 1043458
    %v1113 = vsel %vm1112, %v1111, %v1109
    %1114 = vrot.lane.b32.xlu0 %v1113, 88
    %v1115 = vpop.permute.xlu0 %1114
    %vm1116 = vcmask 48128
    %s1117 = scalar_lea.vmem %s1, 284
    %1118 = vst.msk [vmem:[%s1117] sm:$0x1] %vm1116, %v1115
    %s1119 = scalar_lea.vmem %s1, 667
    %1120 = vst.msk [vmem:[%s1119] sm:$0x2] %vm1116, %v1115
    %s1121 = scalar_lea.vmem %s1, 346
    %1122 = vst.msk [vmem:[%s1121] sm:$0x4] %vm1116, %v1115
    %s1123 = scalar_lea.vmem %s1, 729
    %1124 = vst.msk [vmem:[%s1123] sm:$0x8] %vm1116, %v1115
    %v1125 = vld [vmem:[#allocation0] sm:$0x3]
    %s1126 = scalar_lea.vmem [#allocation0], 22
    %v1127 = vld [vmem:[%s1126] sm:$0xc]
    %vm1128 = vcmask 1043458
    %v1129 = vsel %vm1128, %v1127, %v1125
    %s1130 = scalar_lea.vmem [#allocation0], 44
    %v1131 = vld [vmem:[%s1130] sm:$0x30]
    %vm1132 = vcmask 1045508
    %v1133 = vsel %vm1132, %v1131, %v1129
    %s1134 = scalar_lea.vmem [#allocation0], 66
    %v1135 = vld [vmem:[%s1134] sm:$0xc0]
    %vm1136 = vcmask 1047558
    %v1137 = vsel %vm1136, %v1135, %v1133
    %1138 = vrot.lane.b32.xlu0 %v1137, 86
    %v1139 = vpop.permute.xlu0 %1138
    %vm1140 = vcmask 48128
    %s1141 = scalar_lea.vmem %s1, 7
    %1142 = vst.msk [vmem:[%s1141] sm:$0x1] %vm1140, %v1139
    %s1143 = scalar_lea.vmem %s1, 390
    %1144 = vst.msk [vmem:[%s1143] sm:$0x2] %vm1140, %v1139
    %s1145 = scalar_lea.vmem %s1, 69
    %1146 = vst.msk [vmem:[%s1145] sm:$0x4] %vm1140, %v1139
    %s1147 = scalar_lea.vmem %s1, 452
    %1148 = vst.msk [vmem:[%s1147] sm:$0x8] %vm1140, %v1139
    %s1149 = scalar_lea.vmem %s1, 131
    %1150 = vst.msk [vmem:[%s1149] sm:$0x10] %vm1140, %v1139
    %s1151 = scalar_lea.vmem %s1, 514
    %1152 = vst.msk [vmem:[%s1151] sm:$0x20] %vm1140, %v1139
    %s1153 = scalar_lea.vmem %s1, 193
    %1154 = vst.msk [vmem:[%s1153] sm:$0x40] %vm1140, %v1139
    %s1155 = scalar_lea.vmem %s1, 576
    %1156 = vst.msk [vmem:[%s1155] sm:$0x80] %vm1140, %v1139
    %s1157 = scalar_lea.vmem [#allocation0], 96
    %v1158 = vld [vmem:[%s1157] sm:$0x3]
    %s1159 = scalar_lea.vmem [#allocation0], 118
    %v1160 = vld [vmem:[%s1159] sm:$0xc]
    %vm1161 = vcmask 1043458
    %v1162 = vsel %vm1161, %v1160, %v1158
    %1163 = vrot.lane.b32.xlu0 %v1162, 86
    %v1164 = vpop.permute.xlu0 %1163
    %vm1165 = vcmask 48128
    %s1166 = scalar_lea.vmem %s1, 263
    %1167 = vst.msk [vmem:[%s1166] sm:$0x1] %vm1165, %v1164
    %s1168 = scalar_lea.vmem %s1, 646
    %1169 = vst.msk [vmem:[%s1168] sm:$0x2] %vm1165, %v1164
    %s1170 = scalar_lea.vmem %s1, 325
    %1171 = vst.msk [vmem:[%s1170] sm:$0x4] %vm1165, %v1164
    %s1172 = scalar_lea.vmem %s1, 708
    %1173 = vst.msk [vmem:[%s1172] sm:$0x8] %vm1165, %v1164
    %s1174 = scalar_lea.vmem [#allocation0], 16
    %v1175 = vld [vmem:[%s1174] sm:$0x3]
    %s1176 = scalar_lea.vmem [#allocation0], 38
    %v1177 = vld [vmem:[%s1176] sm:$0xc]
    %vm1178 = vcmask 1043458
    %v1179 = vsel %vm1178, %v1177, %v1175
    %s1180 = scalar_lea.vmem [#allocation0], 60
    %v1181 = vld [vmem:[%s1180] sm:$0x30]
    %vm1182 = vcmask 1045508
    %v1183 = vsel %vm1182, %v1181, %v1179
    %s1184 = scalar_lea.vmem [#allocation0], 82
    %v1185 = vld [vmem:[%s1184] sm:$0xc0]
    %vm1186 = vcmask 1047558
    %v1187 = vsel %vm1186, %v1185, %v1183
    %1188 = vrot.lane.b32.xlu0 %v1187, 84
    %v1189 = vpop.permute.xlu0 %1188
    %vm1190 = vcmask 48128
    %s1191 = scalar_lea.vmem %s1, 50
    %1192 = vst.msk [vmem:[%s1191] sm:$0x1] %vm1190, %v1189
    %s1193 = scalar_lea.vmem %s1, 433
    %1194 = vst.msk [vmem:[%s1193] sm:$0x2] %vm1190, %v1189
    %s1195 = scalar_lea.vmem %s1, 112
    %1196 = vst.msk [vmem:[%s1195] sm:$0x4] %vm1190, %v1189
    %s1197 = scalar_lea.vmem %s1, 495
    %1198 = vst.msk [vmem:[%s1197] sm:$0x8] %vm1190, %v1189
    %s1199 = scalar_lea.vmem %s1, 174
    %1200 = vst.msk [vmem:[%s1199] sm:$0x10] %vm1190, %v1189
    %s1201 = scalar_lea.vmem %s1, 557
    %1202 = vst.msk [vmem:[%s1201] sm:$0x20] %vm1190, %v1189
    %s1203 = scalar_lea.vmem %s1, 236
    %1204 = vst.msk [vmem:[%s1203] sm:$0x40] %vm1190, %v1189
    %s1205 = scalar_lea.vmem %s1, 619
    %1206 = vst.msk [vmem:[%s1205] sm:$0x80] %vm1190, %v1189
    %s1207 = scalar_lea.vmem [#allocation0], 112
    %v1208 = vld [vmem:[%s1207] sm:$0x3]
    %s1209 = scalar_lea.vmem [#allocation0], 134
    %v1210 = vld [vmem:[%s1209] sm:$0xc]
    %vm1211 = vcmask 1043458
    %v1212 = vsel %vm1211, %v1210, %v1208
    %1213 = vrot.lane.b32.xlu0 %v1212, 84
    %v1214 = vpop.permute.xlu0 %1213
    %vm1215 = vcmask 48128
    %s1216 = scalar_lea.vmem %s1, 306
    %1217 = vst.msk [vmem:[%s1216] sm:$0x1] %vm1215, %v1214
    %s1218 = scalar_lea.vmem %s1, 689
    %1219 = vst.msk [vmem:[%s1218] sm:$0x2] %vm1215, %v1214
    %s1220 = scalar_lea.vmem %s1, 368
    %1221 = vst.msk [vmem:[%s1220] sm:$0x4] %vm1215, %v1214
    %s1222 = scalar_lea.vmem %s1, 751
    %1223 = vst.msk [vmem:[%s1222] sm:$0x8] %vm1215, %v1214
    %s1224 = scalar_lea.vmem [#allocation0], 8
    %v1225 = vld [vmem:[%s1224] sm:$0x3]
    %s1226 = scalar_lea.vmem [#allocation0], 30
    %v1227 = vld [vmem:[%s1226] sm:$0xc]
    %vm1228 = vcmask 1043458
    %v1229 = vsel %vm1228, %v1227, %v1225
    %s1230 = scalar_lea.vmem [#allocation0], 52
    %v1231 = vld [vmem:[%s1230] sm:$0x30]
    %vm1232 = vcmask 1045508
    %v1233 = vsel %vm1232, %v1231, %v1229
    %s1234 = scalar_lea.vmem [#allocation0], 74
    %v1235 = vld [vmem:[%s1234] sm:$0xc0]
    %vm1236 = vcmask 1047558
    %v1237 = vsel %vm1236, %v1235, %v1233
    %1238 = vrot.lane.b32.xlu0 %v1237, 82
    %v1239 = vpop.permute.xlu0 %1238
    %vm1240 = vcmask 48128
    %s1241 = scalar_lea.vmem %s1, 29
    %1242 = vst.msk [vmem:[%s1241] sm:$0x1] %vm1240, %v1239
    %s1243 = scalar_lea.vmem %s1, 412
    %1244 = vst.msk [vmem:[%s1243] sm:$0x2] %vm1240, %v1239
    %s1245 = scalar_lea.vmem %s1, 91
    %1246 = vst.msk [vmem:[%s1245] sm:$0x4] %vm1240, %v1239
    %s1247 = scalar_lea.vmem %s1, 474
    %1248 = vst.msk [vmem:[%s1247] sm:$0x8] %vm1240, %v1239
    %s1249 = scalar_lea.vmem %s1, 153
    %1250 = vst.msk [vmem:[%s1249] sm:$0x10] %vm1240, %v1239
    %s1251 = scalar_lea.vmem %s1, 536
    %1252 = vst.msk [vmem:[%s1251] sm:$0x20] %vm1240, %v1239
    %s1253 = scalar_lea.vmem %s1, 215
    %1254 = vst.msk [vmem:[%s1253] sm:$0x40] %vm1240, %v1239
    %s1255 = scalar_lea.vmem %s1, 598
    %1256 = vst.msk [vmem:[%s1255] sm:$0x80] %vm1240, %v1239
    %s1257 = scalar_lea.vmem [#allocation0], 104
    %v1258 = vld [vmem:[%s1257] sm:$0x3]
    %s1259 = scalar_lea.vmem [#allocation0], 126
    %v1260 = vld [vmem:[%s1259] sm:$0xc]
    %vm1261 = vcmask 1043458
    %v1262 = vsel %vm1261, %v1260, %v1258
    %1263 = vrot.lane.b32.xlu0 %v1262, 82
    %v1264 = vpop.permute.xlu0 %1263
    %vm1265 = vcmask 48128
    %s1266 = scalar_lea.vmem %s1, 285
    %1267 = vst.msk [vmem:[%s1266] sm:$0x1] %vm1265, %v1264
    %s1268 = scalar_lea.vmem %s1, 668
    %1269 = vst.msk [vmem:[%s1268] sm:$0x2] %vm1265, %v1264
    %s1270 = scalar_lea.vmem %s1, 347
    %1271 = vst.msk [vmem:[%s1270] sm:$0x4] %vm1265, %v1264
    %s1272 = scalar_lea.vmem %s1, 730
    %1273 = vst.msk [vmem:[%s1272] sm:$0x8] %vm1265, %v1264
    %v1274 = vld [vmem:[#allocation0] sm:$0x3]
    %s1275 = scalar_lea.vmem [#allocation0], 22
    %v1276 = vld [vmem:[%s1275] sm:$0xc]
    %vm1277 = vcmask 1043458
    %v1278 = vsel %vm1277, %v1276, %v1274
    %s1279 = scalar_lea.vmem [#allocation0], 44
    %v1280 = vld [vmem:[%s1279] sm:$0x30]
    %vm1281 = vcmask 1045508
    %v1282 = vsel %vm1281, %v1280, %v1278
    %s1283 = scalar_lea.vmem [#allocation0], 66
    %v1284 = vld [vmem:[%s1283] sm:$0xc0]
    %vm1285 = vcmask 1047558
    %v1286 = vsel %vm1285, %v1284, %v1282
    %1287 = vrot.lane.b32.xlu0 %v1286, 80
    %v1288 = vpop.permute.xlu0 %1287
    %vm1289 = vcmask 48128
    %s1290 = scalar_lea.vmem %s1, 8
    %1291 = vst.msk [vmem:[%s1290] sm:$0x1] %vm1289, %v1288
    %s1292 = scalar_lea.vmem %s1, 391
    %1293 = vst.msk [vmem:[%s1292] sm:$0x2] %vm1289, %v1288
    %s1294 = scalar_lea.vmem %s1, 70
    %1295 = vst.msk [vmem:[%s1294] sm:$0x4] %vm1289, %v1288
    %s1296 = scalar_lea.vmem %s1, 453
    %1297 = vst.msk [vmem:[%s1296] sm:$0x8] %vm1289, %v1288
    %s1298 = scalar_lea.vmem %s1, 132
    %1299 = vst.msk [vmem:[%s1298] sm:$0x10] %vm1289, %v1288
    %s1300 = scalar_lea.vmem %s1, 515
    %1301 = vst.msk [vmem:[%s1300] sm:$0x20] %vm1289, %v1288
    %s1302 = scalar_lea.vmem %s1, 194
    %1303 = vst.msk [vmem:[%s1302] sm:$0x40] %vm1289, %v1288
    %s1304 = scalar_lea.vmem %s1, 577
    %1305 = vst.msk [vmem:[%s1304] sm:$0x80] %vm1289, %v1288
    %s1306 = scalar_lea.vmem [#allocation0], 96
    %v1307 = vld [vmem:[%s1306] sm:$0x3]
    %s1308 = scalar_lea.vmem [#allocation0], 118
    %v1309 = vld [vmem:[%s1308] sm:$0xc]
    %vm1310 = vcmask 1043458
    %v1311 = vsel %vm1310, %v1309, %v1307
    %1312 = vrot.lane.b32.xlu0 %v1311, 80
    %v1313 = vpop.permute.xlu0 %1312
    %vm1314 = vcmask 48128
    %s1315 = scalar_lea.vmem %s1, 264
    %1316 = vst.msk [vmem:[%s1315] sm:$0x1] %vm1314, %v1313
    %s1317 = scalar_lea.vmem %s1, 647
    %1318 = vst.msk [vmem:[%s1317] sm:$0x2] %vm1314, %v1313
    %s1319 = scalar_lea.vmem %s1, 326
    %1320 = vst.msk [vmem:[%s1319] sm:$0x4] %vm1314, %v1313
    %s1321 = scalar_lea.vmem %s1, 709
    %1322 = vst.msk [vmem:[%s1321] sm:$0x8] %vm1314, %v1313
    %s1323 = scalar_lea.vmem [#allocation0], 16
    %v1324 = vld [vmem:[%s1323] sm:$0x3]
    %s1325 = scalar_lea.vmem [#allocation0], 38
    %v1326 = vld [vmem:[%s1325] sm:$0xc]
    %vm1327 = vcmask 1043458
    %v1328 = vsel %vm1327, %v1326, %v1324
    %s1329 = scalar_lea.vmem [#allocation0], 60
    %v1330 = vld [vmem:[%s1329] sm:$0x30]
    %vm1331 = vcmask 1045508
    %v1332 = vsel %vm1331, %v1330, %v1328
    %s1333 = scalar_lea.vmem [#allocation0], 82
    %v1334 = vld [vmem:[%s1333] sm:$0xc0]
    %vm1335 = vcmask 1047558
    %v1336 = vsel %vm1335, %v1334, %v1332
    %1337 = vrot.lane.b32.xlu0 %v1336, 78
    %v1338 = vpop.permute.xlu0 %1337
    %vm1339 = vcmask 48128
    %s1340 = scalar_lea.vmem %s1, 51
    %1341 = vst.msk [vmem:[%s1340] sm:$0x1] %vm1339, %v1338
    %s1342 = scalar_lea.vmem %s1, 434
    %1343 = vst.msk [vmem:[%s1342] sm:$0x2] %vm1339, %v1338
    %s1344 = scalar_lea.vmem %s1, 113
    %1345 = vst.msk [vmem:[%s1344] sm:$0x4] %vm1339, %v1338
    %s1346 = scalar_lea.vmem %s1, 496
    %1347 = vst.msk [vmem:[%s1346] sm:$0x8] %vm1339, %v1338
    %s1348 = scalar_lea.vmem %s1, 175
    %1349 = vst.msk [vmem:[%s1348] sm:$0x10] %vm1339, %v1338
    %s1350 = scalar_lea.vmem %s1, 558
    %1351 = vst.msk [vmem:[%s1350] sm:$0x20] %vm1339, %v1338
    %s1352 = scalar_lea.vmem %s1, 237
    %1353 = vst.msk [vmem:[%s1352] sm:$0x40] %vm1339, %v1338
    %s1354 = scalar_lea.vmem %s1, 620
    %1355 = vst.msk [vmem:[%s1354] sm:$0x80] %vm1339, %v1338
    %s1356 = scalar_lea.vmem [#allocation0], 112
    %v1357 = vld [vmem:[%s1356] sm:$0x3]
    %s1358 = scalar_lea.vmem [#allocation0], 134
    %v1359 = vld [vmem:[%s1358] sm:$0xc]
    %vm1360 = vcmask 1043458
    %v1361 = vsel %vm1360, %v1359, %v1357
    %1362 = vrot.lane.b32.xlu0 %v1361, 78
    %v1363 = vpop.permute.xlu0 %1362
    %vm1364 = vcmask 48128
    %s1365 = scalar_lea.vmem %s1, 307
    %1366 = vst.msk [vmem:[%s1365] sm:$0x1] %vm1364, %v1363
    %s1367 = scalar_lea.vmem %s1, 690
    %1368 = vst.msk [vmem:[%s1367] sm:$0x2] %vm1364, %v1363
    %s1369 = scalar_lea.vmem %s1, 369
    %1370 = vst.msk [vmem:[%s1369] sm:$0x4] %vm1364, %v1363
    %s1371 = scalar_lea.vmem %s1, 752
    %1372 = vst.msk [vmem:[%s1371] sm:$0x8] %vm1364, %v1363
    %s1373 = scalar_lea.vmem [#allocation0], 8
    %v1374 = vld [vmem:[%s1373] sm:$0x3]
    %s1375 = scalar_lea.vmem [#allocation0], 30
    %v1376 = vld [vmem:[%s1375] sm:$0xc]
    %vm1377 = vcmask 1043458
    %v1378 = vsel %vm1377, %v1376, %v1374
    %s1379 = scalar_lea.vmem [#allocation0], 52
    %v1380 = vld [vmem:[%s1379] sm:$0x30]
    %vm1381 = vcmask 1045508
    %v1382 = vsel %vm1381, %v1380, %v1378
    %s1383 = scalar_lea.vmem [#allocation0], 74
    %v1384 = vld [vmem:[%s1383] sm:$0xc0]
    %vm1385 = vcmask 1047558
    %v1386 = vsel %vm1385, %v1384, %v1382
    %1387 = vrot.lane.b32.xlu0 %v1386, 76
    %v1388 = vpop.permute.xlu0 %1387
    %vm1389 = vcmask 48128
    %s1390 = scalar_lea.vmem %s1, 30
    %1391 = vst.msk [vmem:[%s1390] sm:$0x1] %vm1389, %v1388
    %s1392 = scalar_lea.vmem %s1, 413
    %1393 = vst.msk [vmem:[%s1392] sm:$0x2] %vm1389, %v1388
    %s1394 = scalar_lea.vmem %s1, 92
    %1395 = vst.msk [vmem:[%s1394] sm:$0x4] %vm1389, %v1388
    %s1396 = scalar_lea.vmem %s1, 475
    %1397 = vst.msk [vmem:[%s1396] sm:$0x8] %vm1389, %v1388
    %s1398 = scalar_lea.vmem %s1, 154
    %1399 = vst.msk [vmem:[%s1398] sm:$0x10] %vm1389, %v1388
    %s1400 = scalar_lea.vmem %s1, 537
    %1401 = vst.msk [vmem:[%s1400] sm:$0x20] %vm1389, %v1388
    %s1402 = scalar_lea.vmem %s1, 216
    %1403 = vst.msk [vmem:[%s1402] sm:$0x40] %vm1389, %v1388
    %s1404 = scalar_lea.vmem %s1, 599
    %1405 = vst.msk [vmem:[%s1404] sm:$0x80] %vm1389, %v1388
    %s1406 = scalar_lea.vmem [#allocation0], 104
    %v1407 = vld [vmem:[%s1406] sm:$0x3]
    %s1408 = scalar_lea.vmem [#allocation0], 126
    %v1409 = vld [vmem:[%s1408] sm:$0xc]
    %vm1410 = vcmask 1043458
    %v1411 = vsel %vm1410, %v1409, %v1407
    %1412 = vrot.lane.b32.xlu0 %v1411, 76
    %v1413 = vpop.permute.xlu0 %1412
    %vm1414 = vcmask 48128
    %s1415 = scalar_lea.vmem %s1, 286
    %1416 = vst.msk [vmem:[%s1415] sm:$0x1] %vm1414, %v1413
    %s1417 = scalar_lea.vmem %s1, 669
    %1418 = vst.msk [vmem:[%s1417] sm:$0x2] %vm1414, %v1413
    %s1419 = scalar_lea.vmem %s1, 348
    %1420 = vst.msk [vmem:[%s1419] sm:$0x4] %vm1414, %v1413
    %s1421 = scalar_lea.vmem %s1, 731
    %1422 = vst.msk [vmem:[%s1421] sm:$0x8] %vm1414, %v1413
    %v1423 = vld [vmem:[#allocation0] sm:$0x3]
    %s1424 = scalar_lea.vmem [#allocation0], 22
    %v1425 = vld [vmem:[%s1424] sm:$0xc]
    %vm1426 = vcmask 1043458
    %v1427 = vsel %vm1426, %v1425, %v1423
    %s1428 = scalar_lea.vmem [#allocation0], 44
    %v1429 = vld [vmem:[%s1428] sm:$0x30]
    %vm1430 = vcmask 1045508
    %v1431 = vsel %vm1430, %v1429, %v1427
    %s1432 = scalar_lea.vmem [#allocation0], 66
    %v1433 = vld [vmem:[%s1432] sm:$0xc0]
    %vm1434 = vcmask 1047558
    %v1435 = vsel %vm1434, %v1433, %v1431
    %1436 = vrot.lane.b32.xlu0 %v1435, 74
    %v1437 = vpop.permute.xlu0 %1436
    %vm1438 = vcmask 48128
    %s1439 = scalar_lea.vmem %s1, 9
    %1440 = vst.msk [vmem:[%s1439] sm:$0x1] %vm1438, %v1437
    %s1441 = scalar_lea.vmem %s1, 392
    %1442 = vst.msk [vmem:[%s1441] sm:$0x2] %vm1438, %v1437
    %s1443 = scalar_lea.vmem %s1, 71
    %1444 = vst.msk [vmem:[%s1443] sm:$0x4] %vm1438, %v1437
    %s1445 = scalar_lea.vmem %s1, 454
    %1446 = vst.msk [vmem:[%s1445] sm:$0x8] %vm1438, %v1437
    %s1447 = scalar_lea.vmem %s1, 133
    %1448 = vst.msk [vmem:[%s1447] sm:$0x10] %vm1438, %v1437
    %s1449 = scalar_lea.vmem %s1, 516
    %1450 = vst.msk [vmem:[%s1449] sm:$0x20] %vm1438, %v1437
    %s1451 = scalar_lea.vmem %s1, 195
    %1452 = vst.msk [vmem:[%s1451] sm:$0x40] %vm1438, %v1437
    %s1453 = scalar_lea.vmem %s1, 578
    %1454 = vst.msk [vmem:[%s1453] sm:$0x80] %vm1438, %v1437
    %s1455 = scalar_lea.vmem [#allocation0], 96
    %v1456 = vld [vmem:[%s1455] sm:$0x3]
    %s1457 = scalar_lea.vmem [#allocation0], 118
    %v1458 = vld [vmem:[%s1457] sm:$0xc]
    %vm1459 = vcmask 1043458
    %v1460 = vsel %vm1459, %v1458, %v1456
    %1461 = vrot.lane.b32.xlu0 %v1460, 74
    %v1462 = vpop.permute.xlu0 %1461
    %vm1463 = vcmask 48128
    %s1464 = scalar_lea.vmem %s1, 265
    %1465 = vst.msk [vmem:[%s1464] sm:$0x1] %vm1463, %v1462
    %s1466 = scalar_lea.vmem %s1, 648
    %1467 = vst.msk [vmem:[%s1466] sm:$0x2] %vm1463, %v1462
    %s1468 = scalar_lea.vmem %s1, 327
    %1469 = vst.msk [vmem:[%s1468] sm:$0x4] %vm1463, %v1462
    %s1470 = scalar_lea.vmem %s1, 710
    %1471 = vst.msk [vmem:[%s1470] sm:$0x8] %vm1463, %v1462
    %s1472 = scalar_lea.vmem [#allocation0], 16
    %v1473 = vld [vmem:[%s1472] sm:$0x3]
    %s1474 = scalar_lea.vmem [#allocation0], 38
    %v1475 = vld [vmem:[%s1474] sm:$0xc]
    %vm1476 = vcmask 1043458
    %v1477 = vsel %vm1476, %v1475, %v1473
    %s1478 = scalar_lea.vmem [#allocation0], 60
    %v1479 = vld [vmem:[%s1478] sm:$0x30]
    %vm1480 = vcmask 1045508
    %v1481 = vsel %vm1480, %v1479, %v1477
    %s1482 = scalar_lea.vmem [#allocation0], 82
    %v1483 = vld [vmem:[%s1482] sm:$0xc0]
    %vm1484 = vcmask 1047558
    %v1485 = vsel %vm1484, %v1483, %v1481
    %1486 = vrot.lane.b32.xlu0 %v1485, 72
    %v1487 = vpop.permute.xlu0 %1486
    %vm1488 = vcmask 48128
    %s1489 = scalar_lea.vmem %s1, 52
    %1490 = vst.msk [vmem:[%s1489] sm:$0x1] %vm1488, %v1487
    %s1491 = scalar_lea.vmem %s1, 435
    %1492 = vst.msk [vmem:[%s1491] sm:$0x2] %vm1488, %v1487
    %s1493 = scalar_lea.vmem %s1, 114
    %1494 = vst.msk [vmem:[%s1493] sm:$0x4] %vm1488, %v1487
    %s1495 = scalar_lea.vmem %s1, 497
    %1496 = vst.msk [vmem:[%s1495] sm:$0x8] %vm1488, %v1487
    %s1497 = scalar_lea.vmem %s1, 176
    %1498 = vst.msk [vmem:[%s1497] sm:$0x10] %vm1488, %v1487
    %s1499 = scalar_lea.vmem %s1, 559
    %1500 = vst.msk [vmem:[%s1499] sm:$0x20] %vm1488, %v1487
    %s1501 = scalar_lea.vmem %s1, 238
    %1502 = vst.msk [vmem:[%s1501] sm:$0x40] %vm1488, %v1487
    %s1503 = scalar_lea.vmem %s1, 621
    %1504 = vst.msk [vmem:[%s1503] sm:$0x80] %vm1488, %v1487
    %s1505 = scalar_lea.vmem [#allocation0], 112
    %v1506 = vld [vmem:[%s1505] sm:$0x3]
    %s1507 = scalar_lea.vmem [#allocation0], 134
    %v1508 = vld [vmem:[%s1507] sm:$0xc]
    %vm1509 = vcmask 1043458
    %v1510 = vsel %vm1509, %v1508, %v1506
    %1511 = vrot.lane.b32.xlu0 %v1510, 72
    %v1512 = vpop.permute.xlu0 %1511
    %vm1513 = vcmask 48128
    %s1514 = scalar_lea.vmem %s1, 308
    %1515 = vst.msk [vmem:[%s1514] sm:$0x1] %vm1513, %v1512
    %s1516 = scalar_lea.vmem %s1, 691
    %1517 = vst.msk [vmem:[%s1516] sm:$0x2] %vm1513, %v1512
    %s1518 = scalar_lea.vmem %s1, 370
    %1519 = vst.msk [vmem:[%s1518] sm:$0x4] %vm1513, %v1512
    %s1520 = scalar_lea.vmem %s1, 753
    %1521 = vst.msk [vmem:[%s1520] sm:$0x8] %vm1513, %v1512
    %s1522 = scalar_lea.vmem [#allocation0], 8
    %v1523 = vld [vmem:[%s1522] sm:$0x3]
    %s1524 = scalar_lea.vmem [#allocation0], 30
    %v1525 = vld [vmem:[%s1524] sm:$0xc]
    %vm1526 = vcmask 1043458
    %v1527 = vsel %vm1526, %v1525, %v1523
    %s1528 = scalar_lea.vmem [#allocation0], 52
    %v1529 = vld [vmem:[%s1528] sm:$0x30]
    %vm1530 = vcmask 1045508
    %v1531 = vsel %vm1530, %v1529, %v1527
    %s1532 = scalar_lea.vmem [#allocation0], 74
    %v1533 = vld [vmem:[%s1532] sm:$0xc0]
    %vm1534 = vcmask 1047558
    %v1535 = vsel %vm1534, %v1533, %v1531
    %1536 = vrot.lane.b32.xlu0 %v1535, 70
    %v1537 = vpop.permute.xlu0 %1536
    %vm1538 = vcmask 48128
    %s1539 = scalar_lea.vmem %s1, 31
    %1540 = vst.msk [vmem:[%s1539] sm:$0x1] %vm1538, %v1537
    %s1541 = scalar_lea.vmem %s1, 414
    %1542 = vst.msk [vmem:[%s1541] sm:$0x2] %vm1538, %v1537
    %s1543 = scalar_lea.vmem %s1, 93
    %1544 = vst.msk [vmem:[%s1543] sm:$0x4] %vm1538, %v1537
    %s1545 = scalar_lea.vmem %s1, 476
    %1546 = vst.msk [vmem:[%s1545] sm:$0x8] %vm1538, %v1537
    %s1547 = scalar_lea.vmem %s1, 155
    %1548 = vst.msk [vmem:[%s1547] sm:$0x10] %vm1538, %v1537
    %s1549 = scalar_lea.vmem %s1, 538
    %1550 = vst.msk [vmem:[%s1549] sm:$0x20] %vm1538, %v1537
    %s1551 = scalar_lea.vmem %s1, 217
    %1552 = vst.msk [vmem:[%s1551] sm:$0x40] %vm1538, %v1537
    %s1553 = scalar_lea.vmem %s1, 600
    %1554 = vst.msk [vmem:[%s1553] sm:$0x80] %vm1538, %v1537
    %s1555 = scalar_lea.vmem [#allocation0], 104
    %v1556 = vld [vmem:[%s1555] sm:$0x3]
    %s1557 = scalar_lea.vmem [#allocation0], 126
    %v1558 = vld [vmem:[%s1557] sm:$0xc]
    %vm1559 = vcmask 1043458
    %v1560 = vsel %vm1559, %v1558, %v1556
    %1561 = vrot.lane.b32.xlu0 %v1560, 70
    %v1562 = vpop.permute.xlu0 %1561
    %vm1563 = vcmask 48128
    %s1564 = scalar_lea.vmem %s1, 287
    %1565 = vst.msk [vmem:[%s1564] sm:$0x1] %vm1563, %v1562
    %s1566 = scalar_lea.vmem %s1, 670
    %1567 = vst.msk [vmem:[%s1566] sm:$0x2] %vm1563, %v1562
    %s1568 = scalar_lea.vmem %s1, 349
    %1569 = vst.msk [vmem:[%s1568] sm:$0x4] %vm1563, %v1562
    %s1570 = scalar_lea.vmem %s1, 732
    %1571 = vst.msk [vmem:[%s1570] sm:$0x8] %vm1563, %v1562
    %v1572 = vld [vmem:[#allocation0] sm:$0x3]
    %s1573 = scalar_lea.vmem [#allocation0], 22
    %v1574 = vld [vmem:[%s1573] sm:$0xc]
    %vm1575 = vcmask 1043458
    %v1576 = vsel %vm1575, %v1574, %v1572
    %s1577 = scalar_lea.vmem [#allocation0], 44
    %v1578 = vld [vmem:[%s1577] sm:$0x30]
    %vm1579 = vcmask 1045508
    %v1580 = vsel %vm1579, %v1578, %v1576
    %s1581 = scalar_lea.vmem [#allocation0], 66
    %v1582 = vld [vmem:[%s1581] sm:$0xc0]
    %vm1583 = vcmask 1047558
    %v1584 = vsel %vm1583, %v1582, %v1580
    %1585 = vrot.lane.b32.xlu0 %v1584, 68
    %v1586 = vpop.permute.xlu0 %1585
    %vm1587 = vcmask 48128
    %s1588 = scalar_lea.vmem %s1, 10
    %1589 = vst.msk [vmem:[%s1588] sm:$0x1] %vm1587, %v1586
    %s1590 = scalar_lea.vmem %s1, 393
    %1591 = vst.msk [vmem:[%s1590] sm:$0x2] %vm1587, %v1586
    %s1592 = scalar_lea.vmem %s1, 72
    %1593 = vst.msk [vmem:[%s1592] sm:$0x4] %vm1587, %v1586
    %s1594 = scalar_lea.vmem %s1, 455
    %1595 = vst.msk [vmem:[%s1594] sm:$0x8] %vm1587, %v1586
    %s1596 = scalar_lea.vmem %s1, 134
    %1597 = vst.msk [vmem:[%s1596] sm:$0x10] %vm1587, %v1586
    %s1598 = scalar_lea.vmem %s1, 517
    %1599 = vst.msk [vmem:[%s1598] sm:$0x20] %vm1587, %v1586
    %s1600 = scalar_lea.vmem %s1, 196
    %1601 = vst.msk [vmem:[%s1600] sm:$0x40] %vm1587, %v1586
    %s1602 = scalar_lea.vmem %s1, 579
    %1603 = vst.msk [vmem:[%s1602] sm:$0x80] %vm1587, %v1586
    %s1604 = scalar_lea.vmem [#allocation0], 96
    %v1605 = vld [vmem:[%s1604] sm:$0x3]
    %s1606 = scalar_lea.vmem [#allocation0], 118
    %v1607 = vld [vmem:[%s1606] sm:$0xc]
    %vm1608 = vcmask 1043458
    %v1609 = vsel %vm1608, %v1607, %v1605
    %1610 = vrot.lane.b32.xlu0 %v1609, 68
    %v1611 = vpop.permute.xlu0 %1610
    %vm1612 = vcmask 48128
    %s1613 = scalar_lea.vmem %s1, 266
    %1614 = vst.msk [vmem:[%s1613] sm:$0x1] %vm1612, %v1611
    %s1615 = scalar_lea.vmem %s1, 649
    %1616 = vst.msk [vmem:[%s1615] sm:$0x2] %vm1612, %v1611
    %s1617 = scalar_lea.vmem %s1, 328
    %1618 = vst.msk [vmem:[%s1617] sm:$0x4] %vm1612, %v1611
    %s1619 = scalar_lea.vmem %s1, 711
    %1620 = vst.msk [vmem:[%s1619] sm:$0x8] %vm1612, %v1611
    %s1621 = scalar_lea.vmem [#allocation0], 16
    %v1622 = vld [vmem:[%s1621] sm:$0x3]
    %s1623 = scalar_lea.vmem [#allocation0], 38
    %v1624 = vld [vmem:[%s1623] sm:$0xc]
    %vm1625 = vcmask 1043458
    %v1626 = vsel %vm1625, %v1624, %v1622
    %s1627 = scalar_lea.vmem [#allocation0], 60
    %v1628 = vld [vmem:[%s1627] sm:$0x30]
    %vm1629 = vcmask 1045508
    %v1630 = vsel %vm1629, %v1628, %v1626
    %s1631 = scalar_lea.vmem [#allocation0], 82
    %v1632 = vld [vmem:[%s1631] sm:$0xc0]
    %vm1633 = vcmask 1047558
    %v1634 = vsel %vm1633, %v1632, %v1630
    %1635 = vrot.lane.b32.xlu0 %v1634, 66
    %v1636 = vpop.permute.xlu0 %1635
    %vm1637 = vcmask 48128
    %s1638 = scalar_lea.vmem %s1, 53
    %1639 = vst.msk [vmem:[%s1638] sm:$0x1] %vm1637, %v1636
    %s1640 = scalar_lea.vmem %s1, 436
    %1641 = vst.msk [vmem:[%s1640] sm:$0x2] %vm1637, %v1636
    %s1642 = scalar_lea.vmem %s1, 115
    %1643 = vst.msk [vmem:[%s1642] sm:$0x4] %vm1637, %v1636
    %s1644 = scalar_lea.vmem %s1, 498
    %1645 = vst.msk [vmem:[%s1644] sm:$0x8] %vm1637, %v1636
    %s1646 = scalar_lea.vmem %s1, 177
    %1647 = vst.msk [vmem:[%s1646] sm:$0x10] %vm1637, %v1636
    %s1648 = scalar_lea.vmem %s1, 560
    %1649 = vst.msk [vmem:[%s1648] sm:$0x20] %vm1637, %v1636
    %s1650 = scalar_lea.vmem %s1, 239
    %1651 = vst.msk [vmem:[%s1650] sm:$0x40] %vm1637, %v1636
    %s1652 = scalar_lea.vmem %s1, 622
    %1653 = vst.msk [vmem:[%s1652] sm:$0x80] %vm1637, %v1636
    %s1654 = scalar_lea.vmem [#allocation0], 112
    %v1655 = vld [vmem:[%s1654] sm:$0x3]
    %s1656 = scalar_lea.vmem [#allocation0], 134
    %v1657 = vld [vmem:[%s1656] sm:$0xc]
    %vm1658 = vcmask 1043458
    %v1659 = vsel %vm1658, %v1657, %v1655
    %1660 = vrot.lane.b32.xlu0 %v1659, 66
    %v1661 = vpop.permute.xlu0 %1660
    %vm1662 = vcmask 48128
    %s1663 = scalar_lea.vmem %s1, 309
    %1664 = vst.msk [vmem:[%s1663] sm:$0x1] %vm1662, %v1661
    %s1665 = scalar_lea.vmem %s1, 692
    %1666 = vst.msk [vmem:[%s1665] sm:$0x2] %vm1662, %v1661
    %s1667 = scalar_lea.vmem %s1, 371
    %1668 = vst.msk [vmem:[%s1667] sm:$0x4] %vm1662, %v1661
    %s1669 = scalar_lea.vmem %s1, 754
    %1670 = vst.msk [vmem:[%s1669] sm:$0x8] %vm1662, %v1661
    %s1671 = scalar_lea.vmem [#allocation0], 8
    %v1672 = vld [vmem:[%s1671] sm:$0x3]
    %s1673 = scalar_lea.vmem [#allocation0], 30
    %v1674 = vld [vmem:[%s1673] sm:$0xc]
    %vm1675 = vcmask 1043458
    %v1676 = vsel %vm1675, %v1674, %v1672
    %s1677 = scalar_lea.vmem [#allocation0], 52
    %v1678 = vld [vmem:[%s1677] sm:$0x30]
    %vm1679 = vcmask 1045508
    %v1680 = vsel %vm1679, %v1678, %v1676
    %s1681 = scalar_lea.vmem [#allocation0], 74
    %v1682 = vld [vmem:[%s1681] sm:$0xc0]
    %vm1683 = vcmask 1047558
    %v1684 = vsel %vm1683, %v1682, %v1680
    %1685 = vrot.lane.b32.xlu0 %v1684, 64
    %v1686 = vpop.permute.xlu0 %1685
    %vm1687 = vcmask 48128
    %s1688 = scalar_lea.vmem %s1, 32
    %1689 = vst.msk [vmem:[%s1688] sm:$0x1] %vm1687, %v1686
    %s1690 = scalar_lea.vmem %s1, 415
    %1691 = vst.msk [vmem:[%s1690] sm:$0x2] %vm1687, %v1686
    %s1692 = scalar_lea.vmem %s1, 94
    %1693 = vst.msk [vmem:[%s1692] sm:$0x4] %vm1687, %v1686
    %s1694 = scalar_lea.vmem %s1, 477
    %1695 = vst.msk [vmem:[%s1694] sm:$0x8] %vm1687, %v1686
    %s1696 = scalar_lea.vmem %s1, 156
    %1697 = vst.msk [vmem:[%s1696] sm:$0x10] %vm1687, %v1686
    %s1698 = scalar_lea.vmem %s1, 539
    %1699 = vst.msk [vmem:[%s1698] sm:$0x20] %vm1687, %v1686
    %s1700 = scalar_lea.vmem %s1, 218
    %1701 = vst.msk [vmem:[%s1700] sm:$0x40] %vm1687, %v1686
    %s1702 = scalar_lea.vmem %s1, 601
    %1703 = vst.msk [vmem:[%s1702] sm:$0x80] %vm1687, %v1686
    %s1704 = scalar_lea.vmem [#allocation0], 104
    %v1705 = vld [vmem:[%s1704] sm:$0x3]
    %s1706 = scalar_lea.vmem [#allocation0], 126
    %v1707 = vld [vmem:[%s1706] sm:$0xc]
    %vm1708 = vcmask 1043458
    %v1709 = vsel %vm1708, %v1707, %v1705
    %1710 = vrot.lane.b32.xlu0 %v1709, 64
    %v1711 = vpop.permute.xlu0 %1710
    %vm1712 = vcmask 48128
    %s1713 = scalar_lea.vmem %s1, 288
    %1714 = vst.msk [vmem:[%s1713] sm:$0x1] %vm1712, %v1711
    %s1715 = scalar_lea.vmem %s1, 671
    %1716 = vst.msk [vmem:[%s1715] sm:$0x2] %vm1712, %v1711
    %s1717 = scalar_lea.vmem %s1, 350
    %1718 = vst.msk [vmem:[%s1717] sm:$0x4] %vm1712, %v1711
    %s1719 = scalar_lea.vmem %s1, 733
    %1720 = vst.msk [vmem:[%s1719] sm:$0x8] %vm1712, %v1711
    %v1721 = vld [vmem:[#allocation0] sm:$0x3]
    %s1722 = scalar_lea.vmem [#allocation0], 22
    %v1723 = vld [vmem:[%s1722] sm:$0xc]
    %vm1724 = vcmask 1043458
    %v1725 = vsel %vm1724, %v1723, %v1721
    %s1726 = scalar_lea.vmem [#allocation0], 44
    %v1727 = vld [vmem:[%s1726] sm:$0x30]
    %vm1728 = vcmask 1045508
    %v1729 = vsel %vm1728, %v1727, %v1725
    %s1730 = scalar_lea.vmem [#allocation0], 66
    %v1731 = vld [vmem:[%s1730] sm:$0xc0]
    %vm1732 = vcmask 1047558
    %v1733 = vsel %vm1732, %v1731, %v1729
    %1734 = vrot.lane.b32.xlu0 %v1733, 62
    %v1735 = vpop.permute.xlu0 %1734
    %vm1736 = vcmask 48128
    %s1737 = scalar_lea.vmem %s1, 11
    %1738 = vst.msk [vmem:[%s1737] sm:$0x1] %vm1736, %v1735
    %s1739 = scalar_lea.vmem %s1, 394
    %1740 = vst.msk [vmem:[%s1739] sm:$0x2] %vm1736, %v1735
    %s1741 = scalar_lea.vmem %s1, 73
    %1742 = vst.msk [vmem:[%s1741] sm:$0x4] %vm1736, %v1735
    %s1743 = scalar_lea.vmem %s1, 456
    %1744 = vst.msk [vmem:[%s1743] sm:$0x8] %vm1736, %v1735
    %s1745 = scalar_lea.vmem %s1, 135
    %1746 = vst.msk [vmem:[%s1745] sm:$0x10] %vm1736, %v1735
    %s1747 = scalar_lea.vmem %s1, 518
    %1748 = vst.msk [vmem:[%s1747] sm:$0x20] %vm1736, %v1735
    %s1749 = scalar_lea.vmem %s1, 197
    %1750 = vst.msk [vmem:[%s1749] sm:$0x40] %vm1736, %v1735
    %s1751 = scalar_lea.vmem %s1, 580
    %1752 = vst.msk [vmem:[%s1751] sm:$0x80] %vm1736, %v1735
    %s1753 = scalar_lea.vmem [#allocation0], 96
    %v1754 = vld [vmem:[%s1753] sm:$0x3]
    %s1755 = scalar_lea.vmem [#allocation0], 118
    %v1756 = vld [vmem:[%s1755] sm:$0xc]
    %vm1757 = vcmask 1043458
    %v1758 = vsel %vm1757, %v1756, %v1754
    %1759 = vrot.lane.b32.xlu0 %v1758, 62
    %v1760 = vpop.permute.xlu0 %1759
    %vm1761 = vcmask 48128
    %s1762 = scalar_lea.vmem %s1, 267
    %1763 = vst.msk [vmem:[%s1762] sm:$0x1] %vm1761, %v1760
    %s1764 = scalar_lea.vmem %s1, 650
    %1765 = vst.msk [vmem:[%s1764] sm:$0x2] %vm1761, %v1760
    %s1766 = scalar_lea.vmem %s1, 329
    %1767 = vst.msk [vmem:[%s1766] sm:$0x4] %vm1761, %v1760
    %s1768 = scalar_lea.vmem %s1, 712
    %1769 = vst.msk [vmem:[%s1768] sm:$0x8] %vm1761, %v1760
    %s1770 = scalar_lea.vmem [#allocation0], 16
    %v1771 = vld [vmem:[%s1770] sm:$0x3]
    %s1772 = scalar_lea.vmem [#allocation0], 38
    %v1773 = vld [vmem:[%s1772] sm:$0xc]
    %vm1774 = vcmask 1043458
    %v1775 = vsel %vm1774, %v1773, %v1771
    %s1776 = scalar_lea.vmem [#allocation0], 60
    %v1777 = vld [vmem:[%s1776] sm:$0x30]
    %vm1778 = vcmask 1045508
    %v1779 = vsel %vm1778, %v1777, %v1775
    %s1780 = scalar_lea.vmem [#allocation0], 82
    %v1781 = vld [vmem:[%s1780] sm:$0xc0]
    %vm1782 = vcmask 1047558
    %v1783 = vsel %vm1782, %v1781, %v1779
    %1784 = vrot.lane.b32.xlu0 %v1783, 60
    %v1785 = vpop.permute.xlu0 %1784
    %vm1786 = vcmask 48128
    %s1787 = scalar_lea.vmem %s1, 54
    %1788 = vst.msk [vmem:[%s1787] sm:$0x1] %vm1786, %v1785
    %s1789 = scalar_lea.vmem %s1, 437
    %1790 = vst.msk [vmem:[%s1789] sm:$0x2] %vm1786, %v1785
    %s1791 = scalar_lea.vmem %s1, 116
    %1792 = vst.msk [vmem:[%s1791] sm:$0x4] %vm1786, %v1785
    %s1793 = scalar_lea.vmem %s1, 499
    %1794 = vst.msk [vmem:[%s1793] sm:$0x8] %vm1786, %v1785
    %s1795 = scalar_lea.vmem %s1, 178
    %1796 = vst.msk [vmem:[%s1795] sm:$0x10] %vm1786, %v1785
    %s1797 = scalar_lea.vmem %s1, 561
    %1798 = vst.msk [vmem:[%s1797] sm:$0x20] %vm1786, %v1785
    %s1799 = scalar_lea.vmem %s1, 240
    %1800 = vst.msk [vmem:[%s1799] sm:$0x40] %vm1786, %v1785
    %s1801 = scalar_lea.vmem %s1, 623
    %1802 = vst.msk [vmem:[%s1801] sm:$0x80] %vm1786, %v1785
    %s1803 = scalar_lea.vmem [#allocation0], 112
    %v1804 = vld [vmem:[%s1803] sm:$0x3]
    %s1805 = scalar_lea.vmem [#allocation0], 134
    %v1806 = vld [vmem:[%s1805] sm:$0xc]
    %vm1807 = vcmask 1043458
    %v1808 = vsel %vm1807, %v1806, %v1804
    %1809 = vrot.lane.b32.xlu0 %v1808, 60
    %v1810 = vpop.permute.xlu0 %1809
    %vm1811 = vcmask 48128
    %s1812 = scalar_lea.vmem %s1, 310
    %1813 = vst.msk [vmem:[%s1812] sm:$0x1] %vm1811, %v1810
    %s1814 = scalar_lea.vmem %s1, 693
    %1815 = vst.msk [vmem:[%s1814] sm:$0x2] %vm1811, %v1810
    %s1816 = scalar_lea.vmem %s1, 372
    %1817 = vst.msk [vmem:[%s1816] sm:$0x4] %vm1811, %v1810
    %s1818 = scalar_lea.vmem %s1, 755
    %1819 = vst.msk [vmem:[%s1818] sm:$0x8] %vm1811, %v1810
    %s1820 = scalar_lea.vmem [#allocation0], 8
    %v1821 = vld [vmem:[%s1820] sm:$0x3]
    %s1822 = scalar_lea.vmem [#allocation0], 30
    %v1823 = vld [vmem:[%s1822] sm:$0xc]
    %vm1824 = vcmask 1043458
    %v1825 = vsel %vm1824, %v1823, %v1821
    %s1826 = scalar_lea.vmem [#allocation0], 52
    %v1827 = vld [vmem:[%s1826] sm:$0x30]
    %vm1828 = vcmask 1045508
    %v1829 = vsel %vm1828, %v1827, %v1825
    %s1830 = scalar_lea.vmem [#allocation0], 74
    %v1831 = vld [vmem:[%s1830] sm:$0xc0]
    %vm1832 = vcmask 1047558
    %v1833 = vsel %vm1832, %v1831, %v1829
    %1834 = vrot.lane.b32.xlu0 %v1833, 58
    %v1835 = vpop.permute.xlu0 %1834
    %vm1836 = vcmask 48128
    %s1837 = scalar_lea.vmem %s1, 33
    %1838 = vst.msk [vmem:[%s1837] sm:$0x1] %vm1836, %v1835
    %s1839 = scalar_lea.vmem %s1, 416
    %1840 = vst.msk [vmem:[%s1839] sm:$0x2] %vm1836, %v1835
    %s1841 = scalar_lea.vmem %s1, 95
    %1842 = vst.msk [vmem:[%s1841] sm:$0x4] %vm1836, %v1835
    %s1843 = scalar_lea.vmem %s1, 478
    %1844 = vst.msk [vmem:[%s1843] sm:$0x8] %vm1836, %v1835
    %s1845 = scalar_lea.vmem %s1, 157
    %1846 = vst.msk [vmem:[%s1845] sm:$0x10] %vm1836, %v1835
    %s1847 = scalar_lea.vmem %s1, 540
    %1848 = vst.msk [vmem:[%s1847] sm:$0x20] %vm1836, %v1835
    %s1849 = scalar_lea.vmem %s1, 219
    %1850 = vst.msk [vmem:[%s1849] sm:$0x40] %vm1836, %v1835
    %s1851 = scalar_lea.vmem %s1, 602
    %1852 = vst.msk [vmem:[%s1851] sm:$0x80] %vm1836, %v1835
    %s1853 = scalar_lea.vmem [#allocation0], 104
    %v1854 = vld [vmem:[%s1853] sm:$0x3]
    %s1855 = scalar_lea.vmem [#allocation0], 126
    %v1856 = vld [vmem:[%s1855] sm:$0xc]
    %vm1857 = vcmask 1043458
    %v1858 = vsel %vm1857, %v1856, %v1854
    %1859 = vrot.lane.b32.xlu0 %v1858, 58
    %v1860 = vpop.permute.xlu0 %1859
    %vm1861 = vcmask 48128
    %s1862 = scalar_lea.vmem %s1, 289
    %1863 = vst.msk [vmem:[%s1862] sm:$0x1] %vm1861, %v1860
    %s1864 = scalar_lea.vmem %s1, 672
    %1865 = vst.msk [vmem:[%s1864] sm:$0x2] %vm1861, %v1860
    %s1866 = scalar_lea.vmem %s1, 351
    %1867 = vst.msk [vmem:[%s1866] sm:$0x4] %vm1861, %v1860
    %s1868 = scalar_lea.vmem %s1, 734
    %1869 = vst.msk [vmem:[%s1868] sm:$0x8] %vm1861, %v1860
    %v1870 = vld [vmem:[#allocation0] sm:$0x3]
    %s1871 = scalar_lea.vmem [#allocation0], 22
    %v1872 = vld [vmem:[%s1871] sm:$0xc]
    %vm1873 = vcmask 1043458
    %v1874 = vsel %vm1873, %v1872, %v1870
    %s1875 = scalar_lea.vmem [#allocation0], 44
    %v1876 = vld [vmem:[%s1875] sm:$0x30]
    %vm1877 = vcmask 1045508
    %v1878 = vsel %vm1877, %v1876, %v1874
    %s1879 = scalar_lea.vmem [#allocation0], 66
    %v1880 = vld [vmem:[%s1879] sm:$0xc0]
    %vm1881 = vcmask 1047558
    %v1882 = vsel %vm1881, %v1880, %v1878
    %1883 = vrot.lane.b32.xlu0 %v1882, 56
    %v1884 = vpop.permute.xlu0 %1883
    %vm1885 = vcmask 48128
    %s1886 = scalar_lea.vmem %s1, 12
    %1887 = vst.msk [vmem:[%s1886] sm:$0x1] %vm1885, %v1884
    %s1888 = scalar_lea.vmem %s1, 395
    %1889 = vst.msk [vmem:[%s1888] sm:$0x2] %vm1885, %v1884
    %s1890 = scalar_lea.vmem %s1, 74
    %1891 = vst.msk [vmem:[%s1890] sm:$0x4] %vm1885, %v1884
    %s1892 = scalar_lea.vmem %s1, 457
    %1893 = vst.msk [vmem:[%s1892] sm:$0x8] %vm1885, %v1884
    %s1894 = scalar_lea.vmem %s1, 136
    %1895 = vst.msk [vmem:[%s1894] sm:$0x10] %vm1885, %v1884
    %s1896 = scalar_lea.vmem %s1, 519
    %1897 = vst.msk [vmem:[%s1896] sm:$0x20] %vm1885, %v1884
    %s1898 = scalar_lea.vmem %s1, 198
    %1899 = vst.msk [vmem:[%s1898] sm:$0x40] %vm1885, %v1884
    %s1900 = scalar_lea.vmem %s1, 581
    %1901 = vst.msk [vmem:[%s1900] sm:$0x80] %vm1885, %v1884
    %s1902 = scalar_lea.vmem [#allocation0], 96
    %v1903 = vld [vmem:[%s1902] sm:$0x3]
    %s1904 = scalar_lea.vmem [#allocation0], 118
    %v1905 = vld [vmem:[%s1904] sm:$0xc]
    %vm1906 = vcmask 1043458
    %v1907 = vsel %vm1906, %v1905, %v1903
    %1908 = vrot.lane.b32.xlu0 %v1907, 56
    %v1909 = vpop.permute.xlu0 %1908
    %vm1910 = vcmask 48128
    %s1911 = scalar_lea.vmem %s1, 268
    %1912 = vst.msk [vmem:[%s1911] sm:$0x1] %vm1910, %v1909
    %s1913 = scalar_lea.vmem %s1, 651
    %1914 = vst.msk [vmem:[%s1913] sm:$0x2] %vm1910, %v1909
    %s1915 = scalar_lea.vmem %s1, 330
    %1916 = vst.msk [vmem:[%s1915] sm:$0x4] %vm1910, %v1909
    %s1917 = scalar_lea.vmem %s1, 713
    %1918 = vst.msk [vmem:[%s1917] sm:$0x8] %vm1910, %v1909
    %s1919 = scalar_lea.vmem [#allocation0], 16
    %v1920 = vld [vmem:[%s1919] sm:$0x3]
    %s1921 = scalar_lea.vmem [#allocation0], 38
    %v1922 = vld [vmem:[%s1921] sm:$0xc]
    %vm1923 = vcmask 1043458
    %v1924 = vsel %vm1923, %v1922, %v1920
    %s1925 = scalar_lea.vmem [#allocation0], 60
    %v1926 = vld [vmem:[%s1925] sm:$0x30]
    %vm1927 = vcmask 1045508
    %v1928 = vsel %vm1927, %v1926, %v1924
    %s1929 = scalar_lea.vmem [#allocation0], 82
    %v1930 = vld [vmem:[%s1929] sm:$0xc0]
    %vm1931 = vcmask 1047558
    %v1932 = vsel %vm1931, %v1930, %v1928
    %1933 = vrot.lane.b32.xlu0 %v1932, 54
    %v1934 = vpop.permute.xlu0 %1933
    %vm1935 = vcmask 48128
    %s1936 = scalar_lea.vmem %s1, 55
    %1937 = vst.msk [vmem:[%s1936] sm:$0x1] %vm1935, %v1934
    %s1938 = scalar_lea.vmem %s1, 438
    %1939 = vst.msk [vmem:[%s1938] sm:$0x2] %vm1935, %v1934
    %s1940 = scalar_lea.vmem %s1, 117
    %1941 = vst.msk [vmem:[%s1940] sm:$0x4] %vm1935, %v1934
    %s1942 = scalar_lea.vmem %s1, 500
    %1943 = vst.msk [vmem:[%s1942] sm:$0x8] %vm1935, %v1934
    %s1944 = scalar_lea.vmem %s1, 179
    %1945 = vst.msk [vmem:[%s1944] sm:$0x10] %vm1935, %v1934
    %s1946 = scalar_lea.vmem %s1, 562
    %1947 = vst.msk [vmem:[%s1946] sm:$0x20] %vm1935, %v1934
    %s1948 = scalar_lea.vmem %s1, 241
    %1949 = vst.msk [vmem:[%s1948] sm:$0x40] %vm1935, %v1934
    %s1950 = scalar_lea.vmem %s1, 624
    %1951 = vst.msk [vmem:[%s1950] sm:$0x80] %vm1935, %v1934
    %s1952 = scalar_lea.vmem [#allocation0], 112
    %v1953 = vld [vmem:[%s1952] sm:$0x3]
    %s1954 = scalar_lea.vmem [#allocation0], 134
    %v1955 = vld [vmem:[%s1954] sm:$0xc]
    %vm1956 = vcmask 1043458
    %v1957 = vsel %vm1956, %v1955, %v1953
    %1958 = vrot.lane.b32.xlu0 %v1957, 54
    %v1959 = vpop.permute.xlu0 %1958
    %vm1960 = vcmask 48128
    %s1961 = scalar_lea.vmem %s1, 311
    %1962 = vst.msk [vmem:[%s1961] sm:$0x1] %vm1960, %v1959
    %s1963 = scalar_lea.vmem %s1, 694
    %1964 = vst.msk [vmem:[%s1963] sm:$0x2] %vm1960, %v1959
    %s1965 = scalar_lea.vmem %s1, 373
    %1966 = vst.msk [vmem:[%s1965] sm:$0x4] %vm1960, %v1959
    %s1967 = scalar_lea.vmem %s1, 756
    %1968 = vst.msk [vmem:[%s1967] sm:$0x8] %vm1960, %v1959
    %s1969 = scalar_lea.vmem [#allocation0], 8
    %v1970 = vld [vmem:[%s1969] sm:$0x3]
    %s1971 = scalar_lea.vmem [#allocation0], 30
    %v1972 = vld [vmem:[%s1971] sm:$0xc]
    %vm1973 = vcmask 1043458
    %v1974 = vsel %vm1973, %v1972, %v1970
    %s1975 = scalar_lea.vmem [#allocation0], 52
    %v1976 = vld [vmem:[%s1975] sm:$0x30]
    %vm1977 = vcmask 1045508
    %v1978 = vsel %vm1977, %v1976, %v1974
    %s1979 = scalar_lea.vmem [#allocation0], 74
    %v1980 = vld [vmem:[%s1979] sm:$0xc0]
    %vm1981 = vcmask 1047558
    %v1982 = vsel %vm1981, %v1980, %v1978
    %1983 = vrot.lane.b32.xlu0 %v1982, 52
    %v1984 = vpop.permute.xlu0 %1983
    %vm1985 = vcmask 48128
    %s1986 = scalar_lea.vmem %s1, 34
    %1987 = vst.msk [vmem:[%s1986] sm:$0x1] %vm1985, %v1984
    %s1988 = scalar_lea.vmem %s1, 417
    %1989 = vst.msk [vmem:[%s1988] sm:$0x2] %vm1985, %v1984
    %s1990 = scalar_lea.vmem %s1, 96
    %1991 = vst.msk [vmem:[%s1990] sm:$0x4] %vm1985, %v1984
    %s1992 = scalar_lea.vmem %s1, 479
    %1993 = vst.msk [vmem:[%s1992] sm:$0x8] %vm1985, %v1984
    %s1994 = scalar_lea.vmem %s1, 158
    %1995 = vst.msk [vmem:[%s1994] sm:$0x10] %vm1985, %v1984
    %s1996 = scalar_lea.vmem %s1, 541
    %1997 = vst.msk [vmem:[%s1996] sm:$0x20] %vm1985, %v1984
    %s1998 = scalar_lea.vmem %s1, 220
    %1999 = vst.msk [vmem:[%s1998] sm:$0x40] %vm1985, %v1984
    %s2000 = scalar_lea.vmem %s1, 603
    %2001 = vst.msk [vmem:[%s2000] sm:$0x80] %vm1985, %v1984
    %s2002 = scalar_lea.vmem [#allocation0], 104
    %v2003 = vld [vmem:[%s2002] sm:$0x3]
    %s2004 = scalar_lea.vmem [#allocation0], 126
    %v2005 = vld [vmem:[%s2004] sm:$0xc]
    %vm2006 = vcmask 1043458
    %v2007 = vsel %vm2006, %v2005, %v2003
    %2008 = vrot.lane.b32.xlu0 %v2007, 52
    %v2009 = vpop.permute.xlu0 %2008
    %vm2010 = vcmask 48128
    %s2011 = scalar_lea.vmem %s1, 290
    %2012 = vst.msk [vmem:[%s2011] sm:$0x1] %vm2010, %v2009
    %s2013 = scalar_lea.vmem %s1, 673
    %2014 = vst.msk [vmem:[%s2013] sm:$0x2] %vm2010, %v2009
    %s2015 = scalar_lea.vmem %s1, 352
    %2016 = vst.msk [vmem:[%s2015] sm:$0x4] %vm2010, %v2009
    %s2017 = scalar_lea.vmem %s1, 735
    %2018 = vst.msk [vmem:[%s2017] sm:$0x8] %vm2010, %v2009
    %v2019 = vld [vmem:[#allocation0] sm:$0x3]
    %s2020 = scalar_lea.vmem [#allocation0], 22
    %v2021 = vld [vmem:[%s2020] sm:$0xc]
    %vm2022 = vcmask 1043458
    %v2023 = vsel %vm2022, %v2021, %v2019
    %s2024 = scalar_lea.vmem [#allocation0], 44
    %v2025 = vld [vmem:[%s2024] sm:$0x30]
    %vm2026 = vcmask 1045508
    %v2027 = vsel %vm2026, %v2025, %v2023
    %s2028 = scalar_lea.vmem [#allocation0], 66
    %v2029 = vld [vmem:[%s2028] sm:$0xc0]
    %vm2030 = vcmask 1047558
    %v2031 = vsel %vm2030, %v2029, %v2027
    %2032 = vrot.lane.b32.xlu0 %v2031, 50
    %v2033 = vpop.permute.xlu0 %2032
    %vm2034 = vcmask 48128
    %s2035 = scalar_lea.vmem %s1, 13
    %2036 = vst.msk [vmem:[%s2035] sm:$0x1] %vm2034, %v2033
    %s2037 = scalar_lea.vmem %s1, 396
    %2038 = vst.msk [vmem:[%s2037] sm:$0x2] %vm2034, %v2033
    %s2039 = scalar_lea.vmem %s1, 75
    %2040 = vst.msk [vmem:[%s2039] sm:$0x4] %vm2034, %v2033
    %s2041 = scalar_lea.vmem %s1, 458
    %2042 = vst.msk [vmem:[%s2041] sm:$0x8] %vm2034, %v2033
    %s2043 = scalar_lea.vmem %s1, 137
    %2044 = vst.msk [vmem:[%s2043] sm:$0x10] %vm2034, %v2033
    %s2045 = scalar_lea.vmem %s1, 520
    %2046 = vst.msk [vmem:[%s2045] sm:$0x20] %vm2034, %v2033
    %s2047 = scalar_lea.vmem %s1, 199
    %2048 = vst.msk [vmem:[%s2047] sm:$0x40] %vm2034, %v2033
    %s2049 = scalar_lea.vmem %s1, 582
    %2050 = vst.msk [vmem:[%s2049] sm:$0x80] %vm2034, %v2033
    %s2051 = scalar_lea.vmem [#allocation0], 96
    %v2052 = vld [vmem:[%s2051] sm:$0x3]
    %s2053 = scalar_lea.vmem [#allocation0], 118
    %v2054 = vld [vmem:[%s2053] sm:$0xc]
    %vm2055 = vcmask 1043458
    %v2056 = vsel %vm2055, %v2054, %v2052
    %2057 = vrot.lane.b32.xlu0 %v2056, 50
    %v2058 = vpop.permute.xlu0 %2057
    %vm2059 = vcmask 48128
    %s2060 = scalar_lea.vmem %s1, 269
    %2061 = vst.msk [vmem:[%s2060] sm:$0x1] %vm2059, %v2058
    %s2062 = scalar_lea.vmem %s1, 652
    %2063 = vst.msk [vmem:[%s2062] sm:$0x2] %vm2059, %v2058
    %s2064 = scalar_lea.vmem %s1, 331
    %2065 = vst.msk [vmem:[%s2064] sm:$0x4] %vm2059, %v2058
    %s2066 = scalar_lea.vmem %s1, 714
    %2067 = vst.msk [vmem:[%s2066] sm:$0x8] %vm2059, %v2058
    %s2068 = scalar_lea.vmem [#allocation0], 16
    %v2069 = vld [vmem:[%s2068] sm:$0x3]
    %s2070 = scalar_lea.vmem [#allocation0], 38
    %v2071 = vld [vmem:[%s2070] sm:$0xc]
    %vm2072 = vcmask 1043458
    %v2073 = vsel %vm2072, %v2071, %v2069
    %s2074 = scalar_lea.vmem [#allocation0], 60
    %v2075 = vld [vmem:[%s2074] sm:$0x30]
    %vm2076 = vcmask 1045508
    %v2077 = vsel %vm2076, %v2075, %v2073
    %s2078 = scalar_lea.vmem [#allocation0], 82
    %v2079 = vld [vmem:[%s2078] sm:$0xc0]
    %vm2080 = vcmask 1047558
    %v2081 = vsel %vm2080, %v2079, %v2077
    %2082 = vrot.lane.b32.xlu0 %v2081, 48
    %v2083 = vpop.permute.xlu0 %2082
    %vm2084 = vcmask 48128
    %s2085 = scalar_lea.vmem %s1, 56
    %2086 = vst.msk [vmem:[%s2085] sm:$0x1] %vm2084, %v2083
    %s2087 = scalar_lea.vmem %s1, 439
    %2088 = vst.msk [vmem:[%s2087] sm:$0x2] %vm2084, %v2083
    %s2089 = scalar_lea.vmem %s1, 118
    %2090 = vst.msk [vmem:[%s2089] sm:$0x4] %vm2084, %v2083
    %s2091 = scalar_lea.vmem %s1, 501
    %2092 = vst.msk [vmem:[%s2091] sm:$0x8] %vm2084, %v2083
    %s2093 = scalar_lea.vmem %s1, 180
    %2094 = vst.msk [vmem:[%s2093] sm:$0x10] %vm2084, %v2083
    %s2095 = scalar_lea.vmem %s1, 563
    %2096 = vst.msk [vmem:[%s2095] sm:$0x20] %vm2084, %v2083
    %s2097 = scalar_lea.vmem %s1, 242
    %2098 = vst.msk [vmem:[%s2097] sm:$0x40] %vm2084, %v2083
    %s2099 = scalar_lea.vmem %s1, 625
    %2100 = vst.msk [vmem:[%s2099] sm:$0x80] %vm2084, %v2083
    %s2101 = scalar_lea.vmem [#allocation0], 112
    %v2102 = vld [vmem:[%s2101] sm:$0x3]
    %s2103 = scalar_lea.vmem [#allocation0], 134
    %v2104 = vld [vmem:[%s2103] sm:$0xc]
    %vm2105 = vcmask 1043458
    %v2106 = vsel %vm2105, %v2104, %v2102
    %2107 = vrot.lane.b32.xlu0 %v2106, 48
    %v2108 = vpop.permute.xlu0 %2107
    %vm2109 = vcmask 48128
    %s2110 = scalar_lea.vmem %s1, 312
    %2111 = vst.msk [vmem:[%s2110] sm:$0x1] %vm2109, %v2108
    %s2112 = scalar_lea.vmem %s1, 695
    %2113 = vst.msk [vmem:[%s2112] sm:$0x2] %vm2109, %v2108
    %s2114 = scalar_lea.vmem %s1, 374
    %2115 = vst.msk [vmem:[%s2114] sm:$0x4] %vm2109, %v2108
    %s2116 = scalar_lea.vmem %s1, 757
    %2117 = vst.msk [vmem:[%s2116] sm:$0x8] %vm2109, %v2108
    %s2118 = scalar_lea.vmem [#allocation0], 8
    %v2119 = vld [vmem:[%s2118] sm:$0x3]
    %s2120 = scalar_lea.vmem [#allocation0], 30
    %v2121 = vld [vmem:[%s2120] sm:$0xc]
    %vm2122 = vcmask 1043458
    %v2123 = vsel %vm2122, %v2121, %v2119
    %s2124 = scalar_lea.vmem [#allocation0], 52
    %v2125 = vld [vmem:[%s2124] sm:$0x30]
    %vm2126 = vcmask 1045508
    %v2127 = vsel %vm2126, %v2125, %v2123
    %s2128 = scalar_lea.vmem [#allocation0], 74
    %v2129 = vld [vmem:[%s2128] sm:$0xc0]
    %vm2130 = vcmask 1047558
    %v2131 = vsel %vm2130, %v2129, %v2127
    %2132 = vrot.lane.b32.xlu0 %v2131, 46
    %v2133 = vpop.permute.xlu0 %2132
    %vm2134 = vcmask 48128
    %s2135 = scalar_lea.vmem %s1, 35
    %2136 = vst.msk [vmem:[%s2135] sm:$0x1] %vm2134, %v2133
    %s2137 = scalar_lea.vmem %s1, 418
    %2138 = vst.msk [vmem:[%s2137] sm:$0x2] %vm2134, %v2133
    %s2139 = scalar_lea.vmem %s1, 97
    %2140 = vst.msk [vmem:[%s2139] sm:$0x4] %vm2134, %v2133
    %s2141 = scalar_lea.vmem %s1, 480
    %2142 = vst.msk [vmem:[%s2141] sm:$0x8] %vm2134, %v2133
    %s2143 = scalar_lea.vmem %s1, 159
    %2144 = vst.msk [vmem:[%s2143] sm:$0x10] %vm2134, %v2133
    %s2145 = scalar_lea.vmem %s1, 542
    %2146 = vst.msk [vmem:[%s2145] sm:$0x20] %vm2134, %v2133
    %s2147 = scalar_lea.vmem %s1, 221
    %2148 = vst.msk [vmem:[%s2147] sm:$0x40] %vm2134, %v2133
    %s2149 = scalar_lea.vmem %s1, 604
    %2150 = vst.msk [vmem:[%s2149] sm:$0x80] %vm2134, %v2133
    %s2151 = scalar_lea.vmem [#allocation0], 104
    %v2152 = vld [vmem:[%s2151] sm:$0x3]
    %s2153 = scalar_lea.vmem [#allocation0], 126
    %v2154 = vld [vmem:[%s2153] sm:$0xc]
    %vm2155 = vcmask 1043458
    %v2156 = vsel %vm2155, %v2154, %v2152
    %2157 = vrot.lane.b32.xlu0 %v2156, 46
    %v2158 = vpop.permute.xlu0 %2157
    %vm2159 = vcmask 48128
    %s2160 = scalar_lea.vmem %s1, 291
    %2161 = vst.msk [vmem:[%s2160] sm:$0x1] %vm2159, %v2158
    %s2162 = scalar_lea.vmem %s1, 674
    %2163 = vst.msk [vmem:[%s2162] sm:$0x2] %vm2159, %v2158
    %s2164 = scalar_lea.vmem %s1, 353
    %2165 = vst.msk [vmem:[%s2164] sm:$0x4] %vm2159, %v2158
    %s2166 = scalar_lea.vmem %s1, 736
    %2167 = vst.msk [vmem:[%s2166] sm:$0x8] %vm2159, %v2158
    %v2168 = vld [vmem:[#allocation0] sm:$0x3]
    %s2169 = scalar_lea.vmem [#allocation0], 22
    %v2170 = vld [vmem:[%s2169] sm:$0xc]
    %vm2171 = vcmask 1043458
    %v2172 = vsel %vm2171, %v2170, %v2168
    %s2173 = scalar_lea.vmem [#allocation0], 44
    %v2174 = vld [vmem:[%s2173] sm:$0x30]
    %vm2175 = vcmask 1045508
    %v2176 = vsel %vm2175, %v2174, %v2172
    %s2177 = scalar_lea.vmem [#allocation0], 66
    %v2178 = vld [vmem:[%s2177] sm:$0xc0]
    %vm2179 = vcmask 1047558
    %v2180 = vsel %vm2179, %v2178, %v2176
    %2181 = vrot.lane.b32.xlu0 %v2180, 44
    %v2182 = vpop.permute.xlu0 %2181
    %vm2183 = vcmask 48128
    %s2184 = scalar_lea.vmem %s1, 14
    %2185 = vst.msk [vmem:[%s2184] sm:$0x1] %vm2183, %v2182
    %s2186 = scalar_lea.vmem %s1, 397
    %2187 = vst.msk [vmem:[%s2186] sm:$0x2] %vm2183, %v2182
    %s2188 = scalar_lea.vmem %s1, 76
    %2189 = vst.msk [vmem:[%s2188] sm:$0x4] %vm2183, %v2182
    %s2190 = scalar_lea.vmem %s1, 459
    %2191 = vst.msk [vmem:[%s2190] sm:$0x8] %vm2183, %v2182
    %s2192 = scalar_lea.vmem %s1, 138
    %2193 = vst.msk [vmem:[%s2192] sm:$0x10] %vm2183, %v2182
    %s2194 = scalar_lea.vmem %s1, 521
    %2195 = vst.msk [vmem:[%s2194] sm:$0x20] %vm2183, %v2182
    %s2196 = scalar_lea.vmem %s1, 200
    %2197 = vst.msk [vmem:[%s2196] sm:$0x40] %vm2183, %v2182
    %s2198 = scalar_lea.vmem %s1, 583
    %2199 = vst.msk [vmem:[%s2198] sm:$0x80] %vm2183, %v2182
    %s2200 = scalar_lea.vmem [#allocation0], 96
    %v2201 = vld [vmem:[%s2200] sm:$0x3]
    %s2202 = scalar_lea.vmem [#allocation0], 118
    %v2203 = vld [vmem:[%s2202] sm:$0xc]
    %vm2204 = vcmask 1043458
    %v2205 = vsel %vm2204, %v2203, %v2201
    %2206 = vrot.lane.b32.xlu0 %v2205, 44
    %v2207 = vpop.permute.xlu0 %2206
    %vm2208 = vcmask 48128
    %s2209 = scalar_lea.vmem %s1, 270
    %2210 = vst.msk [vmem:[%s2209] sm:$0x1] %vm2208, %v2207
    %s2211 = scalar_lea.vmem %s1, 653
    %2212 = vst.msk [vmem:[%s2211] sm:$0x2] %vm2208, %v2207
    %s2213 = scalar_lea.vmem %s1, 332
    %2214 = vst.msk [vmem:[%s2213] sm:$0x4] %vm2208, %v2207
    %s2215 = scalar_lea.vmem %s1, 715
    %2216 = vst.msk [vmem:[%s2215] sm:$0x8] %vm2208, %v2207
    %s2217 = scalar_lea.vmem [#allocation0], 16
    %v2218 = vld [vmem:[%s2217] sm:$0x3]
    %s2219 = scalar_lea.vmem [#allocation0], 38
    %v2220 = vld [vmem:[%s2219] sm:$0xc]
    %vm2221 = vcmask 1043458
    %v2222 = vsel %vm2221, %v2220, %v2218
    %s2223 = scalar_lea.vmem [#allocation0], 60
    %v2224 = vld [vmem:[%s2223] sm:$0x30]
    %vm2225 = vcmask 1045508
    %v2226 = vsel %vm2225, %v2224, %v2222
    %s2227 = scalar_lea.vmem [#allocation0], 82
    %v2228 = vld [vmem:[%s2227] sm:$0xc0]
    %vm2229 = vcmask 1047558
    %v2230 = vsel %vm2229, %v2228, %v2226
    %2231 = vrot.lane.b32.xlu0 %v2230, 42
    %v2232 = vpop.permute.xlu0 %2231
    %vm2233 = vcmask 48128
    %s2234 = scalar_lea.vmem %s1, 57
    %2235 = vst.msk [vmem:[%s2234] sm:$0x1] %vm2233, %v2232
    %s2236 = scalar_lea.vmem %s1, 440
    %2237 = vst.msk [vmem:[%s2236] sm:$0x2] %vm2233, %v2232
    %s2238 = scalar_lea.vmem %s1, 119
    %2239 = vst.msk [vmem:[%s2238] sm:$0x4] %vm2233, %v2232
    %s2240 = scalar_lea.vmem %s1, 502
    %2241 = vst.msk [vmem:[%s2240] sm:$0x8] %vm2233, %v2232
    %s2242 = scalar_lea.vmem %s1, 181
    %2243 = vst.msk [vmem:[%s2242] sm:$0x10] %vm2233, %v2232
    %s2244 = scalar_lea.vmem %s1, 564
    %2245 = vst.msk [vmem:[%s2244] sm:$0x20] %vm2233, %v2232
    %s2246 = scalar_lea.vmem %s1, 243
    %2247 = vst.msk [vmem:[%s2246] sm:$0x40] %vm2233, %v2232
    %s2248 = scalar_lea.vmem %s1, 626
    %2249 = vst.msk [vmem:[%s2248] sm:$0x80] %vm2233, %v2232
    %s2250 = scalar_lea.vmem [#allocation0], 112
    %v2251 = vld [vmem:[%s2250] sm:$0x3]
    %s2252 = scalar_lea.vmem [#allocation0], 134
    %v2253 = vld [vmem:[%s2252] sm:$0xc]
    %vm2254 = vcmask 1043458
    %v2255 = vsel %vm2254, %v2253, %v2251
    %2256 = vrot.lane.b32.xlu0 %v2255, 42
    %v2257 = vpop.permute.xlu0 %2256
    %vm2258 = vcmask 48128
    %s2259 = scalar_lea.vmem %s1, 313
    %2260 = vst.msk [vmem:[%s2259] sm:$0x1] %vm2258, %v2257
    %s2261 = scalar_lea.vmem %s1, 696
    %2262 = vst.msk [vmem:[%s2261] sm:$0x2] %vm2258, %v2257
    %s2263 = scalar_lea.vmem %s1, 375
    %2264 = vst.msk [vmem:[%s2263] sm:$0x4] %vm2258, %v2257
    %s2265 = scalar_lea.vmem %s1, 758
    %2266 = vst.msk [vmem:[%s2265] sm:$0x8] %vm2258, %v2257
    %s2267 = scalar_lea.vmem [#allocation0], 8
    %v2268 = vld [vmem:[%s2267] sm:$0x3]
    %s2269 = scalar_lea.vmem [#allocation0], 30
    %v2270 = vld [vmem:[%s2269] sm:$0xc]
    %vm2271 = vcmask 1043458
    %v2272 = vsel %vm2271, %v2270, %v2268
    %s2273 = scalar_lea.vmem [#allocation0], 52
    %v2274 = vld [vmem:[%s2273] sm:$0x30]
    %vm2275 = vcmask 1045508
    %v2276 = vsel %vm2275, %v2274, %v2272
    %s2277 = scalar_lea.vmem [#allocation0], 74
    %v2278 = vld [vmem:[%s2277] sm:$0xc0]
    %vm2279 = vcmask 1047558
    %v2280 = vsel %vm2279, %v2278, %v2276
    %2281 = vrot.lane.b32.xlu0 %v2280, 40
    %v2282 = vpop.permute.xlu0 %2281
    %vm2283 = vcmask 48128
    %s2284 = scalar_lea.vmem %s1, 36
    %2285 = vst.msk [vmem:[%s2284] sm:$0x1] %vm2283, %v2282
    %s2286 = scalar_lea.vmem %s1, 419
    %2287 = vst.msk [vmem:[%s2286] sm:$0x2] %vm2283, %v2282
    %s2288 = scalar_lea.vmem %s1, 98
    %2289 = vst.msk [vmem:[%s2288] sm:$0x4] %vm2283, %v2282
    %s2290 = scalar_lea.vmem %s1, 481
    %2291 = vst.msk [vmem:[%s2290] sm:$0x8] %vm2283, %v2282
    %s2292 = scalar_lea.vmem %s1, 160
    %2293 = vst.msk [vmem:[%s2292] sm:$0x10] %vm2283, %v2282
    %s2294 = scalar_lea.vmem %s1, 543
    %2295 = vst.msk [vmem:[%s2294] sm:$0x20] %vm2283, %v2282
    %s2296 = scalar_lea.vmem %s1, 222
    %2297 = vst.msk [vmem:[%s2296] sm:$0x40] %vm2283, %v2282
    %s2298 = scalar_lea.vmem %s1, 605
    %2299 = vst.msk [vmem:[%s2298] sm:$0x80] %vm2283, %v2282
    %s2300 = scalar_lea.vmem [#allocation0], 104
    %v2301 = vld [vmem:[%s2300] sm:$0x3]
    %s2302 = scalar_lea.vmem [#allocation0], 126
    %v2303 = vld [vmem:[%s2302] sm:$0xc]
    %vm2304 = vcmask 1043458
    %v2305 = vsel %vm2304, %v2303, %v2301
    %2306 = vrot.lane.b32.xlu0 %v2305, 40
    %v2307 = vpop.permute.xlu0 %2306
    %vm2308 = vcmask 48128
    %s2309 = scalar_lea.vmem %s1, 292
    %2310 = vst.msk [vmem:[%s2309] sm:$0x1] %vm2308, %v2307
    %s2311 = scalar_lea.vmem %s1, 675
    %2312 = vst.msk [vmem:[%s2311] sm:$0x2] %vm2308, %v2307
    %s2313 = scalar_lea.vmem %s1, 354
    %2314 = vst.msk [vmem:[%s2313] sm:$0x4] %vm2308, %v2307
    %s2315 = scalar_lea.vmem %s1, 737
    %2316 = vst.msk [vmem:[%s2315] sm:$0x8] %vm2308, %v2307
    %v2317 = vld [vmem:[#allocation0] sm:$0x3]
    %s2318 = scalar_lea.vmem [#allocation0], 22
    %v2319 = vld [vmem:[%s2318] sm:$0xc]
    %vm2320 = vcmask 1043458
    %v2321 = vsel %vm2320, %v2319, %v2317
    %s2322 = scalar_lea.vmem [#allocation0], 44
    %v2323 = vld [vmem:[%s2322] sm:$0x30]
    %vm2324 = vcmask 1045508
    %v2325 = vsel %vm2324, %v2323, %v2321
    %s2326 = scalar_lea.vmem [#allocation0], 66
    %v2327 = vld [vmem:[%s2326] sm:$0xc0]
    %vm2328 = vcmask 1047558
    %v2329 = vsel %vm2328, %v2327, %v2325
    %2330 = vrot.lane.b32.xlu0 %v2329, 38
    %v2331 = vpop.permute.xlu0 %2330
    %vm2332 = vcmask 48128
    %s2333 = scalar_lea.vmem %s1, 15
    %2334 = vst.msk [vmem:[%s2333] sm:$0x1] %vm2332, %v2331
    %s2335 = scalar_lea.vmem %s1, 398
    %2336 = vst.msk [vmem:[%s2335] sm:$0x2] %vm2332, %v2331
    %s2337 = scalar_lea.vmem %s1, 77
    %2338 = vst.msk [vmem:[%s2337] sm:$0x4] %vm2332, %v2331
    %s2339 = scalar_lea.vmem %s1, 460
    %2340 = vst.msk [vmem:[%s2339] sm:$0x8] %vm2332, %v2331
    %s2341 = scalar_lea.vmem %s1, 139
    %2342 = vst.msk [vmem:[%s2341] sm:$0x10] %vm2332, %v2331
    %s2343 = scalar_lea.vmem %s1, 522
    %2344 = vst.msk [vmem:[%s2343] sm:$0x20] %vm2332, %v2331
    %s2345 = scalar_lea.vmem %s1, 201
    %2346 = vst.msk [vmem:[%s2345] sm:$0x40] %vm2332, %v2331
    %s2347 = scalar_lea.vmem %s1, 584
    %2348 = vst.msk [vmem:[%s2347] sm:$0x80] %vm2332, %v2331
    %s2349 = scalar_lea.vmem [#allocation0], 96
    %v2350 = vld [vmem:[%s2349] sm:$0x3]
    %s2351 = scalar_lea.vmem [#allocation0], 118
    %v2352 = vld [vmem:[%s2351] sm:$0xc]
    %vm2353 = vcmask 1043458
    %v2354 = vsel %vm2353, %v2352, %v2350
    %2355 = vrot.lane.b32.xlu0 %v2354, 38
    %v2356 = vpop.permute.xlu0 %2355
    %vm2357 = vcmask 48128
    %s2358 = scalar_lea.vmem %s1, 271
    %2359 = vst.msk [vmem:[%s2358] sm:$0x1] %vm2357, %v2356
    %s2360 = scalar_lea.vmem %s1, 654
    %2361 = vst.msk [vmem:[%s2360] sm:$0x2] %vm2357, %v2356
    %s2362 = scalar_lea.vmem %s1, 333
    %2363 = vst.msk [vmem:[%s2362] sm:$0x4] %vm2357, %v2356
    %s2364 = scalar_lea.vmem %s1, 716
    %2365 = vst.msk [vmem:[%s2364] sm:$0x8] %vm2357, %v2356
    %s2366 = scalar_lea.vmem [#allocation0], 16
    %v2367 = vld [vmem:[%s2366] sm:$0x3]
    %s2368 = scalar_lea.vmem [#allocation0], 38
    %v2369 = vld [vmem:[%s2368] sm:$0xc]
    %vm2370 = vcmask 1043458
    %v2371 = vsel %vm2370, %v2369, %v2367
    %s2372 = scalar_lea.vmem [#allocation0], 60
    %v2373 = vld [vmem:[%s2372] sm:$0x30]
    %vm2374 = vcmask 1045508
    %v2375 = vsel %vm2374, %v2373, %v2371
    %s2376 = scalar_lea.vmem [#allocation0], 82
    %v2377 = vld [vmem:[%s2376] sm:$0xc0]
    %vm2378 = vcmask 1047558
    %v2379 = vsel %vm2378, %v2377, %v2375
    %2380 = vrot.lane.b32.xlu0 %v2379, 36
    %v2381 = vpop.permute.xlu0 %2380
    %vm2382 = vcmask 48128
    %s2383 = scalar_lea.vmem %s1, 58
    %2384 = vst.msk [vmem:[%s2383] sm:$0x1] %vm2382, %v2381
    %s2385 = scalar_lea.vmem %s1, 441
    %2386 = vst.msk [vmem:[%s2385] sm:$0x2] %vm2382, %v2381
    %s2387 = scalar_lea.vmem %s1, 120
    %2388 = vst.msk [vmem:[%s2387] sm:$0x4] %vm2382, %v2381
    %s2389 = scalar_lea.vmem %s1, 503
    %2390 = vst.msk [vmem:[%s2389] sm:$0x8] %vm2382, %v2381
    %s2391 = scalar_lea.vmem %s1, 182
    %2392 = vst.msk [vmem:[%s2391] sm:$0x10] %vm2382, %v2381
    %s2393 = scalar_lea.vmem %s1, 565
    %2394 = vst.msk [vmem:[%s2393] sm:$0x20] %vm2382, %v2381
    %s2395 = scalar_lea.vmem %s1, 244
    %2396 = vst.msk [vmem:[%s2395] sm:$0x40] %vm2382, %v2381
    %s2397 = scalar_lea.vmem %s1, 627
    %2398 = vst.msk [vmem:[%s2397] sm:$0x80] %vm2382, %v2381
    %s2399 = scalar_lea.vmem [#allocation0], 112
    %v2400 = vld [vmem:[%s2399] sm:$0x3]
    %s2401 = scalar_lea.vmem [#allocation0], 134
    %v2402 = vld [vmem:[%s2401] sm:$0xc]
    %vm2403 = vcmask 1043458
    %v2404 = vsel %vm2403, %v2402, %v2400
    %2405 = vrot.lane.b32.xlu0 %v2404, 36
    %v2406 = vpop.permute.xlu0 %2405
    %vm2407 = vcmask 48128
    %s2408 = scalar_lea.vmem %s1, 314
    %2409 = vst.msk [vmem:[%s2408] sm:$0x1] %vm2407, %v2406
    %s2410 = scalar_lea.vmem %s1, 697
    %2411 = vst.msk [vmem:[%s2410] sm:$0x2] %vm2407, %v2406
    %s2412 = scalar_lea.vmem %s1, 376
    %2413 = vst.msk [vmem:[%s2412] sm:$0x4] %vm2407, %v2406
    %s2414 = scalar_lea.vmem %s1, 759
    %2415 = vst.msk [vmem:[%s2414] sm:$0x8] %vm2407, %v2406
    %s2416 = scalar_lea.vmem [#allocation0], 8
    %v2417 = vld [vmem:[%s2416] sm:$0x3]
    %s2418 = scalar_lea.vmem [#allocation0], 30
    %v2419 = vld [vmem:[%s2418] sm:$0xc]
    %vm2420 = vcmask 1043458
    %v2421 = vsel %vm2420, %v2419, %v2417
    %s2422 = scalar_lea.vmem [#allocation0], 52
    %v2423 = vld [vmem:[%s2422] sm:$0x30]
    %vm2424 = vcmask 1045508
    %v2425 = vsel %vm2424, %v2423, %v2421
    %s2426 = scalar_lea.vmem [#allocation0], 74
    %v2427 = vld [vmem:[%s2426] sm:$0xc0]
    %vm2428 = vcmask 1047558
    %v2429 = vsel %vm2428, %v2427, %v2425
    %2430 = vrot.lane.b32.xlu0 %v2429, 34
    %v2431 = vpop.permute.xlu0 %2430
    %vm2432 = vcmask 48128
    %s2433 = scalar_lea.vmem %s1, 37
    %2434 = vst.msk [vmem:[%s2433] sm:$0x1] %vm2432, %v2431
    %s2435 = scalar_lea.vmem %s1, 420
    %2436 = vst.msk [vmem:[%s2435] sm:$0x2] %vm2432, %v2431
    %s2437 = scalar_lea.vmem %s1, 99
    %2438 = vst.msk [vmem:[%s2437] sm:$0x4] %vm2432, %v2431
    %s2439 = scalar_lea.vmem %s1, 482
    %2440 = vst.msk [vmem:[%s2439] sm:$0x8] %vm2432, %v2431
    %s2441 = scalar_lea.vmem %s1, 161
    %2442 = vst.msk [vmem:[%s2441] sm:$0x10] %vm2432, %v2431
    %s2443 = scalar_lea.vmem %s1, 544
    %2444 = vst.msk [vmem:[%s2443] sm:$0x20] %vm2432, %v2431
    %s2445 = scalar_lea.vmem %s1, 223
    %2446 = vst.msk [vmem:[%s2445] sm:$0x40] %vm2432, %v2431
    %s2447 = scalar_lea.vmem %s1, 606
    %2448 = vst.msk [vmem:[%s2447] sm:$0x80] %vm2432, %v2431
    %s2449 = scalar_lea.vmem [#allocation0], 104
    %v2450 = vld [vmem:[%s2449] sm:$0x3]
    %s2451 = scalar_lea.vmem [#allocation0], 126
    %v2452 = vld [vmem:[%s2451] sm:$0xc]
    %vm2453 = vcmask 1043458
    %v2454 = vsel %vm2453, %v2452, %v2450
    %2455 = vrot.lane.b32.xlu0 %v2454, 34
    %v2456 = vpop.permute.xlu0 %2455
    %vm2457 = vcmask 48128
    %s2458 = scalar_lea.vmem %s1, 293
    %2459 = vst.msk [vmem:[%s2458] sm:$0x1] %vm2457, %v2456
    %s2460 = scalar_lea.vmem %s1, 676
    %2461 = vst.msk [vmem:[%s2460] sm:$0x2] %vm2457, %v2456
    %s2462 = scalar_lea.vmem %s1, 355
    %2463 = vst.msk [vmem:[%s2462] sm:$0x4] %vm2457, %v2456
    %s2464 = scalar_lea.vmem %s1, 738
    %2465 = vst.msk [vmem:[%s2464] sm:$0x8] %vm2457, %v2456
    %v2466 = vld [vmem:[#allocation0] sm:$0x3]
    %s2467 = scalar_lea.vmem [#allocation0], 22
    %v2468 = vld [vmem:[%s2467] sm:$0xc]
    %vm2469 = vcmask 1043458
    %v2470 = vsel %vm2469, %v2468, %v2466
    %s2471 = scalar_lea.vmem [#allocation0], 44
    %v2472 = vld [vmem:[%s2471] sm:$0x30]
    %vm2473 = vcmask 1045508
    %v2474 = vsel %vm2473, %v2472, %v2470
    %s2475 = scalar_lea.vmem [#allocation0], 66
    %v2476 = vld [vmem:[%s2475] sm:$0xc0]
    %vm2477 = vcmask 1047558
    %v2478 = vsel %vm2477, %v2476, %v2474
    %2479 = vrot.lane.b32.xlu0 %v2478, 32
    %v2480 = vpop.permute.xlu0 %2479
    %vm2481 = vcmask 48128
    %s2482 = scalar_lea.vmem %s1, 16
    %2483 = vst.msk [vmem:[%s2482] sm:$0x1] %vm2481, %v2480
    %s2484 = scalar_lea.vmem %s1, 399
    %2485 = vst.msk [vmem:[%s2484] sm:$0x2] %vm2481, %v2480
    %s2486 = scalar_lea.vmem %s1, 78
    %2487 = vst.msk [vmem:[%s2486] sm:$0x4] %vm2481, %v2480
    %s2488 = scalar_lea.vmem %s1, 461
    %2489 = vst.msk [vmem:[%s2488] sm:$0x8] %vm2481, %v2480
    %s2490 = scalar_lea.vmem %s1, 140
    %2491 = vst.msk [vmem:[%s2490] sm:$0x10] %vm2481, %v2480
    %s2492 = scalar_lea.vmem %s1, 523
    %2493 = vst.msk [vmem:[%s2492] sm:$0x20] %vm2481, %v2480
    %s2494 = scalar_lea.vmem %s1, 202
    %2495 = vst.msk [vmem:[%s2494] sm:$0x40] %vm2481, %v2480
    %s2496 = scalar_lea.vmem %s1, 585
    %2497 = vst.msk [vmem:[%s2496] sm:$0x80] %vm2481, %v2480
    %s2498 = scalar_lea.vmem [#allocation0], 96
    %v2499 = vld [vmem:[%s2498] sm:$0x3]
    %s2500 = scalar_lea.vmem [#allocation0], 118
    %v2501 = vld [vmem:[%s2500] sm:$0xc]
    %vm2502 = vcmask 1043458
    %v2503 = vsel %vm2502, %v2501, %v2499
    %2504 = vrot.lane.b32.xlu0 %v2503, 32
    %v2505 = vpop.permute.xlu0 %2504
    %vm2506 = vcmask 48128
    %s2507 = scalar_lea.vmem %s1, 272
    %2508 = vst.msk [vmem:[%s2507] sm:$0x1] %vm2506, %v2505
    %s2509 = scalar_lea.vmem %s1, 655
    %2510 = vst.msk [vmem:[%s2509] sm:$0x2] %vm2506, %v2505
    %s2511 = scalar_lea.vmem %s1, 334
    %2512 = vst.msk [vmem:[%s2511] sm:$0x4] %vm2506, %v2505
    %s2513 = scalar_lea.vmem %s1, 717
    %2514 = vst.msk [vmem:[%s2513] sm:$0x8] %vm2506, %v2505
    %s2515 = scalar_lea.vmem [#allocation0], 16
    %v2516 = vld [vmem:[%s2515] sm:$0x3]
    %s2517 = scalar_lea.vmem [#allocation0], 38
    %v2518 = vld [vmem:[%s2517] sm:$0xc]
    %vm2519 = vcmask 1043458
    %v2520 = vsel %vm2519, %v2518, %v2516
    %s2521 = scalar_lea.vmem [#allocation0], 60
    %v2522 = vld [vmem:[%s2521] sm:$0x30]
    %vm2523 = vcmask 1045508
    %v2524 = vsel %vm2523, %v2522, %v2520
    %s2525 = scalar_lea.vmem [#allocation0], 82
    %v2526 = vld [vmem:[%s2525] sm:$0xc0]
    %vm2527 = vcmask 1047558
    %v2528 = vsel %vm2527, %v2526, %v2524
    %2529 = vrot.lane.b32.xlu0 %v2528, 30
    %v2530 = vpop.permute.xlu0 %2529
    %vm2531 = vcmask 48128
    %s2532 = scalar_lea.vmem %s1, 59
    %2533 = vst.msk [vmem:[%s2532] sm:$0x1] %vm2531, %v2530
    %s2534 = scalar_lea.vmem %s1, 442
    %2535 = vst.msk [vmem:[%s2534] sm:$0x2] %vm2531, %v2530
    %s2536 = scalar_lea.vmem %s1, 121
    %2537 = vst.msk [vmem:[%s2536] sm:$0x4] %vm2531, %v2530
    %s2538 = scalar_lea.vmem %s1, 504
    %2539 = vst.msk [vmem:[%s2538] sm:$0x8] %vm2531, %v2530
    %s2540 = scalar_lea.vmem %s1, 183
    %2541 = vst.msk [vmem:[%s2540] sm:$0x10] %vm2531, %v2530
    %s2542 = scalar_lea.vmem %s1, 566
    %2543 = vst.msk [vmem:[%s2542] sm:$0x20] %vm2531, %v2530
    %s2544 = scalar_lea.vmem %s1, 245
    %2545 = vst.msk [vmem:[%s2544] sm:$0x40] %vm2531, %v2530
    %s2546 = scalar_lea.vmem %s1, 628
    %2547 = vst.msk [vmem:[%s2546] sm:$0x80] %vm2531, %v2530
    %s2548 = scalar_lea.vmem [#allocation0], 112
    %v2549 = vld [vmem:[%s2548] sm:$0x3]
    %s2550 = scalar_lea.vmem [#allocation0], 134
    %v2551 = vld [vmem:[%s2550] sm:$0xc]
    %vm2552 = vcmask 1043458
    %v2553 = vsel %vm2552, %v2551, %v2549
    %2554 = vrot.lane.b32.xlu0 %v2553, 30
    %v2555 = vpop.permute.xlu0 %2554
    %vm2556 = vcmask 48128
    %s2557 = scalar_lea.vmem %s1, 315
    %2558 = vst.msk [vmem:[%s2557] sm:$0x1] %vm2556, %v2555
    %s2559 = scalar_lea.vmem %s1, 698
    %2560 = vst.msk [vmem:[%s2559] sm:$0x2] %vm2556, %v2555
    %s2561 = scalar_lea.vmem %s1, 377
    %2562 = vst.msk [vmem:[%s2561] sm:$0x4] %vm2556, %v2555
    %s2563 = scalar_lea.vmem %s1, 760
    %2564 = vst.msk [vmem:[%s2563] sm:$0x8] %vm2556, %v2555
    %s2565 = scalar_lea.vmem [#allocation0], 8
    %v2566 = vld [vmem:[%s2565] sm:$0x3]
    %s2567 = scalar_lea.vmem [#allocation0], 30
    %v2568 = vld [vmem:[%s2567] sm:$0xc]
    %vm2569 = vcmask 1043458
    %v2570 = vsel %vm2569, %v2568, %v2566
    %s2571 = scalar_lea.vmem [#allocation0], 52
    %v2572 = vld [vmem:[%s2571] sm:$0x30]
    %vm2573 = vcmask 1045508
    %v2574 = vsel %vm2573, %v2572, %v2570
    %s2575 = scalar_lea.vmem [#allocation0], 74
    %v2576 = vld [vmem:[%s2575] sm:$0xc0]
    %vm2577 = vcmask 1047558
    %v2578 = vsel %vm2577, %v2576, %v2574
    %2579 = vrot.lane.b32.xlu0 %v2578, 28
    %v2580 = vpop.permute.xlu0 %2579
    %vm2581 = vcmask 48128
    %s2582 = scalar_lea.vmem %s1, 38
    %2583 = vst.msk [vmem:[%s2582] sm:$0x1] %vm2581, %v2580
    %s2584 = scalar_lea.vmem %s1, 421
    %2585 = vst.msk [vmem:[%s2584] sm:$0x2] %vm2581, %v2580
    %s2586 = scalar_lea.vmem %s1, 100
    %2587 = vst.msk [vmem:[%s2586] sm:$0x4] %vm2581, %v2580
    %s2588 = scalar_lea.vmem %s1, 483
    %2589 = vst.msk [vmem:[%s2588] sm:$0x8] %vm2581, %v2580
    %s2590 = scalar_lea.vmem %s1, 162
    %2591 = vst.msk [vmem:[%s2590] sm:$0x10] %vm2581, %v2580
    %s2592 = scalar_lea.vmem %s1, 545
    %2593 = vst.msk [vmem:[%s2592] sm:$0x20] %vm2581, %v2580
    %s2594 = scalar_lea.vmem %s1, 224
    %2595 = vst.msk [vmem:[%s2594] sm:$0x40] %vm2581, %v2580
    %s2596 = scalar_lea.vmem %s1, 607
    %2597 = vst.msk [vmem:[%s2596] sm:$0x80] %vm2581, %v2580
    %s2598 = scalar_lea.vmem [#allocation0], 104
    %v2599 = vld [vmem:[%s2598] sm:$0x3]
    %s2600 = scalar_lea.vmem [#allocation0], 126
    %v2601 = vld [vmem:[%s2600] sm:$0xc]
    %vm2602 = vcmask 1043458
    %v2603 = vsel %vm2602, %v2601, %v2599
    %2604 = vrot.lane.b32.xlu0 %v2603, 28
    %v2605 = vpop.permute.xlu0 %2604
    %vm2606 = vcmask 48128
    %s2607 = scalar_lea.vmem %s1, 294
    %2608 = vst.msk [vmem:[%s2607] sm:$0x1] %vm2606, %v2605
    %s2609 = scalar_lea.vmem %s1, 677
    %2610 = vst.msk [vmem:[%s2609] sm:$0x2] %vm2606, %v2605
    %s2611 = scalar_lea.vmem %s1, 356
    %2612 = vst.msk [vmem:[%s2611] sm:$0x4] %vm2606, %v2605
    %s2613 = scalar_lea.vmem %s1, 739
    %2614 = vst.msk [vmem:[%s2613] sm:$0x8] %vm2606, %v2605
    %v2615 = vld [vmem:[#allocation0] sm:$0x3]
    %s2616 = scalar_lea.vmem [#allocation0], 22
    %v2617 = vld [vmem:[%s2616] sm:$0xc]
    %vm2618 = vcmask 1043458
    %v2619 = vsel %vm2618, %v2617, %v2615
    %s2620 = scalar_lea.vmem [#allocation0], 44
    %v2621 = vld [vmem:[%s2620] sm:$0x30]
    %vm2622 = vcmask 1045508
    %v2623 = vsel %vm2622, %v2621, %v2619
    %s2624 = scalar_lea.vmem [#allocation0], 66
    %v2625 = vld [vmem:[%s2624] sm:$0xc0]
    %vm2626 = vcmask 1047558
    %v2627 = vsel %vm2626, %v2625, %v2623
    %2628 = vrot.lane.b32.xlu0 %v2627, 26
    %v2629 = vpop.permute.xlu0 %2628
    %vm2630 = vcmask 48128
    %s2631 = scalar_lea.vmem %s1, 17
    %2632 = vst.msk [vmem:[%s2631] sm:$0x1] %vm2630, %v2629
    %s2633 = scalar_lea.vmem %s1, 400
    %2634 = vst.msk [vmem:[%s2633] sm:$0x2] %vm2630, %v2629
    %s2635 = scalar_lea.vmem %s1, 79
    %2636 = vst.msk [vmem:[%s2635] sm:$0x4] %vm2630, %v2629
    %s2637 = scalar_lea.vmem %s1, 462
    %2638 = vst.msk [vmem:[%s2637] sm:$0x8] %vm2630, %v2629
    %s2639 = scalar_lea.vmem %s1, 141
    %2640 = vst.msk [vmem:[%s2639] sm:$0x10] %vm2630, %v2629
    %s2641 = scalar_lea.vmem %s1, 524
    %2642 = vst.msk [vmem:[%s2641] sm:$0x20] %vm2630, %v2629
    %s2643 = scalar_lea.vmem %s1, 203
    %2644 = vst.msk [vmem:[%s2643] sm:$0x40] %vm2630, %v2629
    %s2645 = scalar_lea.vmem %s1, 586
    %2646 = vst.msk [vmem:[%s2645] sm:$0x80] %vm2630, %v2629
    %s2647 = scalar_lea.vmem [#allocation0], 96
    %v2648 = vld [vmem:[%s2647] sm:$0x3]
    %s2649 = scalar_lea.vmem [#allocation0], 118
    %v2650 = vld [vmem:[%s2649] sm:$0xc]
    %vm2651 = vcmask 1043458
    %v2652 = vsel %vm2651, %v2650, %v2648
    %2653 = vrot.lane.b32.xlu0 %v2652, 26
    %v2654 = vpop.permute.xlu0 %2653
    %vm2655 = vcmask 48128
    %s2656 = scalar_lea.vmem %s1, 273
    %2657 = vst.msk [vmem:[%s2656] sm:$0x1] %vm2655, %v2654
    %s2658 = scalar_lea.vmem %s1, 656
    %2659 = vst.msk [vmem:[%s2658] sm:$0x2] %vm2655, %v2654
    %s2660 = scalar_lea.vmem %s1, 335
    %2661 = vst.msk [vmem:[%s2660] sm:$0x4] %vm2655, %v2654
    %s2662 = scalar_lea.vmem %s1, 718
    %2663 = vst.msk [vmem:[%s2662] sm:$0x8] %vm2655, %v2654
    %s2664 = scalar_lea.vmem [#allocation0], 16
    %v2665 = vld [vmem:[%s2664] sm:$0x3]
    %s2666 = scalar_lea.vmem [#allocation0], 38
    %v2667 = vld [vmem:[%s2666] sm:$0xc]
    %vm2668 = vcmask 1043458
    %v2669 = vsel %vm2668, %v2667, %v2665
    %s2670 = scalar_lea.vmem [#allocation0], 60
    %v2671 = vld [vmem:[%s2670] sm:$0x30]
    %vm2672 = vcmask 1045508
    %v2673 = vsel %vm2672, %v2671, %v2669
    %s2674 = scalar_lea.vmem [#allocation0], 82
    %v2675 = vld [vmem:[%s2674] sm:$0xc0]
    %vm2676 = vcmask 1047558
    %v2677 = vsel %vm2676, %v2675, %v2673
    %2678 = vrot.lane.b32.xlu0 %v2677, 24
    %v2679 = vpop.permute.xlu0 %2678
    %vm2680 = vcmask 48128
    %s2681 = scalar_lea.vmem %s1, 60
    %2682 = vst.msk [vmem:[%s2681] sm:$0x1] %vm2680, %v2679
    %s2683 = scalar_lea.vmem %s1, 443
    %2684 = vst.msk [vmem:[%s2683] sm:$0x2] %vm2680, %v2679
    %s2685 = scalar_lea.vmem %s1, 122
    %2686 = vst.msk [vmem:[%s2685] sm:$0x4] %vm2680, %v2679
    %s2687 = scalar_lea.vmem %s1, 505
    %2688 = vst.msk [vmem:[%s2687] sm:$0x8] %vm2680, %v2679
    %s2689 = scalar_lea.vmem %s1, 184
    %2690 = vst.msk [vmem:[%s2689] sm:$0x10] %vm2680, %v2679
    %s2691 = scalar_lea.vmem %s1, 567
    %2692 = vst.msk [vmem:[%s2691] sm:$0x20] %vm2680, %v2679
    %s2693 = scalar_lea.vmem %s1, 246
    %2694 = vst.msk [vmem:[%s2693] sm:$0x40] %vm2680, %v2679
    %s2695 = scalar_lea.vmem %s1, 629
    %2696 = vst.msk [vmem:[%s2695] sm:$0x80] %vm2680, %v2679
    %s2697 = scalar_lea.vmem [#allocation0], 112
    %v2698 = vld [vmem:[%s2697] sm:$0x3]
    %s2699 = scalar_lea.vmem [#allocation0], 134
    %v2700 = vld [vmem:[%s2699] sm:$0xc]
    %vm2701 = vcmask 1043458
    %v2702 = vsel %vm2701, %v2700, %v2698
    %2703 = vrot.lane.b32.xlu0 %v2702, 24
    %v2704 = vpop.permute.xlu0 %2703
    %vm2705 = vcmask 48128
    %s2706 = scalar_lea.vmem %s1, 316
    %2707 = vst.msk [vmem:[%s2706] sm:$0x1] %vm2705, %v2704
    %s2708 = scalar_lea.vmem %s1, 699
    %2709 = vst.msk [vmem:[%s2708] sm:$0x2] %vm2705, %v2704
    %s2710 = scalar_lea.vmem %s1, 378
    %2711 = vst.msk [vmem:[%s2710] sm:$0x4] %vm2705, %v2704
    %s2712 = scalar_lea.vmem %s1, 761
    %2713 = vst.msk [vmem:[%s2712] sm:$0x8] %vm2705, %v2704
    %s2714 = scalar_lea.vmem [#allocation0], 8
    %v2715 = vld [vmem:[%s2714] sm:$0x3]
    %s2716 = scalar_lea.vmem [#allocation0], 30
    %v2717 = vld [vmem:[%s2716] sm:$0xc]
    %vm2718 = vcmask 1043458
    %v2719 = vsel %vm2718, %v2717, %v2715
    %s2720 = scalar_lea.vmem [#allocation0], 52
    %v2721 = vld [vmem:[%s2720] sm:$0x30]
    %vm2722 = vcmask 1045508
    %v2723 = vsel %vm2722, %v2721, %v2719
    %s2724 = scalar_lea.vmem [#allocation0], 74
    %v2725 = vld [vmem:[%s2724] sm:$0xc0]
    %vm2726 = vcmask 1047558
    %v2727 = vsel %vm2726, %v2725, %v2723
    %2728 = vrot.lane.b32.xlu0 %v2727, 22
    %v2729 = vpop.permute.xlu0 %2728
    %vm2730 = vcmask 48128
    %s2731 = scalar_lea.vmem %s1, 39
    %2732 = vst.msk [vmem:[%s2731] sm:$0x1] %vm2730, %v2729
    %s2733 = scalar_lea.vmem %s1, 422
    %2734 = vst.msk [vmem:[%s2733] sm:$0x2] %vm2730, %v2729
    %s2735 = scalar_lea.vmem %s1, 101
    %2736 = vst.msk [vmem:[%s2735] sm:$0x4] %vm2730, %v2729
    %s2737 = scalar_lea.vmem %s1, 484
    %2738 = vst.msk [vmem:[%s2737] sm:$0x8] %vm2730, %v2729
    %s2739 = scalar_lea.vmem %s1, 163
    %2740 = vst.msk [vmem:[%s2739] sm:$0x10] %vm2730, %v2729
    %s2741 = scalar_lea.vmem %s1, 546
    %2742 = vst.msk [vmem:[%s2741] sm:$0x20] %vm2730, %v2729
    %s2743 = scalar_lea.vmem %s1, 225
    %2744 = vst.msk [vmem:[%s2743] sm:$0x40] %vm2730, %v2729
    %s2745 = scalar_lea.vmem %s1, 608
    %2746 = vst.msk [vmem:[%s2745] sm:$0x80] %vm2730, %v2729
    %s2747 = scalar_lea.vmem [#allocation0], 104
    %v2748 = vld [vmem:[%s2747] sm:$0x3]
    %s2749 = scalar_lea.vmem [#allocation0], 126
    %v2750 = vld [vmem:[%s2749] sm:$0xc]
    %vm2751 = vcmask 1043458
    %v2752 = vsel %vm2751, %v2750, %v2748
    %2753 = vrot.lane.b32.xlu0 %v2752, 22
    %v2754 = vpop.permute.xlu0 %2753
    %vm2755 = vcmask 48128
    %s2756 = scalar_lea.vmem %s1, 295
    %2757 = vst.msk [vmem:[%s2756] sm:$0x1] %vm2755, %v2754
    %s2758 = scalar_lea.vmem %s1, 678
    %2759 = vst.msk [vmem:[%s2758] sm:$0x2] %vm2755, %v2754
    %s2760 = scalar_lea.vmem %s1, 357
    %2761 = vst.msk [vmem:[%s2760] sm:$0x4] %vm2755, %v2754
    %s2762 = scalar_lea.vmem %s1, 740
    %2763 = vst.msk [vmem:[%s2762] sm:$0x8] %vm2755, %v2754
    %v2764 = vld [vmem:[#allocation0] sm:$0x3]
    %s2765 = scalar_lea.vmem [#allocation0], 22
    %v2766 = vld [vmem:[%s2765] sm:$0xc]
    %vm2767 = vcmask 1043458
    %v2768 = vsel %vm2767, %v2766, %v2764
    %s2769 = scalar_lea.vmem [#allocation0], 44
    %v2770 = vld [vmem:[%s2769] sm:$0x30]
    %vm2771 = vcmask 1045508
    %v2772 = vsel %vm2771, %v2770, %v2768
    %s2773 = scalar_lea.vmem [#allocation0], 66
    %v2774 = vld [vmem:[%s2773] sm:$0xc0]
    %vm2775 = vcmask 1047558
    %v2776 = vsel %vm2775, %v2774, %v2772
    %2777 = vrot.lane.b32.xlu0 %v2776, 20
    %v2778 = vpop.permute.xlu0 %2777
    %vm2779 = vcmask 48128
    %s2780 = scalar_lea.vmem %s1, 18
    %2781 = vst.msk [vmem:[%s2780] sm:$0x1] %vm2779, %v2778
    %s2782 = scalar_lea.vmem %s1, 401
    %2783 = vst.msk [vmem:[%s2782] sm:$0x2] %vm2779, %v2778
    %s2784 = scalar_lea.vmem %s1, 80
    %2785 = vst.msk [vmem:[%s2784] sm:$0x4] %vm2779, %v2778
    %s2786 = scalar_lea.vmem %s1, 463
    %2787 = vst.msk [vmem:[%s2786] sm:$0x8] %vm2779, %v2778
    %s2788 = scalar_lea.vmem %s1, 142
    %2789 = vst.msk [vmem:[%s2788] sm:$0x10] %vm2779, %v2778
    %s2790 = scalar_lea.vmem %s1, 525
    %2791 = vst.msk [vmem:[%s2790] sm:$0x20] %vm2779, %v2778
    %s2792 = scalar_lea.vmem %s1, 204
    %2793 = vst.msk [vmem:[%s2792] sm:$0x40] %vm2779, %v2778
    %s2794 = scalar_lea.vmem %s1, 587
    %2795 = vst.msk [vmem:[%s2794] sm:$0x80] %vm2779, %v2778
    %s2796 = scalar_lea.vmem [#allocation0], 96
    %v2797 = vld [vmem:[%s2796] sm:$0x3]
    %s2798 = scalar_lea.vmem [#allocation0], 118
    %v2799 = vld [vmem:[%s2798] sm:$0xc]
    %vm2800 = vcmask 1043458
    %v2801 = vsel %vm2800, %v2799, %v2797
    %2802 = vrot.lane.b32.xlu0 %v2801, 20
    %v2803 = vpop.permute.xlu0 %2802
    %vm2804 = vcmask 48128
    %s2805 = scalar_lea.vmem %s1, 274
    %2806 = vst.msk [vmem:[%s2805] sm:$0x1] %vm2804, %v2803
    %s2807 = scalar_lea.vmem %s1, 657
    %2808 = vst.msk [vmem:[%s2807] sm:$0x2] %vm2804, %v2803
    %s2809 = scalar_lea.vmem %s1, 336
    %2810 = vst.msk [vmem:[%s2809] sm:$0x4] %vm2804, %v2803
    %s2811 = scalar_lea.vmem %s1, 719
    %2812 = vst.msk [vmem:[%s2811] sm:$0x8] %vm2804, %v2803
    %s2813 = scalar_lea.vmem [#allocation0], 16
    %v2814 = vld [vmem:[%s2813] sm:$0x3]
    %s2815 = scalar_lea.vmem [#allocation0], 38
    %v2816 = vld [vmem:[%s2815] sm:$0xc]
    %vm2817 = vcmask 1043458
    %v2818 = vsel %vm2817, %v2816, %v2814
    %s2819 = scalar_lea.vmem [#allocation0], 60
    %v2820 = vld [vmem:[%s2819] sm:$0x30]
    %vm2821 = vcmask 1045508
    %v2822 = vsel %vm2821, %v2820, %v2818
    %s2823 = scalar_lea.vmem [#allocation0], 82
    %v2824 = vld [vmem:[%s2823] sm:$0xc0]
    %vm2825 = vcmask 1047558
    %v2826 = vsel %vm2825, %v2824, %v2822
    %2827 = vrot.lane.b32.xlu0 %v2826, 18
    %v2828 = vpop.permute.xlu0 %2827
    %vm2829 = vcmask 48128
    %s2830 = scalar_lea.vmem %s1, 61
    %2831 = vst.msk [vmem:[%s2830] sm:$0x1] %vm2829, %v2828
    %s2832 = scalar_lea.vmem %s1, 444
    %2833 = vst.msk [vmem:[%s2832] sm:$0x2] %vm2829, %v2828
    %s2834 = scalar_lea.vmem %s1, 123
    %2835 = vst.msk [vmem:[%s2834] sm:$0x4] %vm2829, %v2828
    %s2836 = scalar_lea.vmem %s1, 506
    %2837 = vst.msk [vmem:[%s2836] sm:$0x8] %vm2829, %v2828
    %s2838 = scalar_lea.vmem %s1, 185
    %2839 = vst.msk [vmem:[%s2838] sm:$0x10] %vm2829, %v2828
    %s2840 = scalar_lea.vmem %s1, 568
    %2841 = vst.msk [vmem:[%s2840] sm:$0x20] %vm2829, %v2828
    %s2842 = scalar_lea.vmem %s1, 247
    %2843 = vst.msk [vmem:[%s2842] sm:$0x40] %vm2829, %v2828
    %s2844 = scalar_lea.vmem %s1, 630
    %2845 = vst.msk [vmem:[%s2844] sm:$0x80] %vm2829, %v2828
    %s2846 = scalar_lea.vmem [#allocation0], 112
    %v2847 = vld [vmem:[%s2846] sm:$0x3]
    %s2848 = scalar_lea.vmem [#allocation0], 134
    %v2849 = vld [vmem:[%s2848] sm:$0xc]
    %vm2850 = vcmask 1043458
    %v2851 = vsel %vm2850, %v2849, %v2847
    %2852 = vrot.lane.b32.xlu0 %v2851, 18
    %v2853 = vpop.permute.xlu0 %2852
    %vm2854 = vcmask 48128
    %s2855 = scalar_lea.vmem %s1, 317
    %2856 = vst.msk [vmem:[%s2855] sm:$0x1] %vm2854, %v2853
    %s2857 = scalar_lea.vmem %s1, 700
    %2858 = vst.msk [vmem:[%s2857] sm:$0x2] %vm2854, %v2853
    %s2859 = scalar_lea.vmem %s1, 379
    %2860 = vst.msk [vmem:[%s2859] sm:$0x4] %vm2854, %v2853
    %s2861 = scalar_lea.vmem %s1, 762
    %2862 = vst.msk [vmem:[%s2861] sm:$0x8] %vm2854, %v2853
    %s2863 = scalar_lea.vmem [#allocation0], 8
    %v2864 = vld [vmem:[%s2863] sm:$0x3]
    %s2865 = scalar_lea.vmem [#allocation0], 30
    %v2866 = vld [vmem:[%s2865] sm:$0xc]
    %vm2867 = vcmask 1043458
    %v2868 = vsel %vm2867, %v2866, %v2864
    %s2869 = scalar_lea.vmem [#allocation0], 52
    %v2870 = vld [vmem:[%s2869] sm:$0x30]
    %vm2871 = vcmask 1045508
    %v2872 = vsel %vm2871, %v2870, %v2868
    %s2873 = scalar_lea.vmem [#allocation0], 74
    %v2874 = vld [vmem:[%s2873] sm:$0xc0]
    %vm2875 = vcmask 1047558
    %v2876 = vsel %vm2875, %v2874, %v2872
    %2877 = vrot.lane.b32.xlu0 %v2876, 16
    %v2878 = vpop.permute.xlu0 %2877
    %vm2879 = vcmask 48128
    %s2880 = scalar_lea.vmem %s1, 40
    %2881 = vst.msk [vmem:[%s2880] sm:$0x1] %vm2879, %v2878
    %s2882 = scalar_lea.vmem %s1, 423
    %2883 = vst.msk [vmem:[%s2882] sm:$0x2] %vm2879, %v2878
    %s2884 = scalar_lea.vmem %s1, 102
    %2885 = vst.msk [vmem:[%s2884] sm:$0x4] %vm2879, %v2878
    %s2886 = scalar_lea.vmem %s1, 485
    %2887 = vst.msk [vmem:[%s2886] sm:$0x8] %vm2879, %v2878
    %s2888 = scalar_lea.vmem %s1, 164
    %2889 = vst.msk [vmem:[%s2888] sm:$0x10] %vm2879, %v2878
    %s2890 = scalar_lea.vmem %s1, 547
    %2891 = vst.msk [vmem:[%s2890] sm:$0x20] %vm2879, %v2878
    %s2892 = scalar_lea.vmem %s1, 226
    %2893 = vst.msk [vmem:[%s2892] sm:$0x40] %vm2879, %v2878
    %s2894 = scalar_lea.vmem %s1, 609
    %2895 = vst.msk [vmem:[%s2894] sm:$0x80] %vm2879, %v2878
    %s2896 = scalar_lea.vmem [#allocation0], 104
    %v2897 = vld [vmem:[%s2896] sm:$0x3]
    %s2898 = scalar_lea.vmem [#allocation0], 126
    %v2899 = vld [vmem:[%s2898] sm:$0xc]
    %vm2900 = vcmask 1043458
    %v2901 = vsel %vm2900, %v2899, %v2897
    %2902 = vrot.lane.b32.xlu0 %v2901, 16
    %v2903 = vpop.permute.xlu0 %2902
    %vm2904 = vcmask 48128
    %s2905 = scalar_lea.vmem %s1, 296
    %2906 = vst.msk [vmem:[%s2905] sm:$0x1] %vm2904, %v2903
    %s2907 = scalar_lea.vmem %s1, 679
    %2908 = vst.msk [vmem:[%s2907] sm:$0x2] %vm2904, %v2903
    %s2909 = scalar_lea.vmem %s1, 358
    %2910 = vst.msk [vmem:[%s2909] sm:$0x4] %vm2904, %v2903
    %s2911 = scalar_lea.vmem %s1, 741
    %2912 = vst.msk [vmem:[%s2911] sm:$0x8] %vm2904, %v2903
    %v2913 = vld [vmem:[#allocation0] sm:$0x3]
    %s2914 = scalar_lea.vmem [#allocation0], 22
    %v2915 = vld [vmem:[%s2914] sm:$0xc]
    %vm2916 = vcmask 1043458
    %v2917 = vsel %vm2916, %v2915, %v2913
    %s2918 = scalar_lea.vmem [#allocation0], 44
    %v2919 = vld [vmem:[%s2918] sm:$0x30]
    %vm2920 = vcmask 1045508
    %v2921 = vsel %vm2920, %v2919, %v2917
    %s2922 = scalar_lea.vmem [#allocation0], 66
    %v2923 = vld [vmem:[%s2922] sm:$0xc0]
    %vm2924 = vcmask 1047558
    %v2925 = vsel %vm2924, %v2923, %v2921
    %2926 = vrot.lane.b32.xlu0 %v2925, 14
    %v2927 = vpop.permute.xlu0 %2926
    %vm2928 = vcmask 48128
    %s2929 = scalar_lea.vmem %s1, 19
    %2930 = vst.msk [vmem:[%s2929] sm:$0x1] %vm2928, %v2927
    %s2931 = scalar_lea.vmem %s1, 402
    %2932 = vst.msk [vmem:[%s2931] sm:$0x2] %vm2928, %v2927
    %s2933 = scalar_lea.vmem %s1, 81
    %2934 = vst.msk [vmem:[%s2933] sm:$0x4] %vm2928, %v2927
    %s2935 = scalar_lea.vmem %s1, 464
    %2936 = vst.msk [vmem:[%s2935] sm:$0x8] %vm2928, %v2927
    %s2937 = scalar_lea.vmem %s1, 143
    %2938 = vst.msk [vmem:[%s2937] sm:$0x10] %vm2928, %v2927
    %s2939 = scalar_lea.vmem %s1, 526
    %2940 = vst.msk [vmem:[%s2939] sm:$0x20] %vm2928, %v2927
    %s2941 = scalar_lea.vmem %s1, 205
    %2942 = vst.msk [vmem:[%s2941] sm:$0x40] %vm2928, %v2927
    %s2943 = scalar_lea.vmem %s1, 588
    %2944 = vst.msk [vmem:[%s2943] sm:$0x80] %vm2928, %v2927
    %s2945 = scalar_lea.vmem [#allocation0], 96
    %v2946 = vld [vmem:[%s2945] sm:$0x3]
    %s2947 = scalar_lea.vmem [#allocation0], 118
    %v2948 = vld [vmem:[%s2947] sm:$0xc]
    %vm2949 = vcmask 1043458
    %v2950 = vsel %vm2949, %v2948, %v2946
    %2951 = vrot.lane.b32.xlu0 %v2950, 14
    %v2952 = vpop.permute.xlu0 %2951
    %vm2953 = vcmask 48128
    %s2954 = scalar_lea.vmem %s1, 275
    %2955 = vst.msk [vmem:[%s2954] sm:$0x1] %vm2953, %v2952
    %s2956 = scalar_lea.vmem %s1, 658
    %2957 = vst.msk [vmem:[%s2956] sm:$0x2] %vm2953, %v2952
    %s2958 = scalar_lea.vmem %s1, 337
    %2959 = vst.msk [vmem:[%s2958] sm:$0x4] %vm2953, %v2952
    %s2960 = scalar_lea.vmem %s1, 720
    %2961 = vst.msk [vmem:[%s2960] sm:$0x8] %vm2953, %v2952
    %s2962 = scalar_lea.vmem [#allocation0], 16
    %v2963 = vld [vmem:[%s2962] sm:$0x3]
    %s2964 = scalar_lea.vmem [#allocation0], 38
    %v2965 = vld [vmem:[%s2964] sm:$0xc]
    %vm2966 = vcmask 1043458
    %v2967 = vsel %vm2966, %v2965, %v2963
    %s2968 = scalar_lea.vmem [#allocation0], 60
    %v2969 = vld [vmem:[%s2968] sm:$0x30]
    %vm2970 = vcmask 1045508
    %v2971 = vsel %vm2970, %v2969, %v2967
    %s2972 = scalar_lea.vmem [#allocation0], 82
    %v2973 = vld [vmem:[%s2972] sm:$0xc0]
    %vm2974 = vcmask 1047558
    %v2975 = vsel %vm2974, %v2973, %v2971
    %2976 = vrot.lane.b32.xlu0 %v2975, 12
    %v2977 = vpop.permute.xlu0 %2976
    %vm2978 = vcmask 48128
    %s2979 = scalar_lea.vmem %s1, 62
    %2980 = vst.msk [vmem:[%s2979] sm:$0x1] %vm2978, %v2977
    %s2981 = scalar_lea.vmem %s1, 445
    %2982 = vst.msk [vmem:[%s2981] sm:$0x2] %vm2978, %v2977
    %s2983 = scalar_lea.vmem %s1, 124
    %2984 = vst.msk [vmem:[%s2983] sm:$0x4] %vm2978, %v2977
    %s2985 = scalar_lea.vmem %s1, 507
    %2986 = vst.msk [vmem:[%s2985] sm:$0x8] %vm2978, %v2977
    %s2987 = scalar_lea.vmem %s1, 186
    %2988 = vst.msk [vmem:[%s2987] sm:$0x10] %vm2978, %v2977
    %s2989 = scalar_lea.vmem %s1, 569
    %2990 = vst.msk [vmem:[%s2989] sm:$0x20] %vm2978, %v2977
    %s2991 = scalar_lea.vmem %s1, 248
    %2992 = vst.msk [vmem:[%s2991] sm:$0x40] %vm2978, %v2977
    %s2993 = scalar_lea.vmem %s1, 631
    %2994 = vst.msk [vmem:[%s2993] sm:$0x80] %vm2978, %v2977
    %s2995 = scalar_lea.vmem [#allocation0], 112
    %v2996 = vld [vmem:[%s2995] sm:$0x3]
    %s2997 = scalar_lea.vmem [#allocation0], 134
    %v2998 = vld [vmem:[%s2997] sm:$0xc]
    %vm2999 = vcmask 1043458
    %v3000 = vsel %vm2999, %v2998, %v2996
    %3001 = vrot.lane.b32.xlu0 %v3000, 12
    %v3002 = vpop.permute.xlu0 %3001
    %vm3003 = vcmask 48128
    %s3004 = scalar_lea.vmem %s1, 318
    %3005 = vst.msk [vmem:[%s3004] sm:$0x1] %vm3003, %v3002
    %s3006 = scalar_lea.vmem %s1, 701
    %3007 = vst.msk [vmem:[%s3006] sm:$0x2] %vm3003, %v3002
    %s3008 = scalar_lea.vmem %s1, 380
    %3009 = vst.msk [vmem:[%s3008] sm:$0x4] %vm3003, %v3002
    %s3010 = scalar_lea.vmem %s1, 763
    %3011 = vst.msk [vmem:[%s3010] sm:$0x8] %vm3003, %v3002
    %s3012 = scalar_lea.vmem [#allocation0], 8
    %v3013 = vld [vmem:[%s3012] sm:$0x3]
    %s3014 = scalar_lea.vmem [#allocation0], 30
    %v3015 = vld [vmem:[%s3014] sm:$0xc]
    %vm3016 = vcmask 1043458
    %v3017 = vsel %vm3016, %v3015, %v3013
    %s3018 = scalar_lea.vmem [#allocation0], 52
    %v3019 = vld [vmem:[%s3018] sm:$0x30]
    %vm3020 = vcmask 1045508
    %v3021 = vsel %vm3020, %v3019, %v3017
    %s3022 = scalar_lea.vmem [#allocation0], 74
    %v3023 = vld [vmem:[%s3022] sm:$0xc0]
    %vm3024 = vcmask 1047558
    %v3025 = vsel %vm3024, %v3023, %v3021
    %3026 = vrot.lane.b32.xlu0 %v3025, 10
    %v3027 = vpop.permute.xlu0 %3026
    %vm3028 = vcmask 48128
    %s3029 = scalar_lea.vmem %s1, 41
    %3030 = vst.msk [vmem:[%s3029] sm:$0x1] %vm3028, %v3027
    %s3031 = scalar_lea.vmem %s1, 424
    %3032 = vst.msk [vmem:[%s3031] sm:$0x2] %vm3028, %v3027
    %s3033 = scalar_lea.vmem %s1, 103
    %3034 = vst.msk [vmem:[%s3033] sm:$0x4] %vm3028, %v3027
    %s3035 = scalar_lea.vmem %s1, 486
    %3036 = vst.msk [vmem:[%s3035] sm:$0x8] %vm3028, %v3027
    %s3037 = scalar_lea.vmem %s1, 165
    %3038 = vst.msk [vmem:[%s3037] sm:$0x10] %vm3028, %v3027
    %s3039 = scalar_lea.vmem %s1, 548
    %3040 = vst.msk [vmem:[%s3039] sm:$0x20] %vm3028, %v3027
    %s3041 = scalar_lea.vmem %s1, 227
    %3042 = vst.msk [vmem:[%s3041] sm:$0x40] %vm3028, %v3027
    %s3043 = scalar_lea.vmem %s1, 610
    %3044 = vst.msk [vmem:[%s3043] sm:$0x80] %vm3028, %v3027
    %s3045 = scalar_lea.vmem [#allocation0], 104
    %v3046 = vld [vmem:[%s3045] sm:$0x3]
    %s3047 = scalar_lea.vmem [#allocation0], 126
    %v3048 = vld [vmem:[%s3047] sm:$0xc]
    %vm3049 = vcmask 1043458
    %v3050 = vsel %vm3049, %v3048, %v3046
    %3051 = vrot.lane.b32.xlu0 %v3050, 10
    %v3052 = vpop.permute.xlu0 %3051
    %vm3053 = vcmask 48128
    %s3054 = scalar_lea.vmem %s1, 297
    %3055 = vst.msk [vmem:[%s3054] sm:$0x1] %vm3053, %v3052
    %s3056 = scalar_lea.vmem %s1, 680
    %3057 = vst.msk [vmem:[%s3056] sm:$0x2] %vm3053, %v3052
    %s3058 = scalar_lea.vmem %s1, 359
    %3059 = vst.msk [vmem:[%s3058] sm:$0x4] %vm3053, %v3052
    %s3060 = scalar_lea.vmem %s1, 742
    %3061 = vst.msk [vmem:[%s3060] sm:$0x8] %vm3053, %v3052
    %v3062 = vld [vmem:[#allocation0] sm:$0x3]
    %s3063 = scalar_lea.vmem [#allocation0], 22
    %v3064 = vld [vmem:[%s3063] sm:$0xc]
    %vm3065 = vcmask 1043458
    %v3066 = vsel %vm3065, %v3064, %v3062
    %s3067 = scalar_lea.vmem [#allocation0], 44
    %v3068 = vld [vmem:[%s3067] sm:$0x30]
    %vm3069 = vcmask 1045508
    %v3070 = vsel %vm3069, %v3068, %v3066
    %s3071 = scalar_lea.vmem [#allocation0], 66
    %v3072 = vld [vmem:[%s3071] sm:$0xc0]
    %vm3073 = vcmask 1047558
    %v3074 = vsel %vm3073, %v3072, %v3070
    %3075 = vrot.lane.b32.xlu0 %v3074, 8
    %v3076 = vpop.permute.xlu0 %3075
    %vm3077 = vcmask 48128
    %s3078 = scalar_lea.vmem %s1, 20
    %3079 = vst.msk [vmem:[%s3078] sm:$0x1] %vm3077, %v3076
    %s3080 = scalar_lea.vmem %s1, 403
    %3081 = vst.msk [vmem:[%s3080] sm:$0x2] %vm3077, %v3076
    %s3082 = scalar_lea.vmem %s1, 82
    %3083 = vst.msk [vmem:[%s3082] sm:$0x4] %vm3077, %v3076
    %s3084 = scalar_lea.vmem %s1, 465
    %3085 = vst.msk [vmem:[%s3084] sm:$0x8] %vm3077, %v3076
    %s3086 = scalar_lea.vmem %s1, 144
    %3087 = vst.msk [vmem:[%s3086] sm:$0x10] %vm3077, %v3076
    %s3088 = scalar_lea.vmem %s1, 527
    %3089 = vst.msk [vmem:[%s3088] sm:$0x20] %vm3077, %v3076
    %s3090 = scalar_lea.vmem %s1, 206
    %3091 = vst.msk [vmem:[%s3090] sm:$0x40] %vm3077, %v3076
    %s3092 = scalar_lea.vmem %s1, 589
    %3093 = vst.msk [vmem:[%s3092] sm:$0x80] %vm3077, %v3076
    %s3094 = scalar_lea.vmem [#allocation0], 96
    %v3095 = vld [vmem:[%s3094] sm:$0x3]
    %s3096 = scalar_lea.vmem [#allocation0], 118
    %v3097 = vld [vmem:[%s3096] sm:$0xc]
    %vm3098 = vcmask 1043458
    %v3099 = vsel %vm3098, %v3097, %v3095
    %3100 = vrot.lane.b32.xlu0 %v3099, 8
    %v3101 = vpop.permute.xlu0 %3100
    %vm3102 = vcmask 48128
    %s3103 = scalar_lea.vmem %s1, 276
    %3104 = vst.msk [vmem:[%s3103] sm:$0x1] %vm3102, %v3101
    %s3105 = scalar_lea.vmem %s1, 659
    %3106 = vst.msk [vmem:[%s3105] sm:$0x2] %vm3102, %v3101
    %s3107 = scalar_lea.vmem %s1, 338
    %3108 = vst.msk [vmem:[%s3107] sm:$0x4] %vm3102, %v3101
    %s3109 = scalar_lea.vmem %s1, 721
    %3110 = vst.msk [vmem:[%s3109] sm:$0x8] %vm3102, %v3101
    %s3111 = scalar_lea.vmem [#allocation0], 16
    %v3112 = vld [vmem:[%s3111] sm:$0x3]
    %s3113 = scalar_lea.vmem [#allocation0], 38
    %v3114 = vld [vmem:[%s3113] sm:$0xc]
    %vm3115 = vcmask 1043458
    %v3116 = vsel %vm3115, %v3114, %v3112
    %s3117 = scalar_lea.vmem [#allocation0], 60
    %v3118 = vld [vmem:[%s3117] sm:$0x30]
    %vm3119 = vcmask 1045508
    %v3120 = vsel %vm3119, %v3118, %v3116
    %s3121 = scalar_lea.vmem [#allocation0], 82
    %v3122 = vld [vmem:[%s3121] sm:$0xc0]
    %vm3123 = vcmask 1047558
    %v3124 = vsel %vm3123, %v3122, %v3120
    %3125 = vrot.lane.b32.xlu0 %v3124, 6
    %v3126 = vpop.permute.xlu0 %3125
    %vm3127 = vcmask 48128
    %s3128 = scalar_lea.vmem %s1, 63
    %3129 = vst.msk [vmem:[%s3128] sm:$0x1] %vm3127, %v3126
    %s3130 = scalar_lea.vmem %s1, 446
    %3131 = vst.msk [vmem:[%s3130] sm:$0x2] %vm3127, %v3126
    %s3132 = scalar_lea.vmem %s1, 125
    %3133 = vst.msk [vmem:[%s3132] sm:$0x4] %vm3127, %v3126
    %s3134 = scalar_lea.vmem %s1, 508
    %3135 = vst.msk [vmem:[%s3134] sm:$0x8] %vm3127, %v3126
    %s3136 = scalar_lea.vmem %s1, 187
    %3137 = vst.msk [vmem:[%s3136] sm:$0x10] %vm3127, %v3126
    %s3138 = scalar_lea.vmem %s1, 570
    %3139 = vst.msk [vmem:[%s3138] sm:$0x20] %vm3127, %v3126
    %s3140 = scalar_lea.vmem %s1, 249
    %3141 = vst.msk [vmem:[%s3140] sm:$0x40] %vm3127, %v3126
    %s3142 = scalar_lea.vmem %s1, 632
    %3143 = vst.msk [vmem:[%s3142] sm:$0x80] %vm3127, %v3126
    %s3144 = scalar_lea.vmem [#allocation0], 112
    %v3145 = vld [vmem:[%s3144] sm:$0x3]
    %s3146 = scalar_lea.vmem [#allocation0], 134
    %v3147 = vld [vmem:[%s3146] sm:$0xc]
    %vm3148 = vcmask 1043458
    %v3149 = vsel %vm3148, %v3147, %v3145
    %3150 = vrot.lane.b32.xlu0 %v3149, 6
    %v3151 = vpop.permute.xlu0 %3150
    %vm3152 = vcmask 48128
    %s3153 = scalar_lea.vmem %s1, 319
    %3154 = vst.msk [vmem:[%s3153] sm:$0x1] %vm3152, %v3151
    %s3155 = scalar_lea.vmem %s1, 702
    %3156 = vst.msk [vmem:[%s3155] sm:$0x2] %vm3152, %v3151
    %s3157 = scalar_lea.vmem %s1, 381
    %3158 = vst.msk [vmem:[%s3157] sm:$0x4] %vm3152, %v3151
    %s3159 = scalar_lea.vmem %s1, 764
    %3160 = vst.msk [vmem:[%s3159] sm:$0x8] %vm3152, %v3151
    %s3161 = scalar_lea.vmem [#allocation0], 8
    %v3162 = vld [vmem:[%s3161] sm:$0x3]
    %s3163 = scalar_lea.vmem [#allocation0], 30
    %v3164 = vld [vmem:[%s3163] sm:$0xc]
    %vm3165 = vcmask 1043458
    %v3166 = vsel %vm3165, %v3164, %v3162
    %s3167 = scalar_lea.vmem [#allocation0], 52
    %v3168 = vld [vmem:[%s3167] sm:$0x30]
    %vm3169 = vcmask 1045508
    %v3170 = vsel %vm3169, %v3168, %v3166
    %s3171 = scalar_lea.vmem [#allocation0], 74
    %v3172 = vld [vmem:[%s3171] sm:$0xc0]
    %vm3173 = vcmask 1047558
    %v3174 = vsel %vm3173, %v3172, %v3170
    %s3175 = scalar_lea.vmem [#allocation0], 16
    %v3176 = vld [vmem:[%s3175] sm:$0x3]
    %s3177 = scalar_lea.vmem [#allocation0], 38
    %v3178 = vld [vmem:[%s3177] sm:$0xc]
    %vm3179 = vcmask 1043458
    %v3180 = vsel %vm3179, %v3178, %v3176
    %s3181 = scalar_lea.vmem [#allocation0], 60
    %v3182 = vld [vmem:[%s3181] sm:$0x30]
    %vm3183 = vcmask 1045508
    %v3184 = vsel %vm3183, %v3182, %v3180
    %s3185 = scalar_lea.vmem [#allocation0], 82
    %v3186 = vld [vmem:[%s3185] sm:$0xc0]
    %vm3187 = vcmask 1047558
    %v3188 = vsel %vm3187, %v3186, %v3184
    %vm3189 = vcmask 1014784
    %v3190 = vsel %vm3189, %v3188, %v3174
    %3191 = vrot.lane.b32.xlu0 %v3190, 4
    %v3192 = vpop.permute.xlu0 %3191
    %vm3193 = vcmask 31744
    %s3194 = scalar_lea.vmem %s1, 42
    %3195 = vst.msk [vmem:[%s3194] sm:$0x1] %vm3193, %v3192
    %s3196 = scalar_lea.vmem %s1, 425
    %3197 = vst.msk [vmem:[%s3196] sm:$0x2] %vm3193, %v3192
    %s3198 = scalar_lea.vmem %s1, 104
    %3199 = vst.msk [vmem:[%s3198] sm:$0x4] %vm3193, %v3192
    %s3200 = scalar_lea.vmem %s1, 487
    %3201 = vst.msk [vmem:[%s3200] sm:$0x8] %vm3193, %v3192
    %s3202 = scalar_lea.vmem %s1, 166
    %3203 = vst.msk [vmem:[%s3202] sm:$0x10] %vm3193, %v3192
    %s3204 = scalar_lea.vmem %s1, 549
    %3205 = vst.msk [vmem:[%s3204] sm:$0x20] %vm3193, %v3192
    %s3206 = scalar_lea.vmem %s1, 228
    %3207 = vst.msk [vmem:[%s3206] sm:$0x40] %vm3193, %v3192
    %s3208 = scalar_lea.vmem %s1, 611
    %3209 = vst.msk [vmem:[%s3208] sm:$0x80] %vm3193, %v3192
    %vm3210 = vcmask 48160
    %s3211 = scalar_lea.vmem %s1, 42
    %3212 = vst.msk [vmem:[%s3211] sm:$0x1] %vm3210, %v3192
    %s3213 = scalar_lea.vmem %s1, 425
    %3214 = vst.msk [vmem:[%s3213] sm:$0x2] %vm3210, %v3192
    %s3215 = scalar_lea.vmem %s1, 104
    %3216 = vst.msk [vmem:[%s3215] sm:$0x4] %vm3210, %v3192
    %s3217 = scalar_lea.vmem %s1, 487
    %3218 = vst.msk [vmem:[%s3217] sm:$0x8] %vm3210, %v3192
    %s3219 = scalar_lea.vmem %s1, 166
    %3220 = vst.msk [vmem:[%s3219] sm:$0x10] %vm3210, %v3192
    %s3221 = scalar_lea.vmem %s1, 549
    %3222 = vst.msk [vmem:[%s3221] sm:$0x20] %vm3210, %v3192
    %s3223 = scalar_lea.vmem %s1, 228
    %3224 = vst.msk [vmem:[%s3223] sm:$0x40] %vm3210, %v3192
    %s3225 = scalar_lea.vmem %s1, 611
    %3226 = vst.msk [vmem:[%s3225] sm:$0x80] %vm3210, %v3192
    %s3227 = scalar_lea.vmem [#allocation0], 104
    %v3228 = vld [vmem:[%s3227] sm:$0x3]
    %s3229 = scalar_lea.vmem [#allocation0], 126
    %v3230 = vld [vmem:[%s3229] sm:$0xc]
    %vm3231 = vcmask 1043458
    %v3232 = vsel %vm3231, %v3230, %v3228
    %s3233 = scalar_lea.vmem [#allocation0], 112
    %v3234 = vld [vmem:[%s3233] sm:$0x3]
    %s3235 = scalar_lea.vmem [#allocation0], 134
    %v3236 = vld [vmem:[%s3235] sm:$0xc]
    %vm3237 = vcmask 1043458
    %v3238 = vsel %vm3237, %v3236, %v3234
    %vm3239 = vcmask 1014784
    %v3240 = vsel %vm3239, %v3238, %v3232
    %3241 = vrot.lane.b32.xlu0 %v3240, 4
    %v3242 = vpop.permute.xlu0 %3241
    %vm3243 = vcmask 31744
    %s3244 = scalar_lea.vmem %s1, 298
    %3245 = vst.msk [vmem:[%s3244] sm:$0x1] %vm3243, %v3242
    %s3246 = scalar_lea.vmem %s1, 681
    %3247 = vst.msk [vmem:[%s3246] sm:$0x2] %vm3243, %v3242
    %s3248 = scalar_lea.vmem %s1, 360
    %3249 = vst.msk [vmem:[%s3248] sm:$0x4] %vm3243, %v3242
    %s3250 = scalar_lea.vmem %s1, 743
    %3251 = vst.msk [vmem:[%s3250] sm:$0x8] %vm3243, %v3242
    %vm3252 = vcmask 48160
    %s3253 = scalar_lea.vmem %s1, 298
    %3254 = vst.msk [vmem:[%s3253] sm:$0x1] %vm3252, %v3242
    %s3255 = scalar_lea.vmem %s1, 681
    %3256 = vst.msk [vmem:[%s3255] sm:$0x2] %vm3252, %v3242
    %s3257 = scalar_lea.vmem %s1, 360
    %3258 = vst.msk [vmem:[%s3257] sm:$0x4] %vm3252, %v3242
    %s3259 = scalar_lea.vmem %s1, 743
    %3260 = vst.msk [vmem:[%s3259] sm:$0x8] %vm3252, %v3242
    %v3261 = vld [vmem:[#allocation0] sm:$0x3]
    %s3262 = scalar_lea.vmem [#allocation0], 22
    %v3263 = vld [vmem:[%s3262] sm:$0xc]
    %vm3264 = vcmask 1043458
    %v3265 = vsel %vm3264, %v3263, %v3261
    %s3266 = scalar_lea.vmem [#allocation0], 44
    %v3267 = vld [vmem:[%s3266] sm:$0x30]
    %vm3268 = vcmask 1045508
    %v3269 = vsel %vm3268, %v3267, %v3265
    %s3270 = scalar_lea.vmem [#allocation0], 66
    %v3271 = vld [vmem:[%s3270] sm:$0xc0]
    %vm3272 = vcmask 1047558
    %v3273 = vsel %vm3272, %v3271, %v3269
    %s3274 = scalar_lea.vmem [#allocation0], 8
    %v3275 = vld [vmem:[%s3274] sm:$0x3]
    %s3276 = scalar_lea.vmem [#allocation0], 30
    %v3277 = vld [vmem:[%s3276] sm:$0xc]
    %vm3278 = vcmask 1043458
    %v3279 = vsel %vm3278, %v3277, %v3275
    %s3280 = scalar_lea.vmem [#allocation0], 52
    %v3281 = vld [vmem:[%s3280] sm:$0x30]
    %vm3282 = vcmask 1045508
    %v3283 = vsel %vm3282, %v3281, %v3279
    %s3284 = scalar_lea.vmem [#allocation0], 74
    %v3285 = vld [vmem:[%s3284] sm:$0xc0]
    %vm3286 = vcmask 1047558
    %v3287 = vsel %vm3286, %v3285, %v3283
    %vm3288 = vcmask 1031168
    %v3289 = vsel %vm3288, %v3287, %v3273
    %3290 = vrot.lane.b32.xlu0 %v3289, 2
    %v3291 = vpop.permute.xlu0 %3290
    %vm3292 = vcmask 15360
    %s3293 = scalar_lea.vmem %s1, 21
    %3294 = vst.msk [vmem:[%s3293] sm:$0x1] %vm3292, %v3291
    %s3295 = scalar_lea.vmem %s1, 404
    %3296 = vst.msk [vmem:[%s3295] sm:$0x2] %vm3292, %v3291
    %s3297 = scalar_lea.vmem %s1, 83
    %3298 = vst.msk [vmem:[%s3297] sm:$0x4] %vm3292, %v3291
    %s3299 = scalar_lea.vmem %s1, 466
    %3300 = vst.msk [vmem:[%s3299] sm:$0x8] %vm3292, %v3291
    %s3301 = scalar_lea.vmem %s1, 145
    %3302 = vst.msk [vmem:[%s3301] sm:$0x10] %vm3292, %v3291
    %s3303 = scalar_lea.vmem %s1, 528
    %3304 = vst.msk [vmem:[%s3303] sm:$0x20] %vm3292, %v3291
    %s3305 = scalar_lea.vmem %s1, 207
    %3306 = vst.msk [vmem:[%s3305] sm:$0x40] %vm3292, %v3291
    %s3307 = scalar_lea.vmem %s1, 590
    %3308 = vst.msk [vmem:[%s3307] sm:$0x80] %vm3292, %v3291
    %vm3309 = vcmask 48144
    %s3310 = scalar_lea.vmem %s1, 21
    %3311 = vst.msk [vmem:[%s3310] sm:$0x1] %vm3309, %v3291
    %s3312 = scalar_lea.vmem %s1, 404
    %3313 = vst.msk [vmem:[%s3312] sm:$0x2] %vm3309, %v3291
    %s3314 = scalar_lea.vmem %s1, 83
    %3315 = vst.msk [vmem:[%s3314] sm:$0x4] %vm3309, %v3291
    %s3316 = scalar_lea.vmem %s1, 466
    %3317 = vst.msk [vmem:[%s3316] sm:$0x8] %vm3309, %v3291
    %s3318 = scalar_lea.vmem %s1, 145
    %3319 = vst.msk [vmem:[%s3318] sm:$0x10] %vm3309, %v3291
    %s3320 = scalar_lea.vmem %s1, 528
    %3321 = vst.msk [vmem:[%s3320] sm:$0x20] %vm3309, %v3291
    %s3322 = scalar_lea.vmem %s1, 207
    %3323 = vst.msk [vmem:[%s3322] sm:$0x40] %vm3309, %v3291
    %s3324 = scalar_lea.vmem %s1, 590
    %3325 = vst.msk [vmem:[%s3324] sm:$0x80] %vm3309, %v3291
    %s3326 = scalar_lea.vmem [#allocation0], 96
    %v3327 = vld [vmem:[%s3326] sm:$0x3]
    %s3328 = scalar_lea.vmem [#allocation0], 118
    %v3329 = vld [vmem:[%s3328] sm:$0xc]
    %vm3330 = vcmask 1043458
    %v3331 = vsel %vm3330, %v3329, %v3327
    %s3332 = scalar_lea.vmem [#allocation0], 104
    %v3333 = vld [vmem:[%s3332] sm:$0x3]
    %s3334 = scalar_lea.vmem [#allocation0], 126
    %v3335 = vld [vmem:[%s3334] sm:$0xc]
    %vm3336 = vcmask 1043458
    %v3337 = vsel %vm3336, %v3335, %v3333
    %vm3338 = vcmask 1031168
    %v3339 = vsel %vm3338, %v3337, %v3331
    %3340 = vrot.lane.b32.xlu0 %v3339, 2
    %v3341 = vpop.permute.xlu0 %3340
    %vm3342 = vcmask 15360
    %s3343 = scalar_lea.vmem %s1, 277
    %3344 = vst.msk [vmem:[%s3343] sm:$0x1] %vm3342, %v3341
    %s3345 = scalar_lea.vmem %s1, 660
    %3346 = vst.msk [vmem:[%s3345] sm:$0x2] %vm3342, %v3341
    %s3347 = scalar_lea.vmem %s1, 339
    %3348 = vst.msk [vmem:[%s3347] sm:$0x4] %vm3342, %v3341
    %s3349 = scalar_lea.vmem %s1, 722
    %3350 = vst.msk [vmem:[%s3349] sm:$0x8] %vm3342, %v3341
    %vm3351 = vcmask 48144
    %s3352 = scalar_lea.vmem %s1, 277
    %3353 = vst.msk [vmem:[%s3352] sm:$0x1] %vm3351, %v3341
    %s3354 = scalar_lea.vmem %s1, 660
    %3355 = vst.msk [vmem:[%s3354] sm:$0x2] %vm3351, %v3341
    %s3356 = scalar_lea.vmem %s1, 339
    %3357 = vst.msk [vmem:[%s3356] sm:$0x4] %vm3351, %v3341
    %s3358 = scalar_lea.vmem %s1, 722
    %3359 = vst.msk [vmem:[%s3358] sm:$0x8] %vm3351, %v3341

// kernel: _anchor_target_forward.2
$region0: #{_anchor_target_forward.2}
  #allocation0 [shape = 'u32[]', space=smem, size = 0x4, offset = 0x4, fixed_abs, tag = 'smem constant byte address 0x4 - core index']
  #allocation1 [shape = 'u32[144,128]{1,0:T(1,128)}', space=vmem, size = 0x12000, scoped, tag = 'internal scratch']
  %s0 = inlined_call_operand.hbm [shape: f32[2,25], index: 0, kind: input, shape index: {}]
  %s1 = inlined_call_operand.vmem [shape: s32[2], index: 1, kind: input, shape index: {}]
  %s2 = inlined_call_operand.hbm [shape: f32[5,8,512], index: 2, kind: input, shape index: {}]
  %s3 = inlined_call_operand.vmem [shape: f32[8,512], index: 3, kind: input, shape index: {}]
  %s4 = inlined_call_operand.vmem [shape: f32[2,2,8,128], index: 4, kind: output, shape index: {}]
  %s5 = sld [smem:[#allocation0]]
  $region68: #{_anchor_target_forward.2} parent=0
    _
  %s7 = ssub.s32 1, %s5
  %s8 = scalar_select 0, %s7, %s5
  $region1: #{_anchor_target_forward.2} parent=0
    #allocation2 [shape = 'u8[1024]{0}', space=smem, size = 0x400, scoped, tag = 'input window, operand 0, single buffered']
    #allocation3 [shape = 's32[2]{0}', space=sflag, size = 0x8, scoped, tag = 'scoped memory for _anchor_target_forward.2']
    #allocation4 [shape = 's32[2]{0}', space=sflag, size = 0x8, scoped, tag = 'scoped memory for _anchor_target_forward.2']
    #allocation5 [shape = 's32[2]{0}', space=sflag, size = 0x8, scoped, tag = 'scoped memory for _anchor_target_forward.2']
    #allocation6 [shape = 'u8[512]{0}', space=smem, size = 0x200, scoped, tag = 'input window, operand 1, single buffered']
    #allocation7 [shape = 'u8[81920]{0}', space=vmem, size = 0x14000, scoped, tag = 'input window, operand 2']
    %9 = vsyncpa [#allocation4], 0
    %10 = vsyncpa [#allocation5], 0
    %11 = vsyncpa [#allocation3], 0
    %s12 = scalar_lea.sflag [#allocation3], 1
    %13 = vsyncpa %s12, 0
    loop: start=0, step=1, limit=6
    $region2: #{_anchor_target_forward.2} parent=1 // loop_pre_header
      _
    $region3: #{_anchor_target_forward.2} parent=1 // loop_header
      %s15 = sphi 0, %s19
      %p16 = scmp.ge.s32.totalorder %s15, 6
      %s22 = sphi 0, %s34
      %s23 = sphi 0, %s30
      %s24 = sphi 0, %s22
      %s25 = sphi 0, %s23
      %s26 = sphi 0, %s24
      %s27 = sphi 0, %s25
      %s35 = sphi 0, %s35
      %s37 = sphi 0, %s35
      %s38 = sphi 0, %s37
      %s52 = sphi 0, %s38
      %s56 = sphi 0, %s56
      %s58 = sphi 0, %s56
      %s59 = sphi 0, %s58
      %s73 = sphi 0, %s59
      %s79 = sphi 0, %s81
      %s82 = sphi 0, %s79
      %s83 = sphi 0, %s82
      %s99 = sphi 0, %s83
      %s105 = sphi 0, %s107
      %s108 = sphi 0, %s105
      %s109 = sphi 0, %s108
      %s125 = sphi 0, %s109
      %s133 = sphi 0, %s135
      %s136 = sphi 0, %s133
      %s137 = sphi 0, %s136
      %s153 = sphi 0, %s137
    $region4: #{_anchor_target_forward.2} parent=1 // loop_header_branch
      %18 = sbr.rel (%p16) target = $region8
    $region5: #{_anchor_target_forward.2} parent=1 // loop_body
      %s20 = ssub.s32 %s15, 1
      %s21 = ssub.s32 %s15, 2
      %s28 = sadd.s32 1, %s23
      %p29 = scmp.ge.s32.totalorder %s28, 2
      %s30 = scalar_select %p29, 0, %s28
      %s31 = sadd.s32 1, %s22
      %s32 = scalar_select %p29, %s31, %s22
      %p33 = scmp.ge.s32.totalorder %s32, 2
      %s34 = scalar_select %p33, 0, %s32
      %s36 = sadd.s32 %s35, 1
      %p39 = scmp.eq.s32.totalorder %s15, 3
      %p40 = scmp.ne.s32.totalorder %s35, %s37
      %p41 = scmp.eq.s32.totalorder %s15, 0
      %p42 = por %p40, %p41
      %p43 = scmp.ne.s32.totalorder %s35, %s37
      %p44 = scmp.eq.s32.totalorder %s20, 3
      %p45 = por %p43, %p44
      %p46 = scmp.ne.s32.totalorder %s37, %s38
      %p47 = scmp.eq.s32.totalorder %s20, 0
      %p48 = por %p46, %p47
      %p49 = scmp.ne.s32.totalorder %s37, %s38
      %p50 = scmp.eq.s32.totalorder %s21, 3
      %p51 = por %p49, %p50
      %p53 = scmp.ne.s32.totalorder %s38, %s52
      %p54 = scmp.eq.s32.totalorder %s21, 0
      %p55 = por %p53, %p54
      %s57 = sadd.s32 %s56, 1
      %p60 = scmp.eq.s32.totalorder %s15, 3
      %p61 = scmp.ne.s32.totalorder %s56, %s58
      %p62 = scmp.eq.s32.totalorder %s15, 0
      %p63 = por %p61, %p62
      %p64 = scmp.ne.s32.totalorder %s56, %s58
      %p65 = scmp.eq.s32.totalorder %s20, 3
      %p66 = por %p64, %p65
      %p67 = scmp.ne.s32.totalorder %s58, %s59
      %p68 = scmp.eq.s32.totalorder %s20, 0
      %p69 = por %p67, %p68
      %p70 = scmp.ne.s32.totalorder %s58, %s59
      %p71 = scmp.eq.s32.totalorder %s21, 3
      %p72 = por %p70, %p71
      %p74 = scmp.ne.s32.totalorder %s59, %s73
      %p75 = scmp.eq.s32.totalorder %s21, 0
      %p76 = por %p74, %p75
      %s77 = ssub.s32 %s23, %s30
      %p78 = scmp.eq.s32.totalorder %s77, 0
      %s80 = sadd.s32 %s79, 1
      %s81 = scalar_select %p78, %s79, %s80
      %p84 = pneg %p78
      %p85 = scmp.eq.s32.totalorder %s15, 3
      %p86 = por %p84, %p85
      %p87 = scmp.ne.s32.totalorder %s79, %s82
      %p88 = scmp.eq.s32.totalorder %s15, 0
      %p89 = por %p87, %p88
      %p90 = scmp.ne.s32.totalorder %s79, %s82
      %p91 = scmp.eq.s32.totalorder %s20, 3
      %p92 = por %p90, %p91
      %p93 = scmp.ne.s32.totalorder %s82, %s83
      %p94 = scmp.eq.s32.totalorder %s20, 0
      %p95 = por %p93, %p94
      %p96 = scmp.ne.s32.totalorder %s82, %s83
      %p97 = scmp.eq.s32.totalorder %s21, 3
      %p98 = por %p96, %p97
      %p100 = scmp.ne.s32.totalorder %s83, %s99
      %p101 = scmp.eq.s32.totalorder %s21, 0
      %p102 = por %p100, %p101
      %s103 = ssub.s32 %s23, %s30
      %p104 = scmp.eq.s32.totalorder %s103, 0
      %s106 = sadd.s32 %s105, 1
      %s107 = scalar_select %p104, %s105, %s106
      %p110 = pneg %p104
      %p111 = scmp.eq.s32.totalorder %s15, 3
      %p112 = por %p110, %p111
      %p113 = scmp.ne.s32.totalorder %s105, %s108
      %p114 = scmp.eq.s32.totalorder %s15, 0
      %p115 = por %p113, %p114
      %p116 = scmp.ne.s32.totalorder %s105, %s108
      %p117 = scmp.eq.s32.totalorder %s20, 3
      %p118 = por %p116, %p117
      %p119 = scmp.ne.s32.totalorder %s108, %s109
      %p120 = scmp.eq.s32.totalorder %s20, 0
      %p121 = por %p119, %p120
      %p122 = scmp.ne.s32.totalorder %s108, %s109
      %p123 = scmp.eq.s32.totalorder %s21, 3
      %p124 = por %p122, %p123
      %p126 = scmp.ne.s32.totalorder %s109, %s125
      %p127 = scmp.eq.s32.totalorder %s21, 0
      %p128 = por %p126, %p127
      %s129 = ssub.s32 %s22, %s34
      %s130 = ssub.s32 %s23, %s30
      %s131 = sor.u32 %s129, %s130
      %p132 = scmp.eq.s32.totalorder %s131, 0
      %s134 = sadd.s32 %s133, 1
      %s135 = scalar_select %p132, %s133, %s134
      %p138 = pneg %p132
      %p139 = scmp.eq.s32.totalorder %s15, 3
      %p140 = por %p138, %p139
      %p141 = scmp.ne.s32.totalorder %s133, %s136
      %p142 = scmp.eq.s32.totalorder %s15, 0
      %p143 = por %p141, %p142
      %p144 = scmp.ne.s32.totalorder %s133, %s136
      %p145 = scmp.eq.s32.totalorder %s20, 3
      %p146 = por %p144, %p145
      %p147 = scmp.ne.s32.totalorder %s136, %s137
      %p148 = scmp.eq.s32.totalorder %s20, 0
      %p149 = por %p147, %p148
      %p150 = scmp.ne.s32.totalorder %s136, %s137
      %p151 = scmp.eq.s32.totalorder %s21, 3
      %p152 = por %p150, %p151
      %p154 = scmp.ne.s32.totalorder %s137, %s153
      %p155 = scmp.eq.s32.totalorder %s21, 0
      %p156 = por %p154, %p155
      %p157 = scmp.le.s32.totalorder 1, %s15
      %p158 = scmp.lt.s32.totalorder %s15, 5
      %p159 = pnand %p157, %p158
      %p160 = pneg %p159
      // Predicated region
      $region9: #{_anchor_target_forward.2} parent=5 // pred_check
        _
      $region10: #{_anchor_target_forward.2} parent=5 // pred_check_branch
        %162 = sbr.rel (%p159) target = $region12
      $region11: #{_anchor_target_forward.2} parent=5 // pred_region
        %s163 = ssub.s32 %s15, 1
        // Predicated region
        $region13: #{_anchor_target_forward.2} parent=11 // pred_check
          %p164 = pneg %p48
        $region14: #{_anchor_target_forward.2} parent=11 // pred_check_branch
          %166 = sbr.rel (%p164) target = $region16
        $region15: #{_anchor_target_forward.2} parent=11 // pred_region
          %s168 = ssub.s32 32, 32
          %169 = vsyncadd [#allocation4], %s168
          %172 = dma.hbm_to_smem %s0, 32, [#allocation2], [#allocation4]
        $region16: #{_anchor_target_forward.2} parent=11 // pred_fallthru
          _
        // Predicated region
        $region17: #{_anchor_target_forward.2} parent=11 // pred_check
          %p173 = pneg %p69
        $region18: #{_anchor_target_forward.2} parent=11 // pred_check_branch
          %175 = sbr.rel (%p173) target = $region20
        $region19: #{_anchor_target_forward.2} parent=11 // pred_region
          %s177 = ssub.s32 16, 16
          %178 = vsyncadd [#allocation5], %s177
          %s180 = sshll.u32 %s1, 4
          %s181 = int_to_ptr.vmem [resolvable:$true] %s180
          %183 = dma.vmem_to_smem %s181, 16, [#allocation6], [#allocation5]
        $region20: #{_anchor_target_forward.2} parent=11 // pred_fallthru
          _
      $region12: #{_anchor_target_forward.2} parent=5 // pred_fallthru
        _
      %p184 = scmp.lt.s32.totalorder %s15, 4
      // Predicated region
      $region21: #{_anchor_target_forward.2} parent=5 // pred_check
        %p185 = pneg %p184
      $region22: #{_anchor_target_forward.2} parent=5 // pred_check_branch
        %187 = sbr.rel (%p185) target = $region24
      $region23: #{_anchor_target_forward.2} parent=5 // pred_region
        // Predicated region
        $region25: #{_anchor_target_forward.2} parent=23 // pred_check
          %p188 = pneg %p89
        $region26: #{_anchor_target_forward.2} parent=23 // pred_check_branch
          %190 = sbr.rel (%p188) target = $region28
        $region27: #{_anchor_target_forward.2} parent=23 // pred_region
          %s191 = sand.u32 %s79, 1
          %s192 = scalar_lea.sflag [#allocation3], %s191
          %s193 = sand.u32 %s79, 1
          %s194 = smul.addr %s193, 80
          %s195 = scalar_lea.vmem [#allocation7], %s194
          %s196 = smul.u32 2, %s23
          %s198 = ssub.s32 1280, 1280
          %199 = vsyncadd %s192, %s198
          %s200 = smul.addr %s196, 128
          %s201 = scalar_lea.hbm %s2, %s200
          %s202 = sshll.u32 %s195, 4
          %s203 = int_to_ptr.vmem [resolvable:$true] %s202
          %208 = dma.hbm_to_vmem [thread:$0]  %s201, 1280, %s203, %s192, 512, 256, 16
        $region28: #{_anchor_target_forward.2} parent=23 // pred_fallthru
          _
        // Predicated region
        $region29: #{_anchor_target_forward.2} parent=23 // pred_check
          %p209 = pneg %p115
        $region30: #{_anchor_target_forward.2} parent=23 // pred_check_branch
          %211 = sbr.rel (%p209) target = $region32
        $region31: #{_anchor_target_forward.2} parent=23 // pred_region
          %s212 = smul.u32 2, %s23
          %p213 = scmp.lt.s32.totalorder %s212, 3
          %s214 = scalar_select %p213, %s212, 3
          %s215 = smul.addr %s214, 8
          %s216 = scalar_lea.vmem %s3, %s215
          %s217 = smul.u32 2, %s23
        $region32: #{_anchor_target_forward.2} parent=23 // pred_fallthru
          _
      $region24: #{_anchor_target_forward.2} parent=5 // pred_fallthru
        _
      %p218 = scmp.le.s32.totalorder 1, %s15
      %p219 = scmp.lt.s32.totalorder %s15, 5
      %p220 = pnand %p218, %p219
      %p221 = pneg %p220
      // Predicated region
      $region33: #{_anchor_target_forward.2} parent=5 // pred_check
        _
      $region34: #{_anchor_target_forward.2} parent=5 // pred_check_branch
        %223 = sbr.rel (%p220) target = $region36
      $region35: #{_anchor_target_forward.2} parent=5 // pred_region
        %s224 = ssub.s32 %s15, 1
        // Predicated region
        $region37: #{_anchor_target_forward.2} parent=35 // pred_check
          %p225 = pneg %p48
        $region38: #{_anchor_target_forward.2} parent=35 // pred_check_branch
          %227 = sbr.rel (%p225) target = $region40
        $region39: #{_anchor_target_forward.2} parent=35 // pred_region
          %228 = dma.done [#allocation4], 32
        $region40: #{_anchor_target_forward.2} parent=35 // pred_fallthru
          _
        // Predicated region
        $region41: #{_anchor_target_forward.2} parent=35 // pred_check
          %p229 = pneg %p69
        $region42: #{_anchor_target_forward.2} parent=35 // pred_check_branch
          %231 = sbr.rel (%p229) target = $region44
        $region43: #{_anchor_target_forward.2} parent=35 // pred_region
          %232 = dma.done [#allocation5], 16
        $region44: #{_anchor_target_forward.2} parent=35 // pred_fallthru
          _
        %s233 = sand.u32 %s82, 1
        %s234 = scalar_lea.sflag [#allocation3], %s233
        %s235 = sand.u32 %s82, 1
        %s236 = smul.addr %s235, 80
        %s237 = scalar_lea.vmem [#allocation7], %s236
        // Predicated region
        $region45: #{_anchor_target_forward.2} parent=35 // pred_check
          %p238 = pneg %p95
        $region46: #{_anchor_target_forward.2} parent=35 // pred_check_branch
          %240 = sbr.rel (%p238) target = $region48
        $region47: #{_anchor_target_forward.2} parent=35 // pred_region
          %241 = dma.done %s234, 1280
        $region48: #{_anchor_target_forward.2} parent=35 // pred_fallthru
          _
        %242 = sfence
        %p243 = pneg %p48
        %p244 = pneg %p45
        %p245 = pneg %p69
        %p246 = pneg %p66
        %s247 = sand.u32 %s82, 1
        %s248 = scalar_lea.sflag [#allocation3], %s247
        %s249 = sand.u32 %s82, 1
        %s250 = smul.addr %s249, 80
        %s251 = scalar_lea.vmem [#allocation7], %s250
        %p252 = pneg %p95
        %p253 = pneg %p92
        %s254 = smul.u32 2, %s25
        %p255 = scmp.lt.s32.totalorder %s254, 3
        %s256 = scalar_select %p255, %s254, 3
        %s257 = smul.addr %s256, 8
        %s258 = scalar_lea.vmem %s3, %s257
        %p259 = pneg %p121
        %p260 = pneg %p118
        %p261 = pneg %p149
        %p262 = pneg %p146
        %p263 = scmp.lt.s32.totalorder %s24, 1
        %s264 = scalar_select %p263, %s24, 1
        %p265 = scmp.lt.s32.totalorder %s25, 1
        %s266 = scalar_select %p265, %s25, 1
        %s267 = smul.addr %s264, 2
        %s268 = sadd.s32 %s266, %s267
        %s269 = smul.addr %s268, 8
        %s270 = scalar_lea.vmem %s4, %s269
        %s271 = smul.u32 2, %s25
        %s272 = smul.u32 2, %s25
        %p273 = scmp.lt.s32.totalorder %s272, 3
        %s274 = scalar_select %p273, %s272, 3
        %s275 = smul.addr %s274, 8
        %s276 = scalar_lea.vmem %s3, %s275
        %s277 = smul.u32 2, %s25
        %p278 = scmp.lt.s32.totalorder %s24, 1
        %s279 = scalar_select %p278, %s24, 1
        %p280 = scmp.lt.s32.totalorder %s25, 1
        %s281 = scalar_select %p280, %s25, 1
        %s282 = smul.addr %s279, 2
        %s283 = sadd.s32 %s281, %s282
        %s284 = smul.addr %s283, 8
        %s285 = scalar_lea.vmem %s4, %s284
        %v286 = vld [vmem:[%s237] sm:$0xff]
        %v287 = vld [vmem:[%s237 + $0x8] sm:$0xff]
        %s288 = scalar_lea.vmem %s237, 16 [#allocation7]
        %v289 = vld [vmem:[%s288] sm:$0xff]
        %v290 = vld [vmem:[%s288 + $0x8] sm:$0xff]
        %s291 = scalar_lea.vmem %s237, 32 [#allocation7]
        %v292 = vld [vmem:[%s291] sm:$0xff]
        %v293 = vld [vmem:[%s291 + $0x8] sm:$0xff]
        %s294 = scalar_lea.vmem %s237, 48 [#allocation7]
        %v295 = vld [vmem:[%s294] sm:$0xff]
        %v296 = vld [vmem:[%s294 + $0x8] sm:$0xff]
        %s297 = scalar_lea.vmem %s237, 64 [#allocation7]
        %v298 = vld [vmem:[%s297] sm:$0xff]
        %v299 = vld [vmem:[%s297 + $0x8] sm:$0xff]
        %v300 = vld [vmem:[%s276] sm:$0xff]
        %v301 = vld [vmem:[%s276 + $0x8] sm:$0xff]
        %vm302 = vcmp.gt.f32.partialorder %v300, 0.5
        %vm303 = vcmp.gt.f32.partialorder %v301, 0.5
        %v304 = vlaneseq
        %v305 = vand.u32 %v304, 127
        %s306 = sld [smem:[#allocation6 + %s24]]
        // While loop
        $region49: #{_anchor_target_forward.2} parent=35 // loop_pre_header
          _
        $region50: #{_anchor_target_forward.2} parent=35 // loop_header
          %s308 = sphi 0, %s310
          %p309 = scmp.ge.s32.totalorder %s308, %s306
          %v313 = vphi 0.0, %v411
        $region51: #{_anchor_target_forward.2} parent=35 // loop_header_branch
          %312 = sbr.rel (%p309) target = $region55
        $region52: #{_anchor_target_forward.2} parent=35 // loop_body
          %s314 = smul.u32 %s308, 5
          %s315 = sshra.s32 %s314, 7
          %s316 = sand.u32 %s314, 127
          %s317 = sadd.s32 %s315, %s24
          %s318 = smul.u32 %s317, 128
          %s319 = sshra.s32 %s314, 7
          %s320 = sand.u32 %s314, 127
          %s321 = sadd.s32 %s318, %s320
          %s322 = sld [smem:[#allocation2 + %s321]]
          %s323 = sadd.s32 %s314, 1
          %s324 = sshra.s32 %s323, 7
          %s325 = sand.u32 %s323, 127
          %s326 = sadd.s32 %s324, %s24
          %s327 = smul.u32 %s326, 128
          %s328 = sshra.s32 %s323, 7
          %s329 = sand.u32 %s323, 127
          %s330 = sadd.s32 %s327, %s329
          %s331 = sld [smem:[#allocation2 + %s330]]
          %s332 = sadd.s32 %s314, 2
          %s333 = sshra.s32 %s332, 7
          %s334 = sand.u32 %s332, 127
          %s335 = sadd.s32 %s333, %s24
          %s336 = smul.u32 %s335, 128
          %s337 = sshra.s32 %s332, 7
          %s338 = sand.u32 %s332, 127
          %s339 = sadd.s32 %s336, %s338
          %s340 = sld [smem:[#allocation2 + %s339]]
          %s341 = sadd.s32 %s314, 3
          %s342 = sshra.s32 %s341, 7
          %s343 = sand.u32 %s341, 127
          %s344 = sadd.s32 %s342, %s24
          %s345 = smul.u32 %s344, 128
          %s346 = sshra.s32 %s341, 7
          %s347 = sand.u32 %s341, 127
          %s348 = sadd.s32 %s345, %s347
          %s349 = sld [smem:[#allocation2 + %s348]]
          %s350 = ssub.f32 %s340, %s322
          %s351 = sadd.f32 %s350, 1.0
          %s352 = ssub.f32 %s349, %s331
          %s353 = sadd.f32 %s352, 1.0
          %s354 = smul.f32 %s351, %s353
          %p355 = scmp.eq.f32.partialorder %s351, 1.0
          %p356 = scmp.eq.f32.partialorder %s353, 1.0
          %p357 = pnand %p355, %p356
          %p358 = pneg %p357
          %s359 = scalar_select %p358, 0.0, 1.0
          %v360 = vstv %s340
          %v361 = vmin.f32 %v292, %v360
          %v362 = vmin.f32 %v293, %v360
          %v363 = vstv %s322
          %v364 = vmax.f32 %v286, %v363
          %v365 = vmax.f32 %v287, %v363
          %v366 = vsub.f32 %v361, %v364
          %v367 = vsub.f32 %v362, %v365
          %v368 = vadd.f32 %v366, 1.0
          %v369 = vadd.f32 %v367, 1.0
          %v370 = vmax.f32 %v368, 0.0
          %v371 = vmax.f32 %v369, 0.0
          %v372 = vstv %s349
          %v373 = vmin.f32 %v295, %v372
          %v374 = vmin.f32 %v296, %v372
          %v375 = vstv %s331
          %v376 = vmax.f32 %v289, %v375
          %v377 = vmax.f32 %v290, %v375
          %v378 = vsub.f32 %v373, %v376
          %v379 = vsub.f32 %v374, %v377
          %v380 = vadd.f32 %v378, 1.0
          %v381 = vadd.f32 %v379, 1.0
          %v382 = vmax.f32 %v380, 0.0
          %v383 = vmax.f32 %v381, 0.0
          %v384 = vmul.f32 %v370, %v382
          %v385 = vmul.f32 %v371, %v383
          %v386 = vstv %s354
          %v387 = vadd.f32 %v298, %v386
          %v388 = vadd.f32 %v299, %v386
          %v389 = vsub.f32 %v387, %v384
          %v390 = vsub.f32 %v388, %v385
          %v391 = vrcp.pop %v389
          %v392 = vrcp.pop %v390
          %v393 = vmul.f32 %v384, %v391
          %v394 = vmul.f32 %v385, %v392
          %v395 = vstv %s359
          %v396 = vmul.f32 %v393, %v395
          %v397 = vmul.f32 %v394, %v395
          %v398 = vsel %vm302, %v396, 0.0
          %v399 = vsel %vm303, %v397, 0.0
          %v400 = vmax.f32 %v398, %v399
          %401 = vmax.xlane.f32.xlu0 %v400
          %v402 = vpop.xlane.xlu0 %401
          %v403 = vrot.slane %v402, 4
          %v404 = vmax.f32 %v402, %v403
          %v405 = vrot.slane %v404, 2
          %v406 = vmax.f32 %v404, %v405
          %v407 = vrot.slane %v406, 1
          %v408 = vmax.f32 %v406, %v407
          %v409 = vstv %s308
          %vm410 = vcmp.eq.s32.totalorder %v305, %v409
          %v411 = vsel %vm410, %v408, %v313
        $region53: #{_anchor_target_forward.2} parent=35 // loop_footer
          %s310 = sadd.s32 %s308, 1
        $region54: #{_anchor_target_forward.2} parent=35 // loop_footer_branch
          %307 = sbr.rel target = $region50
        $region55: #{_anchor_target_forward.2} parent=35 // loop_exit
          _
        %412 = vst [vmem:[%s285] sm:$0xff] %v313
        %p413 = scmp.lt.s32.totalorder %s24, 1
        %s414 = scalar_select %p413, %s24, 1
        %p415 = scmp.lt.s32.totalorder %s25, 1
        %s416 = scalar_select %p415, %s25, 1
        %s417 = smul.addr %s414, 2
        %s418 = sadd.s32 %s416, %s417
        %s419 = smul.addr %s418, 8
        %s420 = scalar_lea.vmem %s4, %s419
        // Predicated region
        $region56: #{_anchor_target_forward.2} parent=35 // pred_check
          %p421 = pneg %p146
        $region57: #{_anchor_target_forward.2} parent=35 // pred_check_branch
          %423 = sbr.rel (%p421) target = $region59
        $region58: #{_anchor_target_forward.2} parent=35 // pred_region
          _
        $region59: #{_anchor_target_forward.2} parent=35 // pred_fallthru
          _
      $region36: #{_anchor_target_forward.2} parent=5 // pred_fallthru
        _
      %p424 = scmp.le.s32.totalorder 2, %s15
      // Predicated region
      $region60: #{_anchor_target_forward.2} parent=5 // pred_check
        %p425 = pneg %p424
      $region61: #{_anchor_target_forward.2} parent=5 // pred_check_branch
        %427 = sbr.rel (%p425) target = $region63
      $region62: #{_anchor_target_forward.2} parent=5 // pred_region
        %s428 = ssub.s32 %s15, 2
        // Predicated region
        $region64: #{_anchor_target_forward.2} parent=62 // pred_check
          %p429 = pneg %p152
        $region65: #{_anchor_target_forward.2} parent=62 // pred_check_branch
          %431 = sbr.rel (%p429) target = $region67
        $region66: #{_anchor_target_forward.2} parent=62 // pred_region
          %p432 = scmp.lt.s32.totalorder %s26, 1
          %s433 = scalar_select %p432, %s26, 1
          %p434 = scmp.lt.s32.totalorder %s27, 1
          %s435 = scalar_select %p434, %s27, 1
          %s436 = smul.addr %s433, 2
          %s437 = sadd.s32 %s435, %s436
          %s438 = smul.addr %s437, 8
          %s439 = scalar_lea.vmem %s4, %s438
        $region67: #{_anchor_target_forward.2} parent=62 // pred_fallthru
          _
      $region63: #{_anchor_target_forward.2} parent=5 // pred_fallthru
        _
    $region6: #{_anchor_target_forward.2} parent=1 // loop_footer
      %s19 = sadd.s32 1, %s15
    $region7: #{_anchor_target_forward.2} parent=1 // loop_footer_branch
      %14 = sbr.rel target = $region3
    $region8: #{_anchor_target_forward.2} parent=1 // loop_exit
      _
    %440 = vsyncpa [#allocation3], 1
    %s441 = scalar_lea.sflag [#allocation3], 1
    %442 = vsyncpa %s441, 1
    %443 = vsyncpa [#allocation4], 1
    %s444 = scalar_lea.sflag [#allocation4], 1
    %445 = vsyncpa %s444, 1
    %446 = vsyncpa [#allocation5], 1
    %s447 = scalar_lea.sflag [#allocation5], 1
    %448 = vsyncpa %s447, 1

// kernel: _anchor_target_forward.3
$region0: #{_anchor_target_forward.3}
  #allocation0 [shape = 'u32[]', space=smem, size = 0x4, offset = 0x4, fixed_abs, tag = 'smem constant byte address 0x4 - core index']
  #allocation1 [shape = 'u32[144,128]{1,0:T(1,128)}', space=vmem, size = 0x12000, scoped, tag = 'internal scratch']
  %s0 = inlined_call_operand.hbm [shape: f32[2,25], index: 0, kind: input, shape index: {}]
  %s1 = inlined_call_operand.vmem [shape: s32[2], index: 1, kind: input, shape index: {}]
  %s2 = inlined_call_operand.vmem [shape: f32[2,5], index: 2, kind: input, shape index: {}]
  %s3 = inlined_call_operand.hbm [shape: f32[5,8,512], index: 3, kind: input, shape index: {}]
  %s4 = inlined_call_operand.hbm [shape: f32[4,8,512], index: 4, kind: input, shape index: {}]
  %s5 = inlined_call_operand.vmem [shape: f32[8,512], index: 5, kind: input, shape index: {}]
  %s6 = inlined_call_operand.vmem [shape: f32[2,6,8,512], index: 6, kind: output, shape index: {}]
  %s7 = sld [smem:[#allocation0]]
  $region103: #{_anchor_target_forward.3} parent=0
    _
  %s9 = ssub.s32 1, %s7
  %s10 = scalar_select 0, %s9, %s7
  $region1: #{_anchor_target_forward.3} parent=0
    #allocation2 [shape = 'u8[1024]{0}', space=smem, size = 0x400, scoped, tag = 'input window, operand 0, single buffered']
    #allocation3 [shape = 's32[2]{0}', space=sflag, size = 0x8, scoped, tag = 'scoped memory for _anchor_target_forward.3']
    #allocation4 [shape = 's32[2]{0}', space=sflag, size = 0x8, scoped, tag = 'scoped memory for _anchor_target_forward.3']
    #allocation5 [shape = 's32[2]{0}', space=sflag, size = 0x8, scoped, tag = 'scoped memory for _anchor_target_forward.3']
    #allocation6 [shape = 'u8[512]{0}', space=smem, size = 0x200, scoped, tag = 'input window, operand 1, single buffered']
    #allocation7 [shape = 'u8[1024]{0}', space=smem, size = 0x400, scoped, tag = 'input window, operand 2, single buffered']
    #allocation8 [shape = 's32[1]{0}', space=sflag, size = 0x4, scoped, tag = 'scoped memory for _anchor_target_forward.3']
    #allocation9 [shape = 'u8[81920]{0}', space=vmem, size = 0x14000, scoped, tag = 'input window, operand 3']
    #allocation10 [shape = 'u8[65536]{0}', space=vmem, size = 0x10000, scoped, tag = 'input window, operand 4']
    #allocation11 [shape = 's32[2]{0}', space=sflag, size = 0x8, scoped, tag = 'scoped memory for _anchor_target_forward.3']
    #allocation12 [shape = 'u8[98304]{0}', space=vmem, size = 0x18000, scoped, tag = 'output window, operand 0']
    %11 = vsyncpa [#allocation4], 0
    %12 = vsyncpa [#allocation5], 0
    %13 = vsyncpa [#allocation8], 0
    %14 = vsyncpa [#allocation3], 0
    %s15 = scalar_lea.sflag [#allocation3], 1
    %16 = vsyncpa %s15, 0
    %17 = vsyncpa [#allocation11], 0
    %s18 = scalar_lea.sflag [#allocation11], 1
    %19 = vsyncpa %s18, 0
    loop: start=0, step=1, limit=6
    $region2: #{_anchor_target_forward.3} parent=1 // loop_pre_header
      _
    $region3: #{_anchor_target_forward.3} parent=1 // loop_header
      %s21 = sphi 0, %s25
      %p22 = scmp.ge.s32.totalorder %s21, 6
      %s28 = sphi 0, %s40
      %s29 = sphi 0, %s36
      %s30 = sphi 0, %s28
      %s31 = sphi 0, %s29
      %s32 = sphi 0, %s30
      %s33 = sphi 0, %s31
      %s41 = sphi 0, %s41
      %s43 = sphi 0, %s41
      %s44 = sphi 0, %s43
      %s58 = sphi 0, %s44
      %s62 = sphi 0, %s62
      %s64 = sphi 0, %s62
      %s65 = sphi 0, %s64
      %s79 = sphi 0, %s65
      %s83 = sphi 0, %s83
      %s85 = sphi 0, %s83
      %s86 = sphi 0, %s85
      %s100 = sphi 0, %s86
      %s106 = sphi 0, %s108
      %s109 = sphi 0, %s106
      %s110 = sphi 0, %s109
      %s126 = sphi 0, %s110
      %s132 = sphi 0, %s134
      %s135 = sphi 0, %s132
      %s136 = sphi 0, %s135
      %s152 = sphi 0, %s136
      %s158 = sphi 0, %s160
      %s161 = sphi 0, %s158
      %s162 = sphi 0, %s161
      %s178 = sphi 0, %s162
      %s186 = sphi 0, %s188
      %s189 = sphi 0, %s186
      %s190 = sphi 0, %s189
      %s206 = sphi 0, %s190
    $region4: #{_anchor_target_forward.3} parent=1 // loop_header_branch
      %24 = sbr.rel (%p22) target = $region8
    $region5: #{_anchor_target_forward.3} parent=1 // loop_body
      %s26 = ssub.s32 %s21, 1
      %s27 = ssub.s32 %s21, 2
      %s34 = sadd.s32 1, %s29
      %p35 = scmp.ge.s32.totalorder %s34, 2
      %s36 = scalar_select %p35, 0, %s34
      %s37 = sadd.s32 1, %s28
      %s38 = scalar_select %p35, %s37, %s28
      %p39 = scmp.ge.s32.totalorder %s38, 2
      %s40 = scalar_select %p39, 0, %s38
      %s42 = sadd.s32 %s41, 1
      %p45 = scmp.eq.s32.totalorder %s21, 3
      %p46 = scmp.ne.s32.totalorder %s41, %s43
      %p47 = scmp.eq.s32.totalorder %s21, 0
      %p48 = por %p46, %p47
      %p49 = scmp.ne.s32.totalorder %s41, %s43
      %p50 = scmp.eq.s32.totalorder %s26, 3
      %p51 = por %p49, %p50
      %p52 = scmp.ne.s32.totalorder %s43, %s44
      %p53 = scmp.eq.s32.totalorder %s26, 0
      %p54 = por %p52, %p53
      %p55 = scmp.ne.s32.totalorder %s43, %s44
      %p56 = scmp.eq.s32.totalorder %s27, 3
      %p57 = por %p55, %p56
      %p59 = scmp.ne.s32.totalorder %s44, %s58
      %p60 = scmp.eq.s32.totalorder %s27, 0
      %p61 = por %p59, %p60
      %s63 = sadd.s32 %s62, 1
      %p66 = scmp.eq.s32.totalorder %s21, 3
      %p67 = scmp.ne.s32.totalorder %s62, %s64
      %p68 = scmp.eq.s32.totalorder %s21, 0
      %p69 = por %p67, %p68
      %p70 = scmp.ne.s32.totalorder %s62, %s64
      %p71 = scmp.eq.s32.totalorder %s26, 3
      %p72 = por %p70, %p71
      %p73 = scmp.ne.s32.totalorder %s64, %s65
      %p74 = scmp.eq.s32.totalorder %s26, 0
      %p75 = por %p73, %p74
      %p76 = scmp.ne.s32.totalorder %s64, %s65
      %p77 = scmp.eq.s32.totalorder %s27, 3
      %p78 = por %p76, %p77
      %p80 = scmp.ne.s32.totalorder %s65, %s79
      %p81 = scmp.eq.s32.totalorder %s27, 0
      %p82 = por %p80, %p81
      %s84 = sadd.s32 %s83, 1
      %p87 = scmp.eq.s32.totalorder %s21, 3
      %p88 = scmp.ne.s32.totalorder %s83, %s85
      %p89 = scmp.eq.s32.totalorder %s21, 0
      %p90 = por %p88, %p89
      %p91 = scmp.ne.s32.totalorder %s83, %s85
      %p92 = scmp.eq.s32.totalorder %s26, 3
      %p93 = por %p91, %p92
      %p94 = scmp.ne.s32.totalorder %s85, %s86
      %p95 = scmp.eq.s32.totalorder %s26, 0
      %p96 = por %p94, %p95
      %p97 = scmp.ne.s32.totalorder %s85, %s86
      %p98 = scmp.eq.s32.totalorder %s27, 3
      %p99 = por %p97, %p98
      %p101 = scmp.ne.s32.totalorder %s86, %s100
      %p102 = scmp.eq.s32.totalorder %s27, 0
      %p103 = por %p101, %p102
      %s104 = ssub.s32 %s29, %s36
      %p105 = scmp.eq.s32.totalorder %s104, 0
      %s107 = sadd.s32 %s106, 1
      %s108 = scalar_select %p105, %s106, %s107
      %p111 = pneg %p105
      %p112 = scmp.eq.s32.totalorder %s21, 3
      %p113 = por %p111, %p112
      %p114 = scmp.ne.s32.totalorder %s106, %s109
      %p115 = scmp.eq.s32.totalorder %s21, 0
      %p116 = por %p114, %p115
      %p117 = scmp.ne.s32.totalorder %s106, %s109
      %p118 = scmp.eq.s32.totalorder %s26, 3
      %p119 = por %p117, %p118
      %p120 = scmp.ne.s32.totalorder %s109, %s110
      %p121 = scmp.eq.s32.totalorder %s26, 0
      %p122 = por %p120, %p121
      %p123 = scmp.ne.s32.totalorder %s109, %s110
      %p124 = scmp.eq.s32.totalorder %s27, 3
      %p125 = por %p123, %p124
      %p127 = scmp.ne.s32.totalorder %s110, %s126
      %p128 = scmp.eq.s32.totalorder %s27, 0
      %p129 = por %p127, %p128
      %s130 = ssub.s32 %s29, %s36
      %p131 = scmp.eq.s32.totalorder %s130, 0
      %s133 = sadd.s32 %s132, 1
      %s134 = scalar_select %p131, %s132, %s133
      %p137 = pneg %p131
      %p138 = scmp.eq.s32.totalorder %s21, 3
      %p139 = por %p137, %p138
      %p140 = scmp.ne.s32.totalorder %s132, %s135
      %p141 = scmp.eq.s32.totalorder %s21, 0
      %p142 = por %p140, %p141
      %p143 = scmp.ne.s32.totalorder %s132, %s135
      %p144 = scmp.eq.s32.totalorder %s26, 3
      %p145 = por %p143, %p144
      %p146 = scmp.ne.s32.totalorder %s135, %s136
      %p147 = scmp.eq.s32.totalorder %s26, 0
      %p148 = por %p146, %p147
      %p149 = scmp.ne.s32.totalorder %s135, %s136
      %p150 = scmp.eq.s32.totalorder %s27, 3
      %p151 = por %p149, %p150
      %p153 = scmp.ne.s32.totalorder %s136, %s152
      %p154 = scmp.eq.s32.totalorder %s27, 0
      %p155 = por %p153, %p154
      %s156 = ssub.s32 %s29, %s36
      %p157 = scmp.eq.s32.totalorder %s156, 0
      %s159 = sadd.s32 %s158, 1
      %s160 = scalar_select %p157, %s158, %s159
      %p163 = pneg %p157
      %p164 = scmp.eq.s32.totalorder %s21, 3
      %p165 = por %p163, %p164
      %p166 = scmp.ne.s32.totalorder %s158, %s161
      %p167 = scmp.eq.s32.totalorder %s21, 0
      %p168 = por %p166, %p167
      %p169 = scmp.ne.s32.totalorder %s158, %s161
      %p170 = scmp.eq.s32.totalorder %s26, 3
      %p171 = por %p169, %p170
      %p172 = scmp.ne.s32.totalorder %s161, %s162
      %p173 = scmp.eq.s32.totalorder %s26, 0
      %p174 = por %p172, %p173
      %p175 = scmp.ne.s32.totalorder %s161, %s162
      %p176 = scmp.eq.s32.totalorder %s27, 3
      %p177 = por %p175, %p176
      %p179 = scmp.ne.s32.totalorder %s162, %s178
      %p180 = scmp.eq.s32.totalorder %s27, 0
      %p181 = por %p179, %p180
      %s182 = ssub.s32 %s28, %s40
      %s183 = ssub.s32 %s29, %s36
      %s184 = sor.u32 %s182, %s183
      %p185 = scmp.eq.s32.totalorder %s184, 0
      %s187 = sadd.s32 %s186, 1
      %s188 = scalar_select %p185, %s186, %s187
      %p191 = pneg %p185
      %p192 = scmp.eq.s32.totalorder %s21, 3
      %p193 = por %p191, %p192
      %p194 = scmp.ne.s32.totalorder %s186, %s189
      %p195 = scmp.eq.s32.totalorder %s21, 0
      %p196 = por %p194, %p195
      %p197 = scmp.ne.s32.totalorder %s186, %s189
      %p198 = scmp.eq.s32.totalorder %s26, 3
      %p199 = por %p197, %p198
      %p200 = scmp.ne.s32.totalorder %s189, %s190
      %p201 = scmp.eq.s32.totalorder %s26, 0
      %p202 = por %p200, %p201
      %p203 = scmp.ne.s32.totalorder %s189, %s190
      %p204 = scmp.eq.s32.totalorder %s27, 3
      %p205 = por %p203, %p204
      %p207 = scmp.ne.s32.totalorder %s190, %s206
      %p208 = scmp.eq.s32.totalorder %s27, 0
      %p209 = por %p207, %p208
      %p210 = scmp.le.s32.totalorder 1, %s21
      %p211 = scmp.lt.s32.totalorder %s21, 5
      %p212 = pnand %p210, %p211
      %p213 = pneg %p212
      // Predicated region
      $region9: #{_anchor_target_forward.3} parent=5 // pred_check
        _
      $region10: #{_anchor_target_forward.3} parent=5 // pred_check_branch
        %215 = sbr.rel (%p212) target = $region12
      $region11: #{_anchor_target_forward.3} parent=5 // pred_region
        %s216 = ssub.s32 %s21, 1
        // Predicated region
        $region13: #{_anchor_target_forward.3} parent=11 // pred_check
          %p217 = pneg %p54
        $region14: #{_anchor_target_forward.3} parent=11 // pred_check_branch
          %219 = sbr.rel (%p217) target = $region16
        $region15: #{_anchor_target_forward.3} parent=11 // pred_region
          %s221 = ssub.s32 32, 32
          %222 = vsyncadd [#allocation4], %s221
          %225 = dma.hbm_to_smem %s0, 32, [#allocation2], [#allocation4]
        $region16: #{_anchor_target_forward.3} parent=11 // pred_fallthru
          _
        // Predicated region
        $region17: #{_anchor_target_forward.3} parent=11 // pred_check
          %p226 = pneg %p75
        $region18: #{_anchor_target_forward.3} parent=11 // pred_check_branch
          %228 = sbr.rel (%p226) target = $region20
        $region19: #{_anchor_target_forward.3} parent=11 // pred_region
          %s230 = ssub.s32 16, 16
          %231 = vsyncadd [#allocation5], %s230
          %s233 = sshll.u32 %s1, 4
          %s234 = int_to_ptr.vmem [resolvable:$true] %s233
          %236 = dma.vmem_to_smem %s234, 16, [#allocation6], [#allocation5]
        $region20: #{_anchor_target_forward.3} parent=11 // pred_fallthru
          _
        // Predicated region
        $region21: #{_anchor_target_forward.3} parent=11 // pred_check
          %p237 = pneg %p96
        $region22: #{_anchor_target_forward.3} parent=11 // pred_check_branch
          %239 = sbr.rel (%p237) target = $region24
        $region23: #{_anchor_target_forward.3} parent=11 // pred_region
          %s241 = ssub.s32 32, 32
          %242 = vsyncadd [#allocation8], %s241
          %s244 = sshll.u32 %s2, 4
          %s245 = int_to_ptr.vmem [resolvable:$true] %s244
          %247 = dma.vmem_to_smem %s245, 32, [#allocation7], [#allocation8]
        $region24: #{_anchor_target_forward.3} parent=11 // pred_fallthru
          _
      $region12: #{_anchor_target_forward.3} parent=5 // pred_fallthru
        _
      %p248 = scmp.lt.s32.totalorder %s21, 4
      // Predicated region
      $region25: #{_anchor_target_forward.3} parent=5 // pred_check
        %p249 = pneg %p248
      $region26: #{_anchor_target_forward.3} parent=5 // pred_check_branch
        %251 = sbr.rel (%p249) target = $region28
      $region27: #{_anchor_target_forward.3} parent=5 // pred_region
        // Predicated region
        $region29: #{_anchor_target_forward.3} parent=27 // pred_check
          %p252 = pneg %p116
        $region30: #{_anchor_target_forward.3} parent=27 // pred_check_branch
          %254 = sbr.rel (%p252) target = $region32
        $region31: #{_anchor_target_forward.3} parent=27 // pred_region
          %s255 = sand.u32 %s106, 1
          %s256 = scalar_lea.sflag [#allocation3], %s255
          %s257 = sand.u32 %s106, 1
          %s258 = smul.addr %s257, 80
          %s259 = scalar_lea.vmem [#allocation9], %s258
          %s260 = smul.u32 2, %s29
          %s262 = ssub.s32 1280, 1280
          %263 = vsyncadd %s256, %s262
          %s264 = smul.addr %s260, 128
          %s265 = scalar_lea.hbm %s3, %s264
          %s266 = sshll.u32 %s259, 4
          %s267 = int_to_ptr.vmem [resolvable:$true] %s266
          %272 = dma.hbm_to_vmem [thread:$0]  %s265, 1280, %s267, %s256, 512, 256, 16
        $region32: #{_anchor_target_forward.3} parent=27 // pred_fallthru
          _
        // Predicated region
        $region33: #{_anchor_target_forward.3} parent=27 // pred_check
          %p273 = pneg %p142
        $region34: #{_anchor_target_forward.3} parent=27 // pred_check_branch
          %275 = sbr.rel (%p273) target = $region36
        $region35: #{_anchor_target_forward.3} parent=27 // pred_region
          %s276 = sand.u32 %s132, 1
          %s277 = scalar_lea.sflag [#allocation11], %s276
          %s278 = sand.u32 %s132, 1
          %s279 = smul.addr %s278, 64
          %s280 = scalar_lea.vmem [#allocation10], %s279
          %s281 = smul.u32 2, %s29
          %s283 = ssub.s32 1024, 1024
          %284 = vsyncadd %s277, %s283
          %s285 = smul.addr %s281, 128
          %s286 = scalar_lea.hbm %s4, %s285
          %s287 = sshll.u32 %s280, 4
          %s288 = int_to_ptr.vmem [resolvable:$true] %s287
          %293 = dma.hbm_to_vmem [thread:$0]  %s286, 1024, %s288, %s277, 512, 256, 16
        $region36: #{_anchor_target_forward.3} parent=27 // pred_fallthru
          _
        // Predicated region
        $region37: #{_anchor_target_forward.3} parent=27 // pred_check
          %p294 = pneg %p168
        $region38: #{_anchor_target_forward.3} parent=27 // pred_check_branch
          %296 = sbr.rel (%p294) target = $region40
        $region39: #{_anchor_target_forward.3} parent=27 // pred_region
          %s297 = smul.u32 2, %s29
          %p298 = scmp.lt.s32.totalorder %s297, 3
          %s299 = scalar_select %p298, %s297, 3
          %s300 = smul.addr %s299, 8
          %s301 = scalar_lea.vmem %s5, %s300
          %s302 = smul.u32 2, %s29
        $region40: #{_anchor_target_forward.3} parent=27 // pred_fallthru
          _
      $region28: #{_anchor_target_forward.3} parent=5 // pred_fallthru
        _
      %p303 = scmp.le.s32.totalorder 1, %s21
      %p304 = scmp.lt.s32.totalorder %s21, 5
      %p305 = pnand %p303, %p304
      %p306 = pneg %p305
      // Predicated region
      $region41: #{_anchor_target_forward.3} parent=5 // pred_check
        _
      $region42: #{_anchor_target_forward.3} parent=5 // pred_check_branch
        %308 = sbr.rel (%p305) target = $region44
      $region43: #{_anchor_target_forward.3} parent=5 // pred_region
        %s309 = ssub.s32 %s21, 1
        // Predicated region
        $region45: #{_anchor_target_forward.3} parent=43 // pred_check
          %p310 = pneg %p54
        $region46: #{_anchor_target_forward.3} parent=43 // pred_check_branch
          %312 = sbr.rel (%p310) target = $region48
        $region47: #{_anchor_target_forward.3} parent=43 // pred_region
          %313 = dma.done [#allocation4], 32
        $region48: #{_anchor_target_forward.3} parent=43 // pred_fallthru
          _
        // Predicated region
        $region49: #{_anchor_target_forward.3} parent=43 // pred_check
          %p314 = pneg %p75
        $region50: #{_anchor_target_forward.3} parent=43 // pred_check_branch
          %316 = sbr.rel (%p314) target = $region52
        $region51: #{_anchor_target_forward.3} parent=43 // pred_region
          %317 = dma.done [#allocation5], 16
        $region52: #{_anchor_target_forward.3} parent=43 // pred_fallthru
          _
        // Predicated region
        $region53: #{_anchor_target_forward.3} parent=43 // pred_check
          %p318 = pneg %p96
        $region54: #{_anchor_target_forward.3} parent=43 // pred_check_branch
          %320 = sbr.rel (%p318) target = $region56
        $region55: #{_anchor_target_forward.3} parent=43 // pred_region
          %321 = dma.done [#allocation8], 32
        $region56: #{_anchor_target_forward.3} parent=43 // pred_fallthru
          _
        %s322 = sand.u32 %s109, 1
        %s323 = scalar_lea.sflag [#allocation3], %s322
        %s324 = sand.u32 %s109, 1
        %s325 = smul.addr %s324, 80
        %s326 = scalar_lea.vmem [#allocation9], %s325
        // Predicated region
        $region57: #{_anchor_target_forward.3} parent=43 // pred_check
          %p327 = pneg %p122
        $region58: #{_anchor_target_forward.3} parent=43 // pred_check_branch
          %329 = sbr.rel (%p327) target = $region60
        $region59: #{_anchor_target_forward.3} parent=43 // pred_region
          %330 = dma.done %s323, 1280
        $region60: #{_anchor_target_forward.3} parent=43 // pred_fallthru
          _
        %s331 = sand.u32 %s135, 1
        %s332 = scalar_lea.sflag [#allocation11], %s331
        %s333 = sand.u32 %s135, 1
        %s334 = smul.addr %s333, 64
        %s335 = scalar_lea.vmem [#allocation10], %s334
        // Predicated region
        $region61: #{_anchor_target_forward.3} parent=43 // pred_check
          %p336 = pneg %p148
        $region62: #{_anchor_target_forward.3} parent=43 // pred_check_branch
          %338 = sbr.rel (%p336) target = $region64
        $region63: #{_anchor_target_forward.3} parent=43 // pred_region
          %339 = dma.done %s332, 1024
        $region64: #{_anchor_target_forward.3} parent=43 // pred_fallthru
          _
        %340 = sfence
        %p341 = pneg %p54
        %p342 = pneg %p51
        %p343 = pneg %p75
        %p344 = pneg %p72
        %p345 = pneg %p96
        %p346 = pneg %p93
        %s347 = sand.u32 %s109, 1
        %s348 = scalar_lea.sflag [#allocation3], %s347
        %s349 = sand.u32 %s109, 1
        %s350 = smul.addr %s349, 80
        %s351 = scalar_lea.vmem [#allocation9], %s350
        %p352 = pneg %p122
        %p353 = pneg %p119
        %s354 = sand.u32 %s135, 1
        %s355 = scalar_lea.sflag [#allocation11], %s354
        %s356 = sand.u32 %s135, 1
        %s357 = smul.addr %s356, 64
        %s358 = scalar_lea.vmem [#allocation10], %s357
        %p359 = pneg %p148
        %p360 = pneg %p145
        %s361 = smul.u32 2, %s31
        %p362 = scmp.lt.s32.totalorder %s361, 3
        %s363 = scalar_select %p362, %s361, 3
        %s364 = smul.addr %s363, 8
        %s365 = scalar_lea.vmem %s5, %s364
        %p366 = pneg %p174
        %p367 = pneg %p171
        %p368 = pneg %p202
        %p369 = pneg %p199
        %s370 = sand.u32 %s189, 1
        %s371 = sand.u32 %s189, 1
        %s372 = smul.addr %s371, 96
        %s373 = scalar_lea.vmem [#allocation12], %s372
        %s374 = smul.u32 2, %s31
        %s375 = smul.u32 2, %s31
        %s376 = smul.u32 2, %s31
        %p377 = scmp.lt.s32.totalorder %s376, 3
        %s378 = scalar_select %p377, %s376, 3
        %s379 = smul.addr %s378, 8
        %s380 = scalar_lea.vmem %s5, %s379
        %s381 = smul.u32 2, %s31
        %s382 = smul.u32 2, %s31
        %v383 = vld [vmem:[%s326] sm:$0xff]
        %v384 = vld [vmem:[%s326 + $0x8] sm:$0xff]
        %s385 = scalar_lea.vmem %s326, 16 [#allocation9]
        %v386 = vld [vmem:[%s385] sm:$0xff]
        %v387 = vld [vmem:[%s385 + $0x8] sm:$0xff]
        %s388 = scalar_lea.vmem %s326, 32 [#allocation9]
        %v389 = vld [vmem:[%s388] sm:$0xff]
        %v390 = vld [vmem:[%s388 + $0x8] sm:$0xff]
        %s391 = scalar_lea.vmem %s326, 48 [#allocation9]
        %v392 = vld [vmem:[%s391] sm:$0xff]
        %v393 = vld [vmem:[%s391 + $0x8] sm:$0xff]
        %s394 = scalar_lea.vmem %s326, 64 [#allocation9]
        %v395 = vld [vmem:[%s394] sm:$0xff]
        %v396 = vld [vmem:[%s394 + $0x8] sm:$0xff]
        %v397 = vld [vmem:[%s380] sm:$0xff]
        %v398 = vld [vmem:[%s380 + $0x8] sm:$0xff]
        %vm399 = vcmp.gt.f32.partialorder %v397, 0.5
        %vm400 = vcmp.gt.f32.partialorder %v398, 0.5
        %s401 = sld [smem:[#allocation6 + %s30]]
        // While loop
        $region65: #{_anchor_target_forward.3} parent=43 // loop_pre_header
          _
        $region66: #{_anchor_target_forward.3} parent=43 // loop_header
          %s403 = sphi 0, %s405
          %p404 = scmp.ge.s32.totalorder %s403, %s401
          %v408 = vphi -1e+30, %v523
          %v409 = vphi -1e+30, %v524
          %v410 = vphi 0.0, %v519
          %v411 = vphi 0.0, %v520
          %v412 = vphi 0.5, %v528
          %v413 = vphi 0.5, %v529
          %v414 = vphi 0.5, %v533
          %v415 = vphi 0.5, %v534
          %v416 = vphi 1.0, %v536
          %v417 = vphi 1.0, %v537
          %v418 = vphi 1.0, %v539
          %v419 = vphi 1.0, %v540
        $region67: #{_anchor_target_forward.3} parent=43 // loop_header_branch
          %407 = sbr.rel (%p404) target = $region71
        $region68: #{_anchor_target_forward.3} parent=43 // loop_body
          %s420 = smul.u32 %s403, 5
          %s421 = sshra.s32 %s420, 7
          %s422 = sand.u32 %s420, 127
          %s423 = sadd.s32 %s421, %s30
          %s424 = smul.u32 %s423, 128
          %s425 = sshra.s32 %s420, 7
          %s426 = sand.u32 %s420, 127
          %s427 = sadd.s32 %s424, %s426
          %s428 = sld [smem:[#allocation2 + %s427]]
          %s429 = sadd.s32 %s420, 1
          %s430 = sshra.s32 %s429, 7
          %s431 = sand.u32 %s429, 127
          %s432 = sadd.s32 %s430, %s30
          %s433 = smul.u32 %s432, 128
          %s434 = sshra.s32 %s429, 7
          %s435 = sand.u32 %s429, 127
          %s436 = sadd.s32 %s433, %s435
          %s437 = sld [smem:[#allocation2 + %s436]]
          %s438 = sadd.s32 %s420, 2
          %s439 = sshra.s32 %s438, 7
          %s440 = sand.u32 %s438, 127
          %s441 = sadd.s32 %s439, %s30
          %s442 = smul.u32 %s441, 128
          %s443 = sshra.s32 %s438, 7
          %s444 = sand.u32 %s438, 127
          %s445 = sadd.s32 %s442, %s444
          %s446 = sld [smem:[#allocation2 + %s445]]
          %s447 = sadd.s32 %s420, 3
          %s448 = sshra.s32 %s447, 7
          %s449 = sand.u32 %s447, 127
          %s450 = sadd.s32 %s448, %s30
          %s451 = smul.u32 %s450, 128
          %s452 = sshra.s32 %s447, 7
          %s453 = sand.u32 %s447, 127
          %s454 = sadd.s32 %s451, %s453
          %s455 = sld [smem:[#allocation2 + %s454]]
          %s456 = ssub.f32 %s446, %s428
          %s457 = sadd.f32 %s456, 1.0
          %s458 = ssub.f32 %s455, %s437
          %s459 = sadd.f32 %s458, 1.0
          %s460 = smul.f32 %s457, %s459
          %p461 = scmp.eq.f32.partialorder %s457, 1.0
          %p462 = scmp.eq.f32.partialorder %s459, 1.0
          %p463 = pnand %p461, %p462
          %p464 = pneg %p463
          %s465 = scalar_select %p464, 0.0, 1.0
          %v466 = vstv %s446
          %v467 = vmin.f32 %v389, %v466
          %v468 = vmin.f32 %v390, %v466
          %v469 = vstv %s428
          %v470 = vmax.f32 %v383, %v469
          %v471 = vmax.f32 %v384, %v469
          %v472 = vsub.f32 %v467, %v470
          %v473 = vsub.f32 %v468, %v471
          %v474 = vadd.f32 %v472, 1.0
          %v475 = vadd.f32 %v473, 1.0
          %v476 = vmax.f32 %v474, 0.0
          %v477 = vmax.f32 %v475, 0.0
          %v478 = vstv %s455
          %v479 = vmin.f32 %v392, %v478
          %v480 = vmin.f32 %v393, %v478
          %v481 = vstv %s437
          %v482 = vmax.f32 %v386, %v481
          %v483 = vmax.f32 %v387, %v481
          %v484 = vsub.f32 %v479, %v482
          %v485 = vsub.f32 %v480, %v483
          %v486 = vadd.f32 %v484, 1.0
          %v487 = vadd.f32 %v485, 1.0
          %v488 = vmax.f32 %v486, 0.0
          %v489 = vmax.f32 %v487, 0.0
          %v490 = vmul.f32 %v476, %v488
          %v491 = vmul.f32 %v477, %v489
          %v492 = vstv %s460
          %v493 = vadd.f32 %v395, %v492
          %v494 = vadd.f32 %v396, %v492
          %v495 = vsub.f32 %v493, %v490
          %v496 = vsub.f32 %v494, %v491
          %v497 = vrcp.pop %v495
          %v498 = vrcp.pop %v496
          %v499 = vmul.f32 %v490, %v497
          %v500 = vmul.f32 %v491, %v498
          %v501 = vstv %s465
          %v502 = vmul.f32 %v499, %v501
          %v503 = vmul.f32 %v500, %v501
          %s504 = sshra.s32 %s403, 7
          %s505 = sand.u32 %s403, 127
          %s506 = sadd.s32 %s504, %s30
          %s507 = smul.u32 %s506, 128
          %s508 = sshra.s32 %s403, 7
          %s509 = sand.u32 %s403, 127
          %s510 = sadd.s32 %s507, %s509
          %s511 = sld [smem:[#allocation7 + %s510]]
          %v512 = vstv %s511
          %vm513 = vcmp.eq.f32.partialorder %v502, %v512
          %vm514 = vcmp.eq.f32.partialorder %v503, %v512
          %v515 = vsel %vm513, 1, 0
          %v516 = vsel %vm514, 1, 0
          %v517 = vcvt.s32.f32 %v515
          %v518 = vcvt.s32.f32 %v516
          %v519 = vadd.f32 %v410, %v517
          %v520 = vadd.f32 %v411, %v518
          %vm521 = vcmp.gt.f32.partialorder %v502, %v408
          %vm522 = vcmp.gt.f32.partialorder %v503, %v409
          %v523 = vsel %vm521, %v502, %v408
          %v524 = vsel %vm522, %v503, %v409
          %s525 = smul.f32 %s457, 0.5
          %s526 = sadd.f32 %s428, %s525
          %v527 = vstv %s526
          %v528 = vsel %vm521, %v527, %v412
          %v529 = vsel %vm522, %v527, %v413
          %s530 = smul.f32 %s459, 0.5
          %s531 = sadd.f32 %s437, %s530
          %v532 = vstv %s531
          %v533 = vsel %vm521, %v532, %v414
          %v534 = vsel %vm522, %v532, %v415
          %v535 = vstv %s457
          %v536 = vsel %vm521, %v535, %v416
          %v537 = vsel %vm522, %v535, %v417
          %v538 = vstv %s459
          %v539 = vsel %vm521, %v538, %v418
          %v540 = vsel %vm522, %v538, %v419
        $region69: #{_anchor_target_forward.3} parent=43 // loop_footer
          %s405 = sadd.s32 %s403, 1
        $region70: #{_anchor_target_forward.3} parent=43 // loop_footer_branch
          %402 = sbr.rel target = $region66
        $region71: #{_anchor_target_forward.3} parent=43 // loop_exit
          _
        %vm541 = vcmp.lt.f32.partialorder %v408, 0.3
        %vm542 = vcmp.lt.f32.partialorder %v409, 0.3
        %v543 = vsel %vm541, 0.0, -1.0
        %v544 = vsel %vm542, 0.0, -1.0
        %vm545 = vcmp.gt.f32.partialorder %v410, 0.0
        %vm546 = vcmp.gt.f32.partialorder %v411, 0.0
        %v547 = vsel %vm545, 1.0, %v543
        %v548 = vsel %vm546, 1.0, %v544
        %vm549 = vcmp.ge.f32.partialorder %v408, 0.7
        %vm550 = vcmp.ge.f32.partialorder %v409, 0.7
        %v551 = vsel %vm549, 1.0, %v547
        %v552 = vsel %vm550, 1.0, %v548
        %v553 = vsel %vm399, %v551, -1.0
        %v554 = vsel %vm400, %v552, -1.0
        %v555 = vld [vmem:[%s335] sm:$0xff]
        %v556 = vld [vmem:[%s335 + $0x8] sm:$0xff]
        %s557 = scalar_lea.vmem %s335, 16 [#allocation10]
        %v558 = vld [vmem:[%s557] sm:$0xff]
        %v559 = vld [vmem:[%s557 + $0x8] sm:$0xff]
        %s560 = scalar_lea.vmem %s335, 32 [#allocation10]
        %v561 = vld [vmem:[%s560] sm:$0xff]
        %v562 = vld [vmem:[%s560 + $0x8] sm:$0xff]
        %s563 = scalar_lea.vmem %s335, 48 [#allocation10]
        %v564 = vld [vmem:[%s563] sm:$0xff]
        %v565 = vld [vmem:[%s563 + $0x8] sm:$0xff]
        %v566 = vsub.f32 %v412, %v555
        %v567 = vsub.f32 %v413, %v556
        %v568 = vmul.f32 %v566, %v561
        %v569 = vmul.f32 %v567, %v562
        %v570 = vmul.f32 %v568, %v397
        %v571 = vmul.f32 %v569, %v398
        %v572 = vsub.f32 %v414, %v558
        %v573 = vsub.f32 %v415, %v559
        %v574 = vmul.f32 %v572, %v564
        %v575 = vmul.f32 %v573, %v565
        %v576 = vmul.f32 %v574, %v397
        %v577 = vmul.f32 %v575, %v398
        %v578 = vmul.f32 %v416, %v561
        %v579 = vmul.f32 %v417, %v562
        %v580 = vlog2.pop %v578
        %v581 = vmul.f32 %v580, 0.6931472
        %v582 = vlog2.pop %v579
        %v583 = vmul.f32 %v582, 0.6931472
        %v584 = vmul.f32 %v581, %v397
        %v585 = vmul.f32 %v583, %v398
        %v586 = vmul.f32 %v418, %v564
        %v587 = vmul.f32 %v419, %v565
        %v588 = vlog2.pop %v586
        %v589 = vmul.f32 %v588, 0.6931472
        %v590 = vlog2.pop %v587
        %v591 = vmul.f32 %v590, 0.6931472
        %v592 = vmul.f32 %v589, %v397
        %v593 = vmul.f32 %v591, %v398
        %594 = vst [vmem:[%s373] sm:$0xff] %v553
        %595 = vst [vmem:[%s373 + $0x8] sm:$0xff] %v554
        %vm596 = vcmp.eq.f32.partialorder %v553, 1.0
        %vm597 = vcmp.eq.f32.partialorder %v554, 1.0
        %v598 = vsel %vm596, 1.0, 0.0
        %v599 = vsel %vm597, 1.0, 0.0
        %s600 = scalar_lea.vmem %s373, 16 [#allocation12]
        %601 = vst [vmem:[%s600] sm:$0xff] %v598
        %602 = vst [vmem:[%s600 + $0x8] sm:$0xff] %v599
        %s603 = scalar_lea.vmem %s373, 32 [#allocation12]
        %604 = vst [vmem:[%s603] sm:$0xff] %v570
        %605 = vst [vmem:[%s603 + $0x8] sm:$0xff] %v571
        %s606 = scalar_lea.vmem %s373, 48 [#allocation12]
        %607 = vst [vmem:[%s606] sm:$0xff] %v576
        %608 = vst [vmem:[%s606 + $0x8] sm:$0xff] %v577
        %s609 = scalar_lea.vmem %s373, 64 [#allocation12]
        %610 = vst [vmem:[%s609] sm:$0xff] %v584
        %611 = vst [vmem:[%s609 + $0x8] sm:$0xff] %v585
        %s612 = scalar_lea.vmem %s373, 80 [#allocation12]
        %613 = vst [vmem:[%s612] sm:$0xff] %v592
        %614 = vst [vmem:[%s612 + $0x8] sm:$0xff] %v593
        %s615 = sand.u32 %s189, 1
        %s616 = sand.u32 %s189, 1
        %s617 = smul.addr %s616, 96
        %s618 = scalar_lea.vmem [#allocation12], %s617
        // Predicated region
        $region72: #{_anchor_target_forward.3} parent=43 // pred_check
          %p619 = pneg %p199
        $region73: #{_anchor_target_forward.3} parent=43 // pred_check_branch
          %621 = sbr.rel (%p619) target = $region75
        $region74: #{_anchor_target_forward.3} parent=43 // pred_region
          %s622 = smul.u32 2, %s31
          %s623 = smul.addr %s30, 24
          %s624 = sadd.s32 %s622, %s623
          %s625 = smul.addr %s624, 8
          %s626 = scalar_lea.vmem %s6, %s625
          // Predicated region
          $region76: #{_anchor_target_forward.3} parent=74 // pred_check
            _
          $region77: #{_anchor_target_forward.3} parent=74 // pred_check_branch
            %628 = sbr.rel (0) target = $region79
          $region78: #{_anchor_target_forward.3} parent=74 // pred_region
            // Predicated region
            $region80: #{_anchor_target_forward.3} parent=78 // pred_check
              _
            $region81: #{_anchor_target_forward.3} parent=78 // pred_check_branch
              %630 = sbr.rel (0) target = $region83
            $region82: #{_anchor_target_forward.3} parent=78 // pred_region
              loop: start=0, step=1, limit=1
              $region84: #{_anchor_target_forward.3} parent=82 // loop_pre_header
                _
              $region85: #{_anchor_target_forward.3} parent=82 // loop_header
                %s632 = sphi 0, %s636
                %p633 = scmp.ge.s32.totalorder %s632, 1
                %s637 = sphi %s618, %s618
                %s638 = sphi %s626, %s626
              $region86: #{_anchor_target_forward.3} parent=82 // loop_header_branch
                %635 = sbr.rel (%p633) target = $region90
              $region87: #{_anchor_target_forward.3} parent=82 // loop_body
                %v639 = vld [vmem:[%s637] sm:$0xff]
                %640 = vst [vmem:[%s638] sm:$0xff] %v639
                %v641 = vld [vmem:[%s637 + $0x8] sm:$0xff]
                %642 = vst [vmem:[%s638 + $0x8] sm:$0xff] %v641
                %v643 = vld [vmem:[%s637 + $0x10] sm:$0xff]
                %644 = vst [vmem:[%s638 + $0x20] sm:$0xff] %v643
                %v645 = vld [vmem:[%s637 + $0x18] sm:$0xff]
                %646 = vst [vmem:[%s638 + $0x28] sm:$0xff] %v645
                %v647 = vld [vmem:[%s637 + $0x20] sm:$0xff]
                %648 = vst [vmem:[%s638 + $0x40] sm:$0xff] %v647
                %v649 = vld [vmem:[%s637 + $0x28] sm:$0xff]
                %650 = vst [vmem:[%s638 + $0x48] sm:$0xff] %v649
                %v651 = vld [vmem:[%s637 + $0x30] sm:$0xff]
                %652 = vst [vmem:[%s638 + $0x60] sm:$0xff] %v651
                %v653 = vld [vmem:[%s637 + $0x38] sm:$0xff]
                %654 = vst [vmem:[%s638 + $0x68] sm:$0xff] %v653
                %v655 = vld [vmem:[%s637 + $0x40] sm:$0xff]
                %656 = vst [vmem:[%s638 + $0x80] sm:$0xff] %v655
                %v657 = vld [vmem:[%s637 + $0x48] sm:$0xff]
                %658 = vst [vmem:[%s638 + $0x88] sm:$0xff] %v657
                %v659 = vld [vmem:[%s637 + $0x50] sm:$0xff]
                %660 = vst [vmem:[%s638 + $0xa0] sm:$0xff] %v659
                %v661 = vld [vmem:[%s637 + $0x58] sm:$0xff]
                %662 = vst [vmem:[%s638 + $0xa8] sm:$0xff] %v661
              $region88: #{_anchor_target_forward.3} parent=82 // loop_footer
                %s636 = sadd.s32 1, %s632
              $region89: #{_anchor_target_forward.3} parent=82 // loop_footer_branch
                %631 = sbr.rel target = $region85
              $region90: #{_anchor_target_forward.3} parent=82 // loop_exit
                _
            $region83: #{_anchor_target_forward.3} parent=78 // pred_fallthru
              _
            // Predicated region
            $region91: #{_anchor_target_forward.3} parent=78 // pred_check
              _
            $region92: #{_anchor_target_forward.3} parent=78 // pred_check_branch
              %664 = sbr.rel target = $region94
            $region93: #{_anchor_target_forward.3} parent=78 // pred_region
              _
            $region94: #{_anchor_target_forward.3} parent=78 // pred_fallthru
              _
          $region79: #{_anchor_target_forward.3} parent=74 // pred_fallthru
            _
          %665 = vnop
        $region75: #{_anchor_target_forward.3} parent=43 // pred_fallthru
          _
      $region44: #{_anchor_target_forward.3} parent=5 // pred_fallthru
        _
      %p666 = scmp.le.s32.totalorder 2, %s21
      // Predicated region
      $region95: #{_anchor_target_forward.3} parent=5 // pred_check
        %p667 = pneg %p666
      $region96: #{_anchor_target_forward.3} parent=5 // pred_check_branch
        %669 = sbr.rel (%p667) target = $region98
      $region97: #{_anchor_target_forward.3} parent=5 // pred_region
        %s670 = ssub.s32 %s21, 2
        // Predicated region
        $region99: #{_anchor_target_forward.3} parent=97 // pred_check
          %p671 = pneg %p205
        $region100: #{_anchor_target_forward.3} parent=97 // pred_check_branch
          %673 = sbr.rel (%p671) target = $region102
        $region101: #{_anchor_target_forward.3} parent=97 // pred_region
          %s674 = sand.u32 %s190, 1
          %s675 = sand.u32 %s190, 1
          %s676 = smul.addr %s675, 96
          %s677 = scalar_lea.vmem [#allocation12], %s676
        $region102: #{_anchor_target_forward.3} parent=97 // pred_fallthru
          _
      $region98: #{_anchor_target_forward.3} parent=5 // pred_fallthru
        _
    $region6: #{_anchor_target_forward.3} parent=1 // loop_footer
      %s25 = sadd.s32 1, %s21
    $region7: #{_anchor_target_forward.3} parent=1 // loop_footer_branch
      %20 = sbr.rel target = $region3
    $region8: #{_anchor_target_forward.3} parent=1 // loop_exit
      _
    %678 = vsyncpa [#allocation3], 1
    %s679 = scalar_lea.sflag [#allocation3], 1
    %680 = vsyncpa %s679, 1
    %681 = vsyncpa [#allocation11], 1
    %s682 = scalar_lea.sflag [#allocation11], 1
    %683 = vsyncpa %s682, 1
    %684 = vsyncpa [#allocation4], 1
    %s685 = scalar_lea.sflag [#allocation4], 1
    %686 = vsyncpa %s685, 1
    %687 = vsyncpa [#allocation5], 1
    %s688 = scalar_lea.sflag [#allocation5], 1
    %689 = vsyncpa %s688, 1
    %690 = vsyncpa [#allocation8], 1

</llo_original>
